<compile_context>
chip_gen: v7x
topology: tpu7x:2x2x1
jax: 0.10.0
libtpu: 0.0.40
codegen_flags: <defaults>
</compile_context>

<pallas_src>
import functools

import jax
import jax.numpy as jnp
from jax import lax
from jax.experimental import pallas as pl
from jax.experimental.pallas import tpu as pltpu

EPS = 1e-5
LANE = 128
VMEM_LIMIT = 32 * 1024 * 1024  # safe on all generations (v7x has 64 MiB/TC)


def _round_up(x, m):
    return (x + m - 1) // m * m


def _choose_tile_m(m_real, tile_m):
    """Largest row tile <= tile_m, but always >= 2 grid steps when possible."""
    tile_m = min(tile_m, _round_up(m_real, 8))
    if pl.cdiv(m_real, tile_m) < 2 and m_real > 8:   # keep v7x's 2nd TC busy
        tile_m = _round_up(pl.cdiv(m_real, 2), 8)
    return tile_m


def _pick_tile_h(h, w, n, target_rows=512, max_rows=1024):
    """Largest divisor of h with tile_h*w in [target, max]; >=2 blocks if n==1."""
    max_th = h if n > 1 else max(h // 2, 1)
    tile_h = 1
    for d in range(2, max_th + 1):
        if h % d:
            continue
        if d * w > max_rows:
            break
        tile_h = d
        if d * w >= target_rows:
            break
    return tile_h


# ---------------------------------------------------------------------------
# Kernel 1: tiled 1x1 conv (matmul) [+ fused BN+ReLU prologue]
#           + per-tile BN statistics (sum, sum of squares)
# ---------------------------------------------------------------------------
def _mm_stats_kernel(x_ref, w_ref, z_ref, st_ref, *, tile_m, m_real):
    z = jnp.dot(x_ref[...].astype(jnp.bfloat16), w_ref[...],
                preferred_element_type=jnp.float32)
    if m_real % tile_m != 0:  # mask padded rows out of output + stats
        row = (pl.program_id(0) * tile_m
               + lax.broadcasted_iota(jnp.int32, (tile_m, 1), 0))
        z = z * (row < m_real).astype(jnp.float32)
    z_ref[...] = z.astype(z_ref.dtype)
    st_ref[0] = jnp.concatenate(
        [jnp.sum(z, axis=0, keepdims=True),
         jnp.sum(z * z, axis=0, keepdims=True)], axis=0)


def _mm_bnrelu_stats_kernel(x_ref, w_ref, s_ref, t_ref, z_ref, st_ref, *,
                            tile_m, m_real):
    x = jnp.maximum(x_ref[...].astype(jnp.float32) * s_ref[...] + t_ref[...], 0.0)
    z = jnp.dot(x.astype(jnp.bfloat16), w_ref[...],
                preferred_element_type=jnp.float32)
    if m_real % tile_m != 0:
        row = (pl.program_id(0) * tile_m
               + lax.broadcasted_iota(jnp.int32, (tile_m, 1), 0))
        z = z * (row < m_real).astype(jnp.float32)
    z_ref[...] = z.astype(z_ref.dtype)
    st_ref[0] = jnp.concatenate(
        [jnp.sum(z, axis=0, keepdims=True),
         jnp.sum(z * z, axis=0, keepdims=True)], axis=0)


def matmul_stats(x2d, w, scale=None, shift=None, *, tile_m=512,
                 out_dtype=jnp.bfloat16):
    m_real, cin = x2d.shape
    cout = w.shape[1]
    tile_m = _choose_tile_m(m_real, tile_m)
    n_tiles = pl.cdiv(m_real, tile_m)
    m_pad = n_tiles * tile_m
    if m_pad != m_real:
        x2d = jnp.pad(x2d, ((0, m_pad - m_real), (0, 0)))
    prologue = scale is not None
    kernel = functools.partial(
        _mm_bnrelu_stats_kernel if prologue else _mm_stats_kernel,
        tile_m=tile_m, m_real=m_real)
    in_specs = [pl.BlockSpec((tile_m, cin), lambda i: (i, 0)),
                pl.BlockSpec((cin, cout), lambda i: (0, 0))]
    args = [x2d, w]
    if prologue:
        in_specs += [pl.BlockSpec((1, cin), lambda i: (0, 0)),
                     pl.BlockSpec((1, cin), lambda i: (0, 0))]
        args += [scale, shift]
    z, st = pl.pallas_call(
        kernel,
        grid=(n_tiles,),
        in_specs=in_specs,
        out_specs=[
            pl.BlockSpec((tile_m, cout), lambda i: (i, 0)),
            pl.BlockSpec((1, 2, cout), lambda i: (i, 0, 0)),
        ],
        out_shape=[
            jax.ShapeDtypeStruct((m_pad, cout), out_dtype),
            jax.ShapeDtypeStruct((n_tiles, 2, cout), jnp.float32),
        ],
        compiler_params=pltpu.CompilerParams(
            dimension_semantics=("parallel",),
            vmem_limit_bytes=VMEM_LIMIT),
    )(*args)
    return z, st


# ---------------------------------------------------------------------------
# Kernel 2: ConvTranspose2d(k=3, stride=2, pad=1, out_pad=1) via sub-pixel
#           decomposition with phase-packed (N = 2*cp) weights, fused with the
#           previous stage's BN+ReLU prologue + per-tile BN statistics.
#           Output layout (N, H, 2, W, 2*Cp) reshapes for free to (N,2H,2W,Cp).
# ---------------------------------------------------------------------------
def _tpconv_kernel(zc_ref, zn_ref, s_ref, t_ref, w_ref, o_ref, st_ref, buf_ref,
                   *, tile_h, width, cp, hb_total):
    hb = pl.program_id(1)
    f32 = jnp.float32
    bf = jnp.bfloat16
    s = s_ref[...]
    t = t_ref[...]

    # BN1 + ReLU prologue (f32), written once into a haloed scratch buffer:
    #   buf[0:tile_h, 0:w] = current tile
    #   buf[tile_h,  0:w]  = first row of the next tile (0 past the last row)
    #   buf[:, w]          = 0 (right halo column)
    yc = jnp.maximum(zc_ref[0].astype(f32) * s + t, 0.0)   # (TH, W, C)
    yn = jnp.maximum(zn_ref[0].astype(f32) * s + t, 0.0)   # (1,  W, C)
    yn = yn * (hb + 1 < hb_total).astype(f32)
    buf_ref[0:tile_h, 0:width] = yc
    buf_ref[tile_h:tile_h + 1, 0:width] = yn
    buf_ref[0:tile_h + 1, width:width + 1] = jnp.zeros((tile_h + 1, 1, cp), f32)

    m = tile_h * width
    yc2 = buf_ref[0:tile_h, 0:width].reshape(m, cp).astype(bf)           # (y,   x)
    yr2 = buf_ref[0:tile_h, 1:width + 1].reshape(m, cp).astype(bf)       # (y,   x+1)
    yd2 = buf_ref[1:tile_h + 1, 0:width].reshape(m, cp).astype(bf)       # (y+1, x)
    ydr2 = buf_ref[1:tile_h + 1, 1:width + 1].reshape(m, cp).astype(bf)  # (y+1, x+1)

    def mm(a, idx):
        return jnp.dot(a, w_ref[idx], preferred_element_type=f32)

    # Phase-packed weights (6 matmuls, N = 2*cp):
    #   row_even = [p00 | p01], row_odd = [p10 | p11]
    row_even = mm(yc2, 0) + mm(yr2, 1)
    row_odd = mm(yc2, 2) + mm(yr2, 3) + mm(yd2, 4) + mm(ydr2, 5)

    o_ref[0, :, 0] = row_even.reshape(tile_h, width, 2 * cp).astype(o_ref.dtype)
    o_ref[0, :, 1] = row_odd.reshape(tile_h, width, 2 * cp).astype(o_ref.dtype)

    sm = jnp.sum(row_even + row_odd, axis=0, keepdims=True)                  # (1, 2cp)
    sq = jnp.sum(row_even * row_even + row_odd * row_odd, axis=0, keepdims=True)
    ssum = sm[:, 0:cp] + sm[:, cp:2 * cp]
    ssq = sq[:, 0:cp] + sq[:, cp:2 * cp]
    st_ref[0, 0] = jnp.concatenate([ssum, ssq], axis=0)


def tpconv_s2_bn_stats(z1_4d, scale1, shift1, w2p, *, tile_h,
                       out_dtype=jnp.bfloat16):
    n, h, w, cp = z1_4d.shape
    assert h % tile_h == 0
    hb_total = h // tile_h
    kernel = functools.partial(_tpconv_kernel, tile_h=tile_h, width=w, cp=cp,
                               hb_total=hb_total)
    z2, st = pl.pallas_call(
        kernel,
        grid=(n, hb_total),
        in_specs=[
            pl.BlockSpec((1, tile_h, w, cp), lambda ni, hb: (ni, hb, 0, 0)),
            # down-halo: only ONE row (first row of the next tile), clamped at
            # the last image row (the kernel zeroes it past the edge)
            pl.BlockSpec((1, 1, w, cp),
                         lambda ni, hb: (ni, jnp.minimum((hb + 1) * tile_h, h - 1),
                                         0, 0)),
            pl.BlockSpec((1, cp), lambda ni, hb: (0, 0)),
            pl.BlockSpec((1, cp), lambda ni, hb: (0, 0)),
            pl.BlockSpec((6, cp, 2 * cp), lambda ni, hb: (0, 0, 0)),
        ],
        out_specs=[
            pl.BlockSpec((1, tile_h, 2, w, 2 * cp),
                         lambda ni, hb: (ni, hb, 0, 0, 0)),
            pl.BlockSpec((1, 1, 2, cp), lambda ni, hb: (ni, hb, 0, 0)),
        ],
        out_shape=[
            jax.ShapeDtypeStruct((n, h, 2, w, 2 * cp), out_dtype),
            jax.ShapeDtypeStruct((n, hb_total, 2, cp), jnp.float32),
        ],
        scratch_shapes=[pltpu.VMEM((tile_h + 1, w + 1, cp), jnp.float32)],
        compiler_params=pltpu.CompilerParams(
            dimension_semantics=("parallel", "parallel"),
            vmem_limit_bytes=VMEM_LIMIT),
    )(z1_4d, z1_4d, scale1, shift1, w2p)
    return z2, st


# ---------------------------------------------------------------------------
# Kernel 3: final BN + ReLU apply + channel slice (writes only real channels)
# ---------------------------------------------------------------------------
def _bn_relu_slice_kernel(z_ref, s_ref, t_ref, o_ref, *, out_ch):
    z = z_ref[...].astype(jnp.float32)
    y = jnp.maximum(z * s_ref[...] + t_ref[...], 0.0)
    o_ref[...] = y[:, :out_ch].astype(o_ref.dtype)


def bn_relu_slice_apply(z2d, scale, shift, out_ch, *, tile_m=512,
                        out_dtype=jnp.float32):
    # TODO(synk): fuse the NHWC->NCHW transpose in-kernel as well (write
    # (N, C, H, W) blocks directly); currently the tiny sliced array is
    # transposed by XLA afterwards.
    m_real, c = z2d.shape
    tile_m = _choose_tile_m(m_real, tile_m)
    n_tiles = pl.cdiv(m_real, tile_m)
    m_pad = n_tiles * tile_m
    if m_pad != m_real:
        z2d = jnp.pad(z2d, ((0, m_pad - m_real), (0, 0)))
    out = pl.pallas_call(
        functools.partial(_bn_relu_slice_kernel, out_ch=out_ch),
        grid=(n_tiles,),
        in_specs=[
            pl.BlockSpec((tile_m, c), lambda i: (i, 0)),
            pl.BlockSpec((1, c), lambda i: (0, 0)),
            pl.BlockSpec((1, c), lambda i: (0, 0)),
        ],
        out_specs=pl.BlockSpec((tile_m, out_ch), lambda i: (i, 0)),
        out_shape=jax.ShapeDtypeStruct((m_pad, out_ch), out_dtype),
        compiler_params=pltpu.CompilerParams(
            dimension_semantics=("parallel",),
            vmem_limit_bytes=VMEM_LIMIT),
    )(z2d, scale, shift)
    return out[:m_real]


# ---------------------------------------------------------------------------
# Host-side glue: BN stat reduction, parameter init, forward pass
# ---------------------------------------------------------------------------
def _bn_scale_shift(st, m_real, gamma, beta):
    cp = st.shape[-1]
    tot = jnp.sum(st.reshape(-1, 2, cp), axis=0)
    mean = tot[0] / m_real
    var = jnp.maximum(tot[1] / m_real - mean * mean, 0.0)
    scale = gamma.reshape(-1) * lax.rsqrt(var + EPS)
    shift = beta.reshape(-1) - mean * scale
    return scale.reshape(1, cp), shift.reshape(1, cp)


def init_decoder_params(key, in_planes, out_planes, kernel_size):
    mid = in_planes // 4
    cp_mid = _round_up(mid, LANE)
    cp_out = _round_up(out_planes, LANE)
    k1, k2, k3 = jax.random.split(key, 3)
    # PyTorch layouts: Conv2d (Cout,Cin,1,1); ConvTranspose2d (Cin,Cout,k,k)
    w1_t = 0.1 * jax.random.normal(k1, (mid, in_planes, 1, 1), jnp.float32)
    wt_t = 0.1 * jax.random.normal(k2, (mid, mid, kernel_size, kernel_size),
                                   jnp.float32)
    w3_t = 0.1 * jax.random.normal(k3, (out_planes, mid, 1, 1), jnp.float32)

    # 1x1 convs as (Cin, Cout) matmul weights; lane-pad only the output dim.
    w1 = jnp.zeros((in_planes, cp_mid), jnp.bfloat16).at[:, :mid].set(
        jnp.transpose(w1_t[:, :, 0, 0], (1, 0)).astype(jnp.bfloat16))
    w3 = jnp.zeros((cp_mid, cp_out), jnp.bfloat16).at[:mid, :out_planes].set(
        jnp.transpose(w3_t[:, :, 0, 0], (1, 0)).astype(jnp.bfloat16))

    # Transposed-conv weight, tap-indexed (ky, kx, Cin, Cout), then packed per
    # output-pixel phase to 2*cp output columns (fills the 256-wide MXU):
    #   row_even = yc @ [W11|W12] + yr @ [0|W10]
    #   row_odd  = yc @ [W21|W22] + yr @ [0|W20] + yd @ [W01|W02] + ydr @ [0|W00]
    w2 = jnp.zeros((kernel_size, kernel_size, cp_mid, cp_mid), jnp.float32)
    w2 = w2.at[:, :, :mid, :mid].set(jnp.transpose(wt_t, (2, 3, 0, 1)))
    zblk = jnp.zeros((cp_mid, cp_mid), jnp.float32)
    w2p = jnp.stack([
        jnp.concatenate([w2[1, 1], w2[1, 2]], axis=-1),
        jnp.concatenate([zblk,     w2[1, 0]], axis=-1),
        jnp.concatenate([w2[2, 1], w2[2, 2]], axis=-1),
        jnp.concatenate([zblk,     w2[2, 0]], axis=-1),
        jnp.concatenate([w2[0, 1], w2[0, 2]], axis=-1),
        jnp.concatenate([zblk,     w2[0, 0]], axis=-1),
    ]).astype(jnp.bfloat16)                              # (6, cp, 2*cp)

    def bn(c, cp, shiftv):
        g = 1.0 + 0.01 * jnp.arange(c, dtype=jnp.float32)
        b = 0.02 * jnp.arange(c, dtype=jnp.float32) - shiftv
        return (jnp.zeros((cp,), jnp.float32).at[:c].set(g),
                jnp.zeros((cp,), jnp.float32).at[:c].set(b))

    g1, b1 = bn(mid, cp_mid, 0.01)
    g2, b2 = bn(mid, cp_mid, 0.02)
    g3, b3 = bn(out_planes, cp_out, 0.03)
    return dict(w1=w1, w2p=w2p, w3=w3, g1=g1, b1=b1, g2=g2, b2=b2, g3=g3, b3=b3)


def decoder_forward(x_nchw, params, *, in_planes, out_planes, kernel_size,
                    stride, padding, output_padding):
    assert (kernel_size, stride, padding, output_padding) == (3, 2, 1, 1)
    # TODO(synk): general (kernel_size, stride, padding, output_padding)
    # ConvTranspose2d configs; only the LinkNet decoder config (3,2,1,1) is
    # lowered here via the sub-pixel decomposition.
    n, cin, h, w = x_nchw.shape
    assert cin == in_planes
    cp_mid = params["w1"].shape[1]

    # NCHW -> NHWC (real channel count, no padding), flatten rows
    x = jnp.transpose(x_nchw, (0, 2, 3, 1)).astype(jnp.bfloat16)
    x = x.reshape(n * h * w, in_planes)
    m1 = n * h * w

    # --- stage 1: 1x1 conv + BN1 partial statistics --------------------------
    z1, st1 = matmul_stats(x, params["w1"])
    s1, t1 = _bn_scale_shift(st1, m1, params["g1"], params["b1"])

    # --- stage 2: BN1+ReLU fused into transposed conv (sub-pixel) + BN2 stats
    z1_4d = z1[:m1].reshape(n, h, w, cp_mid)
    tile_h = _pick_tile_h(h, w, n)
    z2_5d, st2 = tpconv_s2_bn_stats(z1_4d, s1, t1, params["w2p"], tile_h=tile_h)
    ho, wo = 2 * h, 2 * w
    m2 = n * ho * wo
    s2, t2 = _bn_scale_shift(st2, m2, params["g2"], params["b2"])

    # --- stage 3: BN2+ReLU fused into 1x1 conv + BN3 stats -------------------
    z2 = z2_5d.reshape(m2, cp_mid)   # free reshape: (N,H,2,W,2Cp) == (N,2H,2W,Cp)
    z3, st3 = matmul_stats(z2, params["w3"], s2, t2)
    s3, t3 = _bn_scale_shift(st3, m2, params["g3"], params["b3"])

    # --- stage 4: final BN3 + ReLU apply, sliced to the real channels --------
    y = bn_relu_slice_apply(z3[:m2], s3, t3, out_planes)
    y = y.reshape(n, ho, wo, out_planes)
    return jnp.transpose(y, (0, 3, 1, 2)).astype(jnp.float32)   # back to NCHW


if __name__ == "__main__":
    # Decoder(in_planes=16, out_planes=8, kernel_size=3, stride=2, padding=1,
    #         output_padding=1)
    in_planes, out_planes = 16, 8
    kernel_size, stride, padding, output_padding = 3, 2, 1, 1
    N, H, W = 2, 8, 8

    key = jax.random.PRNGKey(0)
    kx, kp = jax.random.split(key)
    x = jax.random.normal(kx, (N, in_planes, H, W), jnp.float32)
    params = init_decoder_params(kp, in_planes, out_planes, kernel_size)

    fwd = jax.jit(functools.partial(
        decoder_forward, in_planes=in_planes, out_planes=out_planes,
        kernel_size=kernel_size, stride=stride, padding=padding,
        output_padding=output_padding))
    out = jax.block_until_ready(fwd(x, params))

    expected = (N, out_planes,
                (H - 1) * stride - 2 * padding + kernel_size + output_padding,
                (W - 1) * stride - 2 * padding + kernel_size + output_padding)
    assert out.shape == expected, (out.shape, expected)
    assert bool(jnp.all(jnp.isfinite(out)))
    print("KERNEL_OK")
</pallas_src>

<mosaic_0001>
module attributes {stable_mosaic.version = 11 : i64} {
  func.func @_mm_stats_kernel(%arg0: i32, %arg1: memref<64x16xbf16, #tpu.memory_space<vmem>>, %arg2: memref<16x128xbf16, #tpu.memory_space<vmem>>, %arg3: memref<64x128xbf16, #tpu.memory_space<vmem>>, %arg4: memref<1x2x128xf32, #tpu.memory_space<vmem>>) attributes {dimension_semantics = [#tpu.dimension_semantics<parallel>], iteration_bounds = array<i64: 2>, scalar_prefetch = 0 : i64, scratch_operands = 0 : i64, tpu.core_type = #tpu.core_type<tc>, window_params = [{transform_indices = @transform_0, window_bounds = array<i64: 64, 16>}, {pipeline_mode = #tpu.pipeline_mode<synchronous>, transform_indices = @transform_1, window_bounds = array<i64: 16, 128>}, {transform_indices = @transform_2, window_bounds = array<i64: 64, 128>}, {transform_indices = @transform_3, window_bounds = array<i64: 1, 2, 128>}]} {
    %c0 = arith.constant 0 : index
    %c0_0 = arith.constant 0 : index
    %0 = vector.load %arg1[%c0, %c0_0] : memref<64x16xbf16, #tpu.memory_space<vmem>>, vector<64x16xbf16>
    %c0_1 = arith.constant 0 : index
    %c0_2 = arith.constant 0 : index
    %1 = vector.load %arg2[%c0_1, %c0_2] : memref<16x128xbf16, #tpu.memory_space<vmem>>, vector<16x128xbf16>
    %cst = arith.constant dense<0.000000e+00> : vector<64x128xf32>
    %2 = tpu.matmul %0, %1, %cst {dimension_numbers = #tpu.dot_dimension_numbers<[1], [0], [0], [1], [0, 0, 1, 1], [], []>} : vector<64x16xbf16>, vector<16x128xbf16>, vector<64x128xf32> -> vector<64x128xf32>
    %3 = arith.truncf %2 : vector<64x128xf32> to vector<64x128xbf16>
    %c0_3 = arith.constant 0 : index
    %c0_4 = arith.constant 0 : index
    %4 = vector.load %arg3[%c0_3, %c0_4] : memref<64x128xbf16, #tpu.memory_space<vmem>>, vector<64x128xbf16>
    tpu.vector_store %arg3[%c0_3, %c0_4], %3 {strides = array<i32>} : memref<64x128xbf16, #tpu.memory_space<vmem>>, vector<64x128xbf16>,
    %cst_5 = arith.constant dense<0.000000e+00> : vector<128xf32>
    %5 = vector.multi_reduction <add>, %2, %cst_5 [0] : vector<64x128xf32> to vector<128xf32>
    %6 = vector.shape_cast %5 : vector<128xf32> to vector<1x128xf32>
    %7 = arith.mulf %2, %2 : vector<64x128xf32>
    %cst_6 = arith.constant dense<0.000000e+00> : vector<128xf32>
    %8 = vector.multi_reduction <add>, %7, %cst_6 [0] : vector<64x128xf32> to vector<128xf32>
    %9 = vector.shape_cast %8 : vector<128xf32> to vector<1x128xf32>
    %10 = tpu.concatenate %6, %9 in 0 : vector<1x128xf32>, vector<1x128xf32> -> vector<2x128xf32>
    %c0_7 = arith.constant 0 : index
    %c0_8 = arith.constant 0 : index
    %c0_9 = arith.constant 0 : index
    %11 = vector.load %arg4[%c0_7, %c0_8, %c0_9] : memref<1x2x128xf32, #tpu.memory_space<vmem>>, vector<1x2x128xf32>
    %12 = vector.shape_cast %11 : vector<1x2x128xf32> to vector<2x128xf32>
    %13 = vector.shape_cast %10 : vector<2x128xf32> to vector<1x2x128xf32>
    tpu.vector_store %arg4[%c0_7, %c0_8, %c0_9], %13 {strides = array<i32>} : memref<1x2x128xf32, #tpu.memory_space<vmem>>, vector<1x2x128xf32>,
    return
  }
  func.func @transform_0(%arg0: i32) -> (i32, i32) {
    %c0_i32 = arith.constant 0 : i32
    %c0_i32_0 = arith.constant 0 : i32
    return %arg0, %c0_i32 : i32, i32
  }
  func.func @transform_1(%arg0: i32) -> (i32, i32) {
    %c0_i32 = arith.constant 0 : i32
    %c0_i32_0 = arith.constant 0 : i32
    %c0_i32_1 = arith.constant 0 : i32
    return %c0_i32, %c0_i32_0 : i32, i32
  }
  func.func @transform_2(%arg0: i32) -> (i32, i32) {
    %c0_i32 = arith.constant 0 : i32
    %c0_i32_0 = arith.constant 0 : i32
    return %arg0, %c0_i32 : i32, i32
  }
  func.func @transform_3(%arg0: i32) -> (i32, i32, i32) {
    %c0_i32 = arith.constant 0 : i32
    %c0_i32_0 = arith.constant 0 : i32
    %c0_i32_1 = arith.constant 0 : i32
    return %arg0, %c0_i32, %c0_i32_0 : i32, i32, i32
  }
}

module attributes {stable_mosaic.version = 11 : i64} {
  func.func @_tpconv_kernel(%arg0: i32, %arg1: i32, %arg2: memref<1x8x8x128xbf16, #tpu.memory_space<vmem>>, %arg3: memref<1x1x8x128xbf16, #tpu.memory_space<vmem>>, %arg4: memref<1x128xf32, #tpu.memory_space<vmem>>, %arg5: memref<1x128xf32, #tpu.memory_space<vmem>>, %arg6: memref<6x128x256xbf16, #tpu.memory_space<vmem>>, %arg7: memref<1x8x2x8x256xbf16, #tpu.memory_space<vmem>>, %arg8: memref<1x1x2x128xf32, #tpu.memory_space<vmem>>, %arg9: memref<9x9x128xf32, #tpu.memory_space<vmem>>) attributes {dimension_semantics = [#tpu.dimension_semantics<parallel>, #tpu.dimension_semantics<parallel>], iteration_bounds = array<i64: 2, 1>, scalar_prefetch = 0 : i64, scratch_operands = 1 : i64, tpu.core_type = #tpu.core_type<tc>, window_params = [{transform_indices = @transform_0, window_bounds = array<i64: 1, 8, 8, 128>}, {transform_indices = @transform_1, window_bounds = array<i64: 1, 1, 8, 128>}, {pipeline_mode = #tpu.pipeline_mode<synchronous>, transform_indices = @transform_2, window_bounds = array<i64: 1, 128>}, {pipeline_mode = #tpu.pipeline_mode<synchronous>, transform_indices = @transform_3, window_bounds = array<i64: 1, 128>}, {pipeline_mode = #tpu.pipeline_mode<synchronous>, transform_indices = @transform_4, window_bounds = array<i64: 6, 128, 256>}, {transform_indices = @transform_5, window_bounds = array<i64: 1, 8, 2, 8, 256>}, {transform_indices = @transform_6, window_bounds = array<i64: 1, 1, 2, 128>}]} {
    %c0 = arith.constant 0 : index
    %c0_0 = arith.constant 0 : index
    %0 = vector.load %arg4[%c0, %c0_0] : memref<1x128xf32, #tpu.memory_space<vmem>>, vector<1x128xf32>
    %c0_1 = arith.constant 0 : index
    %c0_2 = arith.constant 0 : index
    %1 = vector.load %arg5[%c0_1, %c0_2] : memref<1x128xf32, #tpu.memory_space<vmem>>, vector<1x128xf32>
    %c0_3 = arith.constant 0 : index
    %c0_4 = arith.constant 0 : index
    %c0_5 = arith.constant 0 : index
    %c0_6 = arith.constant 0 : index
    %2 = vector.load %arg2[%c0_3, %c0_4, %c0_5, %c0_6] : memref<1x8x8x128xbf16, #tpu.memory_space<vmem>>, vector<1x8x8x128xbf16>
    %3 = vector.shape_cast %2 : vector<1x8x8x128xbf16> to vector<8x8x128xbf16>
    %4 = arith.extf %3 : vector<8x8x128xbf16> to vector<8x8x128xf32>
    %5 = vector.shape_cast %0 : vector<1x128xf32> to vector<1x1x128xf32>
    %6 = vector.broadcast %5 : vector<1x1x128xf32> to vector<8x8x128xf32>
    %7 = arith.mulf %4, %6 : vector<8x8x128xf32>
    %8 = vector.shape_cast %1 : vector<1x128xf32> to vector<1x1x128xf32>
    %9 = vector.broadcast %8 : vector<1x1x128xf32> to vector<8x8x128xf32>
    %10 = arith.addf %7, %9 : vector<8x8x128xf32>
    %cst = arith.constant 0.000000e+00 : f32
    %11 = vector.broadcast %cst : f32 to vector<8x8x128xf32>
    %12 = arith.maximumf %10, %11 : vector<8x8x128xf32>
    %c0_7 = arith.constant 0 : index
    %c0_8 = arith.constant 0 : index
    %c0_9 = arith.constant 0 : index
    %c0_10 = arith.constant 0 : index
    %13 = vector.load %arg3[%c0_7, %c0_8, %c0_9, %c0_10] : memref<1x1x8x128xbf16, #tpu.memory_space<vmem>>, vector<1x1x8x128xbf16>
    %14 = vector.shape_cast %13 : vector<1x1x8x128xbf16> to vector<1x8x128xbf16>
    %15 = arith.extf %14 : vector<1x8x128xbf16> to vector<1x8x128xf32>
    %16 = vector.shape_cast %0 : vector<1x128xf32> to vector<1x1x128xf32>
    %17 = vector.broadcast %16 : vector<1x1x128xf32> to vector<1x8x128xf32>
    %18 = arith.mulf %15, %17 : vector<1x8x128xf32>
    %19 = vector.shape_cast %1 : vector<1x128xf32> to vector<1x1x128xf32>
    %20 = vector.broadcast %19 : vector<1x1x128xf32> to vector<1x8x128xf32>
    %21 = arith.addf %18, %20 : vector<1x8x128xf32>
    %cst_11 = arith.constant 0.000000e+00 : f32
    %22 = vector.broadcast %cst_11 : f32 to vector<1x8x128xf32>
    %23 = arith.maximumf %21, %22 : vector<1x8x128xf32>
    %c1_i32 = arith.constant 1 : i32
    %24 = arith.addi %arg1, %c1_i32 : i32
    %c1_i32_12 = arith.constant 1 : i32
    %25 = arith.cmpi slt, %24, %c1_i32_12 : i32
    %26 = arith.extui %25 : i1 to i32
    %27 = arith.sitofp %26 : i32 to f32
    %28 = vector.broadcast %27 : f32 to vector<1x8x128xf32>
    %29 = arith.mulf %23, %28 : vector<1x8x128xf32>
    %c0_13 = arith.constant 0 : index
    %c0_14 = arith.constant 0 : index
    %c0_15 = arith.constant 0 : index
    %30 = vector.load %arg9[%c0_13, %c0_14, %c0_15] : memref<9x9x128xf32, #tpu.memory_space<vmem>>, vector<8x8x128xf32>
    tpu.vector_store %arg9[%c0_13, %c0_14, %c0_15], %12 {strides = array<i32>} : memref<9x9x128xf32, #tpu.memory_space<vmem>>, vector<8x8x128xf32>,
    %c8 = arith.constant 8 : index
    %c0_16 = arith.constant 0 : index
    %c0_17 = arith.constant 0 : index
    %31 = vector.load %arg9[%c8, %c0_16, %c0_17] : memref<9x9x128xf32, #tpu.memory_space<vmem>>, vector<1x8x128xf32>
    tpu.vector_store %arg9[%c8, %c0_16, %c0_17], %29 {strides = array<i32>} : memref<9x9x128xf32, #tpu.memory_space<vmem>>, vector<1x8x128xf32>,
    %cst_18 = arith.constant 0.000000e+00 : f32
    %32 = vector.broadcast %cst_18 : f32 to vector<9x1x128xf32>
    %c0_19 = arith.constant 0 : index
    %c8_20 = arith.constant 8 : index
    %c0_21 = arith.constant 0 : index
    %33 = vector.load %arg9[%c0_19, %c8_20, %c0_21] : memref<9x9x128xf32, #tpu.memory_space<vmem>>, vector<9x1x128xf32>
    tpu.vector_store %arg9[%c0_19, %c8_20, %c0_21], %32 {strides = array<i32>} : memref<9x9x128xf32, #tpu.memory_space<vmem>>, vector<9x1x128xf32>,
    %c0_22 = arith.constant 0 : index
    %c0_23 = arith.constant 0 : index
    %c0_24 = arith.constant 0 : index
    %34 = vector.load %arg9[%c0_22, %c0_23, %c0_24] : memref<9x9x128xf32, #tpu.memory_space<vmem>>, vector<8x8x128xf32>
    %35 = vector.shape_cast %34 : vector<8x8x128xf32> to vector<64x128xf32>
    %36 = arith.truncf %35 : vector<64x128xf32> to vector<64x128xbf16>
    %c0_25 = arith.constant 0 : index
    %c1 = arith.constant 1 : index
    %c0_26 = arith.constant 0 : index
    %37 = vector.load %arg9[%c0_25, %c1, %c0_26] : memref<9x9x128xf32, #tpu.memory_space<vmem>>, vector<8x8x128xf32>
    %38 = vector.shape_cast %37 : vector<8x8x128xf32> to vector<64x128xf32>
    %39 = arith.truncf %38 : vector<64x128xf32> to vector<64x128xbf16>
    %c1_27 = arith.constant 1 : index
    %c0_28 = arith.constant 0 : index
    %c0_29 = arith.constant 0 : index
    %40 = vector.load %arg9[%c1_27, %c0_28, %c0_29] : memref<9x9x128xf32, #tpu.memory_space<vmem>>, vector<8x8x128xf32>
    %41 = vector.shape_cast %40 : vector<8x8x128xf32> to vector<64x128xf32>
    %42 = arith.truncf %41 : vector<64x128xf32> to vector<64x128xbf16>
    %c1_30 = arith.constant 1 : index
    %c1_31 = arith.constant 1 : index
    %c0_32 = arith.constant 0 : index
    %43 = vector.load %arg9[%c1_30, %c1_31, %c0_32] : memref<9x9x128xf32, #tpu.memory_space<vmem>>, vector<8x8x128xf32>
    %44 = vector.shape_cast %43 : vector<8x8x128xf32> to vector<64x128xf32>
    %45 = arith.truncf %44 : vector<64x128xf32> to vector<64x128xbf16>
    %c0_33 = arith.constant 0 : index
    %c0_34 = arith.constant 0 : index
    %c0_35 = arith.constant 0 : index
    %46 = vector.load %arg6[%c0_33, %c0_34, %c0_35] : memref<6x128x256xbf16, #tpu.memory_space<vmem>>, vector<1x128x256xbf16>
    %47 = vector.shape_cast %46 : vector<1x128x256xbf16> to vector<128x256xbf16>
    %cst_36 = arith.constant dense<0.000000e+00> : vector<64x256xf32>
    %48 = tpu.matmul %36, %47, %cst_36 {dimension_numbers = #tpu.dot_dimension_numbers<[1], [0], [0], [1], [0, 0, 1, 1], [], []>} : vector<64x128xbf16>, vector<128x256xbf16>, vector<64x256xf32> -> vector<64x256xf32>
    %c1_37 = arith.constant 1 : index
    %c0_38 = arith.constant 0 : index
    %c0_39 = arith.constant 0 : index
    %49 = vector.load %arg6[%c1_37, %c0_38, %c0_39] : memref<6x128x256xbf16, #tpu.memory_space<vmem>>, vector<1x128x256xbf16>
    %50 = vector.shape_cast %49 : vector<1x128x256xbf16> to vector<128x256xbf16>
    %cst_40 = arith.constant dense<0.000000e+00> : vector<64x256xf32>
    %51 = tpu.matmul %39, %50, %cst_40 {dimension_numbers = #tpu.dot_dimension_numbers<[1], [0], [0], [1], [0, 0, 1, 1], [], []>} : vector<64x128xbf16>, vector<128x256xbf16>, vector<64x256xf32> -> vector<64x256xf32>
    %52 = arith.addf %48, %51 : vector<64x256xf32>
    %c2 = arith.constant 2 : index
    %c0_41 = arith.constant 0 : index
    %c0_42 = arith.constant 0 : index
    %53 = vector.load %arg6[%c2, %c0_41, %c0_42] : memref<6x128x256xbf16, #tpu.memory_space<vmem>>, vector<1x128x256xbf16>
    %54 = vector.shape_cast %53 : vector<1x128x256xbf16> to vector<128x256xbf16>
    %cst_43 = arith.constant dense<0.000000e+00> : vector<64x256xf32>
    %55 = tpu.matmul %36, %54, %cst_43 {dimension_numbers = #tpu.dot_dimension_numbers<[1], [0], [0], [1], [0, 0, 1, 1], [], []>} : vector<64x128xbf16>, vector<128x256xbf16>, vector<64x256xf32> -> vector<64x256xf32>
    %c3 = arith.constant 3 : index
    %c0_44 = arith.constant 0 : index
    %c0_45 = arith.constant 0 : index
    %56 = vector.load %arg6[%c3, %c0_44, %c0_45] : memref<6x128x256xbf16, #tpu.memory_space<vmem>>, vector<1x128x256xbf16>
    %57 = vector.shape_cast %56 : vector<1x128x256xbf16> to vector<128x256xbf16>
    %cst_46 = arith.constant dense<0.000000e+00> : vector<64x256xf32>
    %58 = tpu.matmul %39, %57, %cst_46 {dimension_numbers = #tpu.dot_dimension_numbers<[1], [0], [0], [1], [0, 0, 1, 1], [], []>} : vector<64x128xbf16>, vector<128x256xbf16>, vector<64x256xf32> -> vector<64x256xf32>
    %59 = arith.addf %55, %58 : vector<64x256xf32>
    %c4 = arith.constant 4 : index
    %c0_47 = arith.constant 0 : index
    %c0_48 = arith.constant 0 : index
    %60 = vector.load %arg6[%c4, %c0_47, %c0_48] : memref<6x128x256xbf16, #tpu.memory_space<vmem>>, vector<1x128x256xbf16>
    %61 = vector.shape_cast %60 : vector<1x128x256xbf16> to vector<128x256xbf16>
    %cst_49 = arith.constant dense<0.000000e+00> : vector<64x256xf32>
    %62 = tpu.matmul %42, %61, %cst_49 {dimension_numbers = #tpu.dot_dimension_numbers<[1], [0], [0], [1], [0, 0, 1, 1], [], []>} : vector<64x128xbf16>, vector<128x256xbf16>, vector<64x256xf32> -> vector<64x256xf32>
    %63 = arith.addf %59, %62 : vector<64x256xf32>
    %c5 = arith.constant 5 : index
    %c0_50 = arith.constant 0 : index
    %c0_51 = arith.constant 0 : index
    %64 = vector.load %arg6[%c5, %c0_50, %c0_51] : memref<6x128x256xbf16, #tpu.memory_space<vmem>>, vector<1x128x256xbf16>
    %65 = vector.shape_cast %64 : vector<1x128x256xbf16> to vector<128x256xbf16>
    %cst_52 = arith.constant dense<0.000000e+00> : vector<64x256xf32>
    %66 = tpu.matmul %45, %65, %cst_52 {dimension_numbers = #tpu.dot_dimension_numbers<[1], [0], [0], [1], [0, 0, 1, 1], [], []>} : vector<64x128xbf16>, vector<128x256xbf16>, vector<64x256xf32> -> vector<64x256xf32>
    %67 = arith.addf %63, %66 : vector<64x256xf32>
    %68 = vector.shape_cast %52 : vector<64x256xf32> to vector<8x8x256xf32>
    %69 = arith.truncf %68 : vector<8x8x256xf32> to vector<8x8x256xbf16>
    %c0_53 = arith.constant 0 : index
    %c0_54 = arith.constant 0 : index
    %c0_55 = arith.constant 0 : index
    %c0_56 = arith.constant 0 : index
    %c0_57 = arith.constant 0 : index
    %70 = vector.load %arg7[%c0_53, %c0_54, %c0_55, %c0_56, %c0_57] : memref<1x8x2x8x256xbf16, #tpu.memory_space<vmem>>, vector<1x8x1x8x256xbf16>
    %71 = vector.shape_cast %70 : vector<1x8x1x8x256xbf16> to vector<8x8x256xbf16>
    %72 = vector.shape_cast %69 : vector<8x8x256xbf16> to vector<1x8x1x8x256xbf16>
    tpu.vector_store %arg7[%c0_53, %c0_54, %c0_55, %c0_56, %c0_57], %72 {strides = array<i32>} : memref<1x8x2x8x256xbf16, #tpu.memory_space<vmem>>, vector<1x8x1x8x256xbf16>,
    %73 = vector.shape_cast %67 : vector<64x256xf32> to vector<8x8x256xf32>
    %74 = arith.truncf %73 : vector<8x8x256xf32> to vector<8x8x256xbf16>
    %c0_58 = arith.constant 0 : index
    %c0_59 = arith.constant 0 : index
    %c1_60 = arith.constant 1 : index
    %c0_61 = arith.constant 0 : index
    %c0_62 = arith.constant 0 : index
    %75 = vector.load %arg7[%c0_58, %c0_59, %c1_60, %c0_61, %c0_62] : memref<1x8x2x8x256xbf16, #tpu.memory_space<vmem>>, vector<1x8x1x8x256xbf16>
    %76 = vector.shape_cast %75 : vector<1x8x1x8x256xbf16> to vector<8x8x256xbf16>
    %77 = vector.shape_cast %74 : vector<8x8x256xbf16> to vector<1x8x1x8x256xbf16>
    tpu.vector_store %arg7[%c0_58, %c0_59, %c1_60, %c0_61, %c0_62], %77 {strides = array<i32>} : memref<1x8x2x8x256xbf16, #tpu.memory_space<vmem>>, vector<1x8x1x8x256xbf16>,
    %78 = arith.addf %52, %67 : vector<64x256xf32>
    %cst_63 = arith.constant dense<0.000000e+00> : vector<256xf32>
    %79 = vector.multi_reduction <add>, %78, %cst_63 [0] : vector<64x256xf32> to vector<256xf32>
    %80 = vector.shape_cast %79 : vector<256xf32> to vector<1x256xf32>
    %81 = arith.mulf %52, %52 : vector<64x256xf32>
    %82 = arith.mulf %67, %67 : vector<64x256xf32>
    %83 = arith.addf %81, %82 : vector<64x256xf32>
    %cst_64 = arith.constant dense<0.000000e+00> : vector<256xf32>
    %84 = vector.multi_reduction <add>, %83, %cst_64 [0] : vector<64x256xf32> to vector<256xf32>
    %85 = vector.shape_cast %84 : vector<256xf32> to vector<1x256xf32>
    %86 = vector.extract_strided_slice %80 {offsets = [0, 0], sizes = [1, 128], strides = [1, 1]} : vector<1x256xf32> to vector<1x128xf32>
    %87 = vector.extract_strided_slice %80 {offsets = [0, 128], sizes = [1, 128], strides = [1, 1]} : vector<1x256xf32> to vector<1x128xf32>
    %88 = arith.addf %86, %87 : vector<1x128xf32>
    %89 = vector.extract_strided_slice %85 {offsets = [0, 0], sizes = [1, 128], strides = [1, 1]} : vector<1x256xf32> to vector<1x128xf32>
    %90 = vector.extract_strided_slice %85 {offsets = [0, 128], sizes = [1, 128], strides = [1, 1]} : vector<1x256xf32> to vector<1x128xf32>
    %91 = arith.addf %89, %90 : vector<1x128xf32>
    %92 = tpu.concatenate %88, %91 in 0 : vector<1x128xf32>, vector<1x128xf32> -> vector<2x128xf32>
    %c0_65 = arith.constant 0 : index
    %c0_66 = arith.constant 0 : index
    %c0_67 = arith.constant 0 : index
    %c0_68 = arith.constant 0 : index
    %93 = vector.load %arg8[%c0_65, %c0_66, %c0_67, %c0_68] : memref<1x1x2x128xf32, #tpu.memory_space<vmem>>, vector<1x1x2x128xf32>
    %94 = vector.shape_cast %93 : vector<1x1x2x128xf32> to vector<2x128xf32>
    %95 = vector.shape_cast %92 : vector<2x128xf32> to vector<1x1x2x128xf32>
    tpu.vector_store %arg8[%c0_65, %c0_66, %c0_67, %c0_68], %95 {strides = array<i32>} : memref<1x1x2x128xf32, #tpu.memory_space<vmem>>, vector<1x1x2x128xf32>,
    return
  }
  func.func @transform_0(%arg0: i32, %arg1: i32) -> (i32, i32, i32, i32) {
    %c0_i32 = arith.constant 0 : i32
    %c0_i32_0 = arith.constant 0 : i32
    %c0_i32_1 = arith.constant 0 : i32
    return %arg0, %arg1, %c0_i32, %c0_i32_0 : i32, i32, i32, i32
  }
  func.func @transform_1(%arg0: i32, %arg1: i32) -> (i32, i32, i32, i32) {
    %c1_i32 = arith.constant 1 : i32
    %0 = arith.addi %arg1, %c1_i32 : i32
    %c8_i32 = arith.constant 8 : i32
    %1 = arith.muli %0, %c8_i32 : i32
    %c7_i32 = arith.constant 7 : i32
    %2 = arith.minsi %1, %c7_i32 : i32
    %c0_i32 = arith.constant 0 : i32
    %c0_i32_0 = arith.constant 0 : i32
    %c0_i32_1 = arith.constant 0 : i32
    return %arg0, %2, %c0_i32, %c0_i32_0 : i32, i32, i32, i32
  }
  func.func @transform_2(%arg0: i32, %arg1: i32) -> (i32, i32) {
    %c0_i32 = arith.constant 0 : i32
    %c0_i32_0 = arith.constant 0 : i32
    %c0_i32_1 = arith.constant 0 : i32
    return %c0_i32, %c0_i32_0 : i32, i32
  }
  func.func @transform_3(%arg0: i32, %arg1: i32) -> (i32, i32) {
    %c0_i32 = arith.constant 0 : i32
    %c0_i32_0 = arith.constant 0 : i32
    %c0_i32_1 = arith.constant 0 : i32
    return %c0_i32, %c0_i32_0 : i32, i32
  }
  func.func @transform_4(%arg0: i32, %arg1: i32) -> (i32, i32, i32) {
    %c0_i32 = arith.constant 0 : i32
    %c0_i32_0 = arith.constant 0 : i32
    %c0_i32_1 = arith.constant 0 : i32
    %c0_i32_2 = arith.constant 0 : i32
    return %c0_i32, %c0_i32_0, %c0_i32_1 : i32, i32, i32
  }
  func.func @transform_5(%arg0: i32, %arg1: i32) -> (i32, i32, i32, i32, i32) {
    %c0_i32 = arith.constant 0 : i32
    %c0_i32_0 = arith.constant 0 : i32
    %c0_i32_1 = arith.constant 0 : i32
    %c0_i32_2 = arith.constant 0 : i32
    return %arg0, %arg1, %c0_i32, %c0_i32_0, %c0_i32_1 : i32, i32, i32, i32, i32
  }
  func.func @transform_6(%arg0: i32, %arg1: i32) -> (i32, i32, i32, i32) {
    %c0_i32 = arith.constant 0 : i32
    %c0_i32_0 = arith.constant 0 : i32
    %c0_i32_1 = arith.constant 0 : i32
    return %arg0, %arg1, %c0_i32, %c0_i32_0 : i32, i32, i32, i32
  }
}

module attributes {stable_mosaic.version = 11 : i64} {
  func.func @_mm_bnrelu_stats_kernel(%arg0: i32, %arg1: memref<256x128xbf16, #tpu.memory_space<vmem>>, %arg2: memref<128x128xbf16, #tpu.memory_space<vmem>>, %arg3: memref<1x128xf32, #tpu.memory_space<vmem>>, %arg4: memref<1x128xf32, #tpu.memory_space<vmem>>, %arg5: memref<256x128xbf16, #tpu.memory_space<vmem>>, %arg6: memref<1x2x128xf32, #tpu.memory_space<vmem>>) attributes {dimension_semantics = [#tpu.dimension_semantics<parallel>], iteration_bounds = array<i64: 2>, scalar_prefetch = 0 : i64, scratch_operands = 0 : i64, tpu.core_type = #tpu.core_type<tc>, window_params = [{transform_indices = @transform_0, window_bounds = array<i64: 256, 128>}, {pipeline_mode = #tpu.pipeline_mode<synchronous>, transform_indices = @transform_1, window_bounds = array<i64: 128, 128>}, {pipeline_mode = #tpu.pipeline_mode<synchronous>, transform_indices = @transform_2, window_bounds = array<i64: 1, 128>}, {pipeline_mode = #tpu.pipeline_mode<synchronous>, transform_indices = @transform_3, window_bounds = array<i64: 1, 128>}, {transform_indices = @transform_4, window_bounds = array<i64: 256, 128>}, {transform_indices = @transform_5, window_bounds = array<i64: 1, 2, 128>}]} {
    %c0 = arith.constant 0 : index
    %c0_0 = arith.constant 0 : index
    %0 = vector.load %arg1[%c0, %c0_0] : memref<256x128xbf16, #tpu.memory_space<vmem>>, vector<256x128xbf16>
    %1 = arith.extf %0 : vector<256x128xbf16> to vector<256x128xf32>
    %c0_1 = arith.constant 0 : index
    %c0_2 = arith.constant 0 : index
    %2 = vector.load %arg3[%c0_1, %c0_2] : memref<1x128xf32, #tpu.memory_space<vmem>>, vector<1x128xf32>
    %3 = vector.broadcast %2 : vector<1x128xf32> to vector<256x128xf32>
    %4 = arith.mulf %1, %3 : vector<256x128xf32>
    %c0_3 = arith.constant 0 : index
    %c0_4 = arith.constant 0 : index
    %5 = vector.load %arg4[%c0_3, %c0_4] : memref<1x128xf32, #tpu.memory_space<vmem>>, vector<1x128xf32>
    %6 = vector.broadcast %5 : vector<1x128xf32> to vector<256x128xf32>
    %7 = arith.addf %4, %6 : vector<256x128xf32>
    %cst = arith.constant 0.000000e+00 : f32
    %8 = vector.broadcast %cst : f32 to vector<256x128xf32>
    %9 = arith.maximumf %7, %8 : vector<256x128xf32>
    %10 = arith.truncf %9 : vector<256x128xf32> to vector<256x128xbf16>
    %c0_5 = arith.constant 0 : index
    %c0_6 = arith.constant 0 : index
    %11 = vector.load %arg2[%c0_5, %c0_6] : memref<128x128xbf16, #tpu.memory_space<vmem>>, vector<128x128xbf16>
    %cst_7 = arith.constant dense<0.000000e+00> : vector<256x128xf32>
    %12 = tpu.matmul %10, %11, %cst_7 {dimension_numbers = #tpu.dot_dimension_numbers<[1], [0], [0], [1], [0, 0, 1, 1], [], []>} : vector<256x128xbf16>, vector<128x128xbf16>, vector<256x128xf32> -> vector<256x128xf32>
    %13 = arith.truncf %12 : vector<256x128xf32> to vector<256x128xbf16>
    %c0_8 = arith.constant 0 : index
    %c0_9 = arith.constant 0 : index
    %14 = vector.load %arg5[%c0_8, %c0_9] : memref<256x128xbf16, #tpu.memory_space<vmem>>, vector<256x128xbf16>
    tpu.vector_store %arg5[%c0_8, %c0_9], %13 {strides = array<i32>} : memref<256x128xbf16, #tpu.memory_space<vmem>>, vector<256x128xbf16>,
    %cst_10 = arith.constant dense<0.000000e+00> : vector<128xf32>
    %15 = vector.multi_reduction <add>, %12, %cst_10 [0] : vector<256x128xf32> to vector<128xf32>
    %16 = vector.shape_cast %15 : vector<128xf32> to vector<1x128xf32>
    %17 = arith.mulf %12, %12 : vector<256x128xf32>
    %cst_11 = arith.constant dense<0.000000e+00> : vector<128xf32>
    %18 = vector.multi_reduction <add>, %17, %cst_11 [0] : vector<256x128xf32> to vector<128xf32>
    %19 = vector.shape_cast %18 : vector<128xf32> to vector<1x128xf32>
    %20 = tpu.concatenate %16, %19 in 0 : vector<1x128xf32>, vector<1x128xf32> -> vector<2x128xf32>
    %c0_12 = arith.constant 0 : index
    %c0_13 = arith.constant 0 : index
    %c0_14 = arith.constant 0 : index
    %21 = vector.load %arg6[%c0_12, %c0_13, %c0_14] : memref<1x2x128xf32, #tpu.memory_space<vmem>>, vector<1x2x128xf32>
    %22 = vector.shape_cast %21 : vector<1x2x128xf32> to vector<2x128xf32>
    %23 = vector.shape_cast %20 : vector<2x128xf32> to vector<1x2x128xf32>
    tpu.vector_store %arg6[%c0_12, %c0_13, %c0_14], %23 {strides = array<i32>} : memref<1x2x128xf32, #tpu.memory_space<vmem>>, vector<1x2x128xf32>,
    return
  }
  func.func @transform_0(%arg0: i32) -> (i32, i32) {
    %c0_i32 = arith.constant 0 : i32
    %c0_i32_0 = arith.constant 0 : i32
    return %arg0, %c0_i32 : i32, i32
  }
  func.func @transform_1(%arg0: i32) -> (i32, i32) {
    %c0_i32 = arith.constant 0 : i32
    %c0_i32_0 = arith.constant 0 : i32
    %c0_i32_1 = arith.constant 0 : i32
    return %c0_i32, %c0_i32_0 : i32, i32
  }
  func.func @transform_2(%arg0: i32) -> (i32, i32) {
    %c0_i32 = arith.constant 0 : i32
    %c0_i32_0 = arith.constant 0 : i32
    %c0_i32_1 = arith.constant 0 : i32
    return %c0_i32, %c0_i32_0 : i32, i32
  }
  func.func @transform_3(%arg0: i32) -> (i32, i32) {
    %c0_i32 = arith.constant 0 : i32
    %c0_i32_0 = arith.constant 0 : i32
    %c0_i32_1 = arith.constant 0 : i32
    return %c0_i32, %c0_i32_0 : i32, i32
  }
  func.func @transform_4(%arg0: i32) -> (i32, i32) {
    %c0_i32 = arith.constant 0 : i32
    %c0_i32_0 = arith.constant 0 : i32
    return %arg0, %c0_i32 : i32, i32
  }
  func.func @transform_5(%arg0: i32) -> (i32, i32, i32) {
    %c0_i32 = arith.constant 0 : i32
    %c0_i32_0 = arith.constant 0 : i32
    %c0_i32_1 = arith.constant 0 : i32
    return %arg0, %c0_i32, %c0_i32_0 : i32, i32, i32
  }
}

module attributes {stable_mosaic.version = 11 : i64} {
  func.func @_bn_relu_slice_kernel(%arg0: i32, %arg1: memref<256x128xbf16, #tpu.memory_space<vmem>>, %arg2: memref<1x128xf32, #tpu.memory_space<vmem>>, %arg3: memref<1x128xf32, #tpu.memory_space<vmem>>, %arg4: memref<256x8xf32, #tpu.memory_space<vmem>>) attributes {dimension_semantics = [#tpu.dimension_semantics<parallel>], iteration_bounds = array<i64: 2>, scalar_prefetch = 0 : i64, scratch_operands = 0 : i64, tpu.core_type = #tpu.core_type<tc>, window_params = [{transform_indices = @transform_0, window_bounds = array<i64: 256, 128>}, {pipeline_mode = #tpu.pipeline_mode<synchronous>, transform_indices = @transform_1, window_bounds = array<i64: 1, 128>}, {pipeline_mode = #tpu.pipeline_mode<synchronous>, transform_indices = @transform_2, window_bounds = array<i64: 1, 128>}, {transform_indices = @transform_3, window_bounds = array<i64: 256, 8>}]} {
    %c0 = arith.constant 0 : index
    %c0_0 = arith.constant 0 : index
    %0 = vector.load %arg1[%c0, %c0_0] : memref<256x128xbf16, #tpu.memory_space<vmem>>, vector<256x128xbf16>
    %1 = arith.extf %0 : vector<256x128xbf16> to vector<256x128xf32>
    %c0_1 = arith.constant 0 : index
    %c0_2 = arith.constant 0 : index
    %2 = vector.load %arg2[%c0_1, %c0_2] : memref<1x128xf32, #tpu.memory_space<vmem>>, vector<1x128xf32>
    %3 = vector.broadcast %2 : vector<1x128xf32> to vector<256x128xf32>
    %4 = arith.mulf %1, %3 : vector<256x128xf32>
    %c0_3 = arith.constant 0 : index
    %c0_4 = arith.constant 0 : index
    %5 = vector.load %arg3[%c0_3, %c0_4] : memref<1x128xf32, #tpu.memory_space<vmem>>, vector<1x128xf32>
    %6 = vector.broadcast %5 : vector<1x128xf32> to vector<256x128xf32>
    %7 = arith.addf %4, %6 : vector<256x128xf32>
    %cst = arith.constant 0.000000e+00 : f32
    %8 = vector.broadcast %cst : f32 to vector<256x128xf32>
    %9 = arith.maximumf %7, %8 : vector<256x128xf32>
    %10 = vector.extract_strided_slice %9 {offsets = [0, 0], sizes = [256, 8], strides = [1, 1]} : vector<256x128xf32> to vector<256x8xf32>
    %c0_5 = arith.constant 0 : index
    %c0_6 = arith.constant 0 : index
    %11 = vector.load %arg4[%c0_5, %c0_6] : memref<256x8xf32, #tpu.memory_space<vmem>>, vector<256x8xf32>
    tpu.vector_store %arg4[%c0_5, %c0_6], %10 {strides = array<i32>} : memref<256x8xf32, #tpu.memory_space<vmem>>, vector<256x8xf32>,
    return
  }
  func.func @transform_0(%arg0: i32) -> (i32, i32) {
    %c0_i32 = arith.constant 0 : i32
    %c0_i32_0 = arith.constant 0 : i32
    return %arg0, %c0_i32 : i32, i32
  }
  func.func @transform_1(%arg0: i32) -> (i32, i32) {
    %c0_i32 = arith.constant 0 : i32
    %c0_i32_0 = arith.constant 0 : i32
    %c0_i32_1 = arith.constant 0 : i32
    return %c0_i32, %c0_i32_0 : i32, i32
  }
  func.func @transform_2(%arg0: i32) -> (i32, i32) {
    %c0_i32 = arith.constant 0 : i32
    %c0_i32_0 = arith.constant 0 : i32
    %c0_i32_1 = arith.constant 0 : i32
    return %c0_i32, %c0_i32_0 : i32, i32
  }
  func.func @transform_3(%arg0: i32) -> (i32, i32) {
    %c0_i32 = arith.constant 0 : i32
    %c0_i32_0 = arith.constant 0 : i32
    return %arg0, %c0_i32 : i32, i32
  }
}

</mosaic_0001>

<llo_original>
// kernel: decoder_forward.4
$region0: #{decoder_forward.4}
  #allocation0 [shape = 'u32[]', space=smem, size = 0x4, offset = 0x4, fixed_abs, tag = 'smem constant byte address 0x4 - core index']
  #allocation1 [shape = 'u32[144,128]{1,0:T(1,128)}', space=vmem, size = 0x12000, scoped, tag = 'internal scratch']
  %s0 = inlined_call_operand.vmem [shape: bf16[128,16], index: 0, kind: input, shape index: {}]
  %s1 = inlined_call_operand.vmem [shape: bf16[16,128], index: 1, kind: input, shape index: {}]
  %s2 = inlined_call_operand.vmem [shape: bf16[128,128], index: 2, kind: output, shape index: {0}]
  %s3 = inlined_call_operand.vmem [shape: f32[2,2,128], index: 3, kind: output, shape index: {1}]
  %4 = xla_tuple %s2, %s3
  %s5 = sld [smem:[#allocation0]]
  $region49: #{decoder_forward.4} parent=0
    _
  %s7 = ssub.s32 1, %s5
  %s8 = scalar_select 0, %s7, %s5
  loop: start=0, step=1, limit=4
  $region2: #{decoder_forward.4} parent=0 // loop_pre_header
    _
  $region3: #{decoder_forward.4} parent=0 // loop_header
    %s10 = sphi 0, %s14
    %p11 = scmp.ge.s32.totalorder %s10, 4
    %s20 = sphi 0, %s22
    %s23 = sphi 0, %s20
    %s24 = sphi 0, %s23
    %s40 = sphi 0, %s24
    %s44 = sphi 0, %s44
    %s46 = sphi 0, %s44
    %s47 = sphi 0, %s46
    %s61 = sphi 0, %s47
    %s67 = sphi 0, %s69
    %s70 = sphi 0, %s67
    %s71 = sphi 0, %s70
    %s87 = sphi 0, %s71
    %s93 = sphi 0, %s95
    %s96 = sphi 0, %s93
    %s97 = sphi 0, %s96
    %s113 = sphi 0, %s97
  $region4: #{decoder_forward.4} parent=0 // loop_header_branch
    %13 = sbr.rel (%p11) target = $region8
  $region5: #{decoder_forward.4} parent=0 // loop_body
    %s15 = ssub.s32 %s10, 1
    %s16 = ssub.s32 %s10, 2
    %s17 = sadd.s32 %s10, 1
    %s18 = ssub.s32 %s10, %s17
    %p19 = scmp.eq.s32.totalorder %s18, 0
    %s21 = sadd.s32 %s20, 1
    %s22 = scalar_select %p19, %s20, %s21
    %p25 = pneg %p19
    %p26 = scmp.eq.s32.totalorder %s10, 1
    %p27 = por %p25, %p26
    %p28 = scmp.ne.s32.totalorder %s20, %s23
    %p29 = scmp.eq.s32.totalorder %s10, 0
    %p30 = por %p28, %p29
    %p31 = scmp.ne.s32.totalorder %s20, %s23
    %p32 = scmp.eq.s32.totalorder %s15, 1
    %p33 = por %p31, %p32
    %p34 = scmp.ne.s32.totalorder %s23, %s24
    %p35 = scmp.eq.s32.totalorder %s15, 0
    %p36 = por %p34, %p35
    %p37 = scmp.ne.s32.totalorder %s23, %s24
    %p38 = scmp.eq.s32.totalorder %s16, 1
    %p39 = por %p37, %p38
    %p41 = scmp.ne.s32.totalorder %s24, %s40
    %p42 = scmp.eq.s32.totalorder %s16, 0
    %p43 = por %p41, %p42
    %s45 = sadd.s32 %s44, 1
    %p48 = scmp.eq.s32.totalorder %s10, 1
    %p49 = scmp.ne.s32.totalorder %s44, %s46
    %p50 = scmp.eq.s32.totalorder %s10, 0
    %p51 = por %p49, %p50
    %p52 = scmp.ne.s32.totalorder %s44, %s46
    %p53 = scmp.eq.s32.totalorder %s15, 1
    %p54 = por %p52, %p53
    %p55 = scmp.ne.s32.totalorder %s46, %s47
    %p56 = scmp.eq.s32.totalorder %s15, 0
    %p57 = por %p55, %p56
    %p58 = scmp.ne.s32.totalorder %s46, %s47
    %p59 = scmp.eq.s32.totalorder %s16, 1
    %p60 = por %p58, %p59
    %p62 = scmp.ne.s32.totalorder %s47, %s61
    %p63 = scmp.eq.s32.totalorder %s16, 0
    %p64 = por %p62, %p63
    %s65 = ssub.s32 %s10, %s17
    %p66 = scmp.eq.s32.totalorder %s65, 0
    %s68 = sadd.s32 %s67, 1
    %s69 = scalar_select %p66, %s67, %s68
    %p72 = pneg %p66
    %p73 = scmp.eq.s32.totalorder %s10, 1
    %p74 = por %p72, %p73
    %p75 = scmp.ne.s32.totalorder %s67, %s70
    %p76 = scmp.eq.s32.totalorder %s10, 0
    %p77 = por %p75, %p76
    %p78 = scmp.ne.s32.totalorder %s67, %s70
    %p79 = scmp.eq.s32.totalorder %s15, 1
    %p80 = por %p78, %p79
    %p81 = scmp.ne.s32.totalorder %s70, %s71
    %p82 = scmp.eq.s32.totalorder %s15, 0
    %p83 = por %p81, %p82
    %p84 = scmp.ne.s32.totalorder %s70, %s71
    %p85 = scmp.eq.s32.totalorder %s16, 1
    %p86 = por %p84, %p85
    %p88 = scmp.ne.s32.totalorder %s71, %s87
    %p89 = scmp.eq.s32.totalorder %s16, 0
    %p90 = por %p88, %p89
    %s91 = ssub.s32 %s10, %s17
    %p92 = scmp.eq.s32.totalorder %s91, 0
    %s94 = sadd.s32 %s93, 1
    %s95 = scalar_select %p92, %s93, %s94
    %p98 = pneg %p92
    %p99 = scmp.eq.s32.totalorder %s10, 1
    %p100 = por %p98, %p99
    %p101 = scmp.ne.s32.totalorder %s93, %s96
    %p102 = scmp.eq.s32.totalorder %s10, 0
    %p103 = por %p101, %p102
    %p104 = scmp.ne.s32.totalorder %s93, %s96
    %p105 = scmp.eq.s32.totalorder %s15, 1
    %p106 = por %p104, %p105
    %p107 = scmp.ne.s32.totalorder %s96, %s97
    %p108 = scmp.eq.s32.totalorder %s15, 0
    %p109 = por %p107, %p108
    %p110 = scmp.ne.s32.totalorder %s96, %s97
    %p111 = scmp.eq.s32.totalorder %s16, 1
    %p112 = por %p110, %p111
    %p114 = scmp.ne.s32.totalorder %s97, %s113
    %p115 = scmp.eq.s32.totalorder %s16, 0
    %p116 = por %p114, %p115
    %p117 = scmp.le.s32.totalorder 1, %s10
    %p118 = scmp.lt.s32.totalorder %s10, 3
    %p119 = pnand %p117, %p118
    %p120 = pneg %p119
    // Predicated region
    $region9: #{decoder_forward.4} parent=5 // pred_check
      _
    $region10: #{decoder_forward.4} parent=5 // pred_check_branch
      %122 = sbr.rel (%p119) target = $region12
    $region11: #{decoder_forward.4} parent=5 // pred_region
      %s123 = ssub.s32 %s10, 1
      // Predicated region
      $region13: #{decoder_forward.4} parent=11 // pred_check
        %p124 = pneg %p57
      $region14: #{decoder_forward.4} parent=11 // pred_check_branch
        %126 = sbr.rel (%p124) target = $region16
      $region15: #{decoder_forward.4} parent=11 // pred_region
        _
      $region16: #{decoder_forward.4} parent=11 // pred_fallthru
        _
    $region12: #{decoder_forward.4} parent=5 // pred_fallthru
      _
    %p127 = scmp.lt.s32.totalorder %s10, 2
    // Predicated region
    $region17: #{decoder_forward.4} parent=5 // pred_check
      %p128 = pneg %p127
    $region18: #{decoder_forward.4} parent=5 // pred_check_branch
      %130 = sbr.rel (%p128) target = $region20
    $region19: #{decoder_forward.4} parent=5 // pred_region
      // Predicated region
      $region21: #{decoder_forward.4} parent=19 // pred_check
        %p131 = pneg %p30
      $region22: #{decoder_forward.4} parent=19 // pred_check_branch
        %133 = sbr.rel (%p131) target = $region24
      $region23: #{decoder_forward.4} parent=19 // pred_region
        %s134 = smul.u32 8, %s10
        %p135 = scmp.lt.s32.totalorder %s134, 15
        %s136 = scalar_select %p135, %s134, 15
        %s137 = smul.addr %s136, 4
        %s138 = scalar_lea.vmem %s0, %s137
        %s139 = smul.u32 8, %s10
      $region24: #{decoder_forward.4} parent=19 // pred_fallthru
        _
    $region20: #{decoder_forward.4} parent=5 // pred_fallthru
      _
    %p140 = scmp.le.s32.totalorder 1, %s10
    %p141 = scmp.lt.s32.totalorder %s10, 3
    %p142 = pnand %p140, %p141
    %p143 = pneg %p142
    // Predicated region
    $region25: #{decoder_forward.4} parent=5 // pred_check
      _
    $region26: #{decoder_forward.4} parent=5 // pred_check_branch
      %145 = sbr.rel (%p142) target = $region28
    $region27: #{decoder_forward.4} parent=5 // pred_region
      %s146 = ssub.s32 %s10, 1
      %s147 = smul.u32 8, %s15
      %p148 = scmp.lt.s32.totalorder %s147, 15
      %s149 = scalar_select %p148, %s147, 15
      %s150 = smul.addr %s149, 4
      %s151 = scalar_lea.vmem %s0, %s150
      %p152 = pneg %p36
      %p153 = pneg %p33
      %p154 = pneg %p57
      %p155 = pneg %p54
      %p156 = pneg %p83
      %p157 = pneg %p80
      %s158 = smul.u32 8, %s15
      %p159 = scmp.lt.s32.totalorder %s158, 15
      %s160 = scalar_select %p159, %s158, 15
      %s161 = smul.addr %s160, 4
      %s162 = scalar_lea.vmem %s2, %s161
      %p163 = pneg %p109
      %p164 = pneg %p106
      %p165 = scmp.lt.s32.totalorder %s15, 1
      %s166 = scalar_select %p165, %s15, 1
      %s167 = smul.addr %s166, 2
      %s168 = scalar_lea.vmem %s3, %s167
      %s169 = smul.u32 8, %s15
      %p170 = scmp.lt.s32.totalorder %s169, 15
      %s171 = scalar_select %p170, %s169, 15
      %s172 = smul.addr %s171, 4
      %s173 = scalar_lea.vmem %s0, %s172
      %s174 = smul.u32 8, %s15
      %s175 = smul.u32 8, %s15
      %p176 = scmp.lt.s32.totalorder %s175, 15
      %s177 = scalar_select %p176, %s175, 15
      %s178 = smul.addr %s177, 4
      %s179 = scalar_lea.vmem %s2, %s178
      %s180 = smul.u32 8, %s15
      %p181 = scmp.lt.s32.totalorder %s15, 1
      %s182 = scalar_select %p181, %s15, 1
      %s183 = smul.addr %s182, 2
      %s184 = scalar_lea.vmem %s3, %s183
      %v186 = vld [vmem:[%s173] sm:$0xf]
      %v187 = vld [vmem:[%s173 + $0x4] sm:$0xf]
      %v188 = vld [vmem:[%s173 + $0x8] sm:$0xf]
      %v189 = vld [vmem:[%s173 + $0xc] sm:$0xf]
      %v190 = vld [vmem:[%s173 + $0x10] sm:$0xf]
      %v191 = vld [vmem:[%s173 + $0x14] sm:$0xf]
      %v192 = vld [vmem:[%s173 + $0x18] sm:$0xf]
      %v193 = vld [vmem:[%s173 + $0x1c] sm:$0xf]
      %v194 = vld [vmem:[%s1] sm:$0xf]
      %v195 = vld [vmem:[%s1 + $0x4] sm:$0xf]
      %v204 = vunpack.c.l.b16 %v186
      %v205 = vunpack.c.l.b16 %v187
      %v206 = vunpack.c.l.b16 %v188
      %v207 = vunpack.c.l.b16 %v189
      %v208 = vunpack.c.l.b16 %v190
      %v209 = vunpack.c.l.b16 %v191
      %v210 = vunpack.c.l.b16 %v192
      %v211 = vunpack.c.l.b16 %v193
      %v212 = vpack.c.b16 %v205, %v204
      %v213 = vpack.c.b16 %v207, %v206
      %v214 = vpack.c.b16 %v209, %v208
      %v215 = vpack.c.b16 %v211, %v210
      %v218 = vunpack.c.l.b16 %v194
      %v219 = vunpack.c.l.b16 %v195
      %v220 = vpack.c.b16 %v219, %v218
      %vm222 = vcmask 130048
      %v224 = vsel %vm222, %v212, 0
      %v227 = vsel %vm222, %v213, 0
      %v230 = vsel %vm222, %v214, 0
      %v233 = vsel %vm222, %v215, 0
      %235 = vmatprep.subr.bf16.mxu0 0
      %236 = vmatpush1.bf16.msra.mxu0 %v220
      %237 = vmatprep.subr.bf16.mxu0 0
      %238 = vmatpush1.bf16.msra.mxu0 0
      %239 = vmatprep.subr.bf16.mxu0 0
      %240 = vmatpush1.bf16.msra.mxu0 0
      %241 = vmatprep.subr.bf16.mxu0 0
      %242 = vmatpush1.bf16.msra.mxu0 0
      %243 = vmatprep.subr.bf16.mxu0 0
      %244 = vmatpush1.bf16.msra.mxu0 0
      %245 = vmatprep.subr.bf16.mxu0 0
      %246 = vmatpush1.bf16.msra.mxu0 0
      %247 = vmatprep.subr.bf16.mxu0 0
      %248 = vmatpush1.bf16.msra.mxu0 0
      %249 = vmatprep.subr.bf16.mxu0 0
      %250 = vmatpush1.bf16.msra.mxu0 0
      %251 = vmatprep.subr.bf16.mxu0 0
      %252 = vmatpush1.bf16.msra.mxu0 0
      %253 = vmatprep.subr.bf16.mxu0 0
      %254 = vmatpush1.bf16.msra.mxu0 0
      %255 = vmatprep.subr.bf16.mxu0 0
      %256 = vmatpush1.bf16.msra.mxu0 0
      %257 = vmatprep.subr.bf16.mxu0 0
      %258 = vmatpush1.bf16.msra.mxu0 0
      %259 = vmatprep.subr.bf16.mxu0 0
      %260 = vmatpush1.bf16.msra.mxu0 0
      %261 = vmatprep.subr.bf16.mxu0 0
      %262 = vmatpush1.bf16.msra.mxu0 0
      %263 = vmatprep.subr.bf16.mxu0 0
      %264 = vmatpush1.bf16.msra.mxu0 0
      %265 = vmatprep.subr.bf16.mxu0 0
      %266 = vmatpush1.bf16.msra.mxu0 0
      %267 = vmatprep.mubr.bf16.mxu0 0
      %268 = vmatmul.mubr.bf16.gmra.mrb[0].mxu0 %v224
      %v269 = vpop.f32.mrb[0].mxu0
      %v270 = vadd.f32 0.0, %v269
      %v271 = vpop.f32.mrb[0].mxu0
      %v272 = vpop.f32.mrb[0].mxu0
      %v273 = vadd.f32 0.0, %v272
      %v274 = vpop.f32.mrb[0].mxu0
      %275 = vmatprep.mubr.bf16.mxu0 0
      %276 = vmatmul.mubr.bf16.gmra.mrb[0].mxu0 %v227
      %v277 = vpop.f32.mrb[0].mxu0
      %v278 = vadd.f32 0.0, %v277
      %v279 = vpop.f32.mrb[0].mxu0
      %v280 = vpop.f32.mrb[0].mxu0
      %v281 = vadd.f32 0.0, %v280
      %v282 = vpop.f32.mrb[0].mxu0
      %283 = vmatprep.mubr.bf16.mxu0 0
      %284 = vmatmul.mubr.bf16.gmra.mrb[0].mxu0 %v230
      %v285 = vpop.f32.mrb[0].mxu0
      %v286 = vadd.f32 0.0, %v285
      %v287 = vpop.f32.mrb[0].mxu0
      %v288 = vpop.f32.mrb[0].mxu0
      %v289 = vadd.f32 0.0, %v288
      %v290 = vpop.f32.mrb[0].mxu0
      %291 = vmatprep.mubr.bf16.mxu0 0
      %292 = vmatmul.mubr.bf16.gmra.mrb[0].mxu0 %v233
      %v293 = vpop.f32.mrb[0].mxu0
      %v294 = vadd.f32 0.0, %v293
      %v295 = vpop.f32.mrb[0].mxu0
      %v296 = vpop.f32.mrb[0].mxu0
      %v297 = vadd.f32 0.0, %v296
      %v298 = vpop.f32.mrb[0].mxu0
      %299 = vdwg.mxu0
      %v300 = vpack.c.bf16 %v273, %v270
      %v301 = vpack.c.bf16 %v281, %v278
      %v302 = vpack.c.bf16 %v289, %v286
      %v303 = vpack.c.bf16 %v297, %v294
      %v308 = vunpack.c.l.b16 %v300
      %v309 = vunpack.c.h.b16 %v300
      %v310 = vunpack.c.l.b16 %v301
      %v311 = vunpack.c.h.b16 %v301
      %v312 = vunpack.c.l.b16 %v302
      %v313 = vunpack.c.h.b16 %v302
      %v314 = vunpack.c.l.b16 %v303
      %v315 = vunpack.c.h.b16 %v303
      %v316 = vpack.c.b16 %v308, %v308
      %v317 = vpack.c.b16 %v309, %v309
      %v318 = vpack.c.b16 %v310, %v310
      %v319 = vpack.c.b16 %v311, %v311
      %v320 = vpack.c.b16 %v312, %v312
      %v321 = vpack.c.b16 %v313, %v313
      %v322 = vpack.c.b16 %v314, %v314
      %v323 = vpack.c.b16 %v315, %v315
      %332 = vst [vmem:[%s179] sm:$0xf] %v316
      %333 = vst [vmem:[%s179 + $0x4] sm:$0xf] %v317
      %334 = vst [vmem:[%s179 + $0x8] sm:$0xf] %v318
      %335 = vst [vmem:[%s179 + $0xc] sm:$0xf] %v319
      %336 = vst [vmem:[%s179 + $0x10] sm:$0xf] %v320
      %337 = vst [vmem:[%s179 + $0x14] sm:$0xf] %v321
      %338 = vst [vmem:[%s179 + $0x18] sm:$0xf] %v322
      %339 = vst [vmem:[%s179 + $0x1c] sm:$0xf] %v323
      %v340 = vadd.f32 %v270, %v273
      %v341 = vadd.f32 %v340, %v278
      %v342 = vadd.f32 %v341, %v281
      %v343 = vadd.f32 %v342, %v286
      %v344 = vadd.f32 %v343, %v289
      %v345 = vadd.f32 %v344, %v294
      %v346 = vadd.f32 %v345, %v297
      %v347 = vrot.slane %v346, 4
      %v348 = vadd.f32 %v346, %v347
      %v349 = vrot.slane %v348, 2
      %v350 = vadd.f32 %v348, %v349
      %v351 = vrot.slane %v350, 1
      %v352 = vadd.f32 %v350, %v351
      %v353 = vmul.f32 %v270, %v270
      %v354 = vmul.f32 %v273, %v273
      %v355 = vmul.f32 %v278, %v278
      %v356 = vmul.f32 %v281, %v281
      %v357 = vmul.f32 %v286, %v286
      %v358 = vmul.f32 %v289, %v289
      %v359 = vmul.f32 %v294, %v294
      %v360 = vmul.f32 %v297, %v297
      %v361 = vadd.f32 %v353, %v354
      %v362 = vadd.f32 %v361, %v355
      %v363 = vadd.f32 %v362, %v356
      %v364 = vadd.f32 %v363, %v357
      %v365 = vadd.f32 %v364, %v358
      %v366 = vadd.f32 %v365, %v359
      %v367 = vadd.f32 %v366, %v360
      %v368 = vrot.slane %v367, 4
      %v369 = vadd.f32 %v367, %v368
      %v370 = vrot.slane %v369, 2
      %v371 = vadd.f32 %v369, %v370
      %v372 = vrot.slane %v371, 1
      %v373 = vadd.f32 %v371, %v372
      %vm374 = vcmask 1040384
      %v375 = vsel %vm374, %v352, %v373
      %376 = vst [vmem:[%s184] sm:$0x3] %v375
      %s377 = smul.u32 8, %s15
      %p378 = scmp.lt.s32.totalorder %s377, 15
      %s379 = scalar_select %p378, %s377, 15
      %s380 = smul.addr %s379, 4
      %s381 = scalar_lea.vmem %s2, %s380
      %p382 = scmp.lt.s32.totalorder %s15, 1
      %s383 = scalar_select %p382, %s15, 1
      %s384 = smul.addr %s383, 2
      %s385 = scalar_lea.vmem %s3, %s384
      // Predicated region
      $region29: #{decoder_forward.4} parent=27 // pred_check
        %p386 = pneg %p80
      $region30: #{decoder_forward.4} parent=27 // pred_check_branch
        %388 = sbr.rel (%p386) target = $region32
      $region31: #{decoder_forward.4} parent=27 // pred_region
        %s389 = smul.u32 8, %s15
      $region32: #{decoder_forward.4} parent=27 // pred_fallthru
        _
      // Predicated region
      $region33: #{decoder_forward.4} parent=27 // pred_check
        %p390 = pneg %p106
      $region34: #{decoder_forward.4} parent=27 // pred_check_branch
        %392 = sbr.rel (%p390) target = $region36
      $region35: #{decoder_forward.4} parent=27 // pred_region
        _
      $region36: #{decoder_forward.4} parent=27 // pred_fallthru
        _
    $region28: #{decoder_forward.4} parent=5 // pred_fallthru
      _
    %p393 = scmp.le.s32.totalorder 2, %s10
    // Predicated region
    $region37: #{decoder_forward.4} parent=5 // pred_check
      %p394 = pneg %p393
    $region38: #{decoder_forward.4} parent=5 // pred_check_branch
      %396 = sbr.rel (%p394) target = $region40
    $region39: #{decoder_forward.4} parent=5 // pred_region
      %s397 = ssub.s32 %s10, 2
      // Predicated region
      $region41: #{decoder_forward.4} parent=39 // pred_check
        %p398 = pneg %p86
      $region42: #{decoder_forward.4} parent=39 // pred_check_branch
        %400 = sbr.rel (%p398) target = $region44
      $region43: #{decoder_forward.4} parent=39 // pred_region
        %s401 = smul.u32 8, %s16
        %p402 = scmp.lt.s32.totalorder %s401, 15
        %s403 = scalar_select %p402, %s401, 15
        %s404 = smul.addr %s403, 4
        %s405 = scalar_lea.vmem %s2, %s404
      $region44: #{decoder_forward.4} parent=39 // pred_fallthru
        _
      // Predicated region
      $region45: #{decoder_forward.4} parent=39 // pred_check
        %p406 = pneg %p112
      $region46: #{decoder_forward.4} parent=39 // pred_check_branch
        %408 = sbr.rel (%p406) target = $region48
      $region47: #{decoder_forward.4} parent=39 // pred_region
        %p409 = scmp.lt.s32.totalorder %s16, 1
        %s410 = scalar_select %p409, %s16, 1
        %s411 = smul.addr %s410, 2
        %s412 = scalar_lea.vmem %s3, %s411
      $region48: #{decoder_forward.4} parent=39 // pred_fallthru
        _
    $region40: #{decoder_forward.4} parent=5 // pred_fallthru
      _
  $region6: #{decoder_forward.4} parent=0 // loop_footer
    %s14 = sadd.s32 1, %s10
  $region7: #{decoder_forward.4} parent=0 // loop_footer_branch
    %9 = sbr.rel target = $region3
  $region8: #{decoder_forward.4} parent=0 // loop_exit
    _

// kernel: decoder_forward.7
$region0: #{decoder_forward.7}
  #allocation0 [shape = 'u32[]', space=smem, size = 0x4, offset = 0x4, fixed_abs, tag = 'smem constant byte address 0x4 - core index']
  #allocation1 [shape = 'u32[144,128]{1,0:T(1,128)}', space=vmem, size = 0x12000, scoped, tag = 'internal scratch']
  %s0 = inlined_call_operand.vmem [shape: bf16[512,128], index: 0, kind: input, shape index: {}]
  %s1 = inlined_call_operand.vmem [shape: f32[1,128], index: 1, kind: input, shape index: {}]
  %s2 = inlined_call_operand.vmem [shape: f32[1,128], index: 2, kind: input, shape index: {}]
  %s3 = inlined_call_operand.vmem [shape: f32[512,8], index: 3, kind: output, shape index: {}]
  %s4 = sld [smem:[#allocation0]]
  $region45: #{decoder_forward.7} parent=0
    _
  %s6 = ssub.s32 1, %s4
  %s7 = scalar_select 0, %s6, %s4
  loop: start=0, step=1, limit=4
  $region2: #{decoder_forward.7} parent=0 // loop_pre_header
    _
  $region3: #{decoder_forward.7} parent=0 // loop_header
    %s9 = sphi 0, %s13
    %p10 = scmp.ge.s32.totalorder %s9, 4
    %s19 = sphi 0, %s21
    %s22 = sphi 0, %s19
    %s23 = sphi 0, %s22
    %s39 = sphi 0, %s23
    %s43 = sphi 0, %s43
    %s45 = sphi 0, %s43
    %s46 = sphi 0, %s45
    %s60 = sphi 0, %s46
    %s64 = sphi 0, %s64
    %s66 = sphi 0, %s64
    %s67 = sphi 0, %s66
    %s81 = sphi 0, %s67
    %s87 = sphi 0, %s89
    %s90 = sphi 0, %s87
    %s91 = sphi 0, %s90
    %s107 = sphi 0, %s91
  $region4: #{decoder_forward.7} parent=0 // loop_header_branch
    %12 = sbr.rel (%p10) target = $region8
  $region5: #{decoder_forward.7} parent=0 // loop_body
    %s14 = ssub.s32 %s9, 1
    %s15 = ssub.s32 %s9, 2
    %s16 = sadd.s32 %s9, 1
    %s17 = ssub.s32 %s9, %s16
    %p18 = scmp.eq.s32.totalorder %s17, 0
    %s20 = sadd.s32 %s19, 1
    %s21 = scalar_select %p18, %s19, %s20
    %p24 = pneg %p18
    %p25 = scmp.eq.s32.totalorder %s9, 1
    %p26 = por %p24, %p25
    %p27 = scmp.ne.s32.totalorder %s19, %s22
    %p28 = scmp.eq.s32.totalorder %s9, 0
    %p29 = por %p27, %p28
    %p30 = scmp.ne.s32.totalorder %s19, %s22
    %p31 = scmp.eq.s32.totalorder %s14, 1
    %p32 = por %p30, %p31
    %p33 = scmp.ne.s32.totalorder %s22, %s23
    %p34 = scmp.eq.s32.totalorder %s14, 0
    %p35 = por %p33, %p34
    %p36 = scmp.ne.s32.totalorder %s22, %s23
    %p37 = scmp.eq.s32.totalorder %s15, 1
    %p38 = por %p36, %p37
    %p40 = scmp.ne.s32.totalorder %s23, %s39
    %p41 = scmp.eq.s32.totalorder %s15, 0
    %p42 = por %p40, %p41
    %s44 = sadd.s32 %s43, 1
    %p47 = scmp.eq.s32.totalorder %s9, 1
    %p48 = scmp.ne.s32.totalorder %s43, %s45
    %p49 = scmp.eq.s32.totalorder %s9, 0
    %p50 = por %p48, %p49
    %p51 = scmp.ne.s32.totalorder %s43, %s45
    %p52 = scmp.eq.s32.totalorder %s14, 1
    %p53 = por %p51, %p52
    %p54 = scmp.ne.s32.totalorder %s45, %s46
    %p55 = scmp.eq.s32.totalorder %s14, 0
    %p56 = por %p54, %p55
    %p57 = scmp.ne.s32.totalorder %s45, %s46
    %p58 = scmp.eq.s32.totalorder %s15, 1
    %p59 = por %p57, %p58
    %p61 = scmp.ne.s32.totalorder %s46, %s60
    %p62 = scmp.eq.s32.totalorder %s15, 0
    %p63 = por %p61, %p62
    %s65 = sadd.s32 %s64, 1
    %p68 = scmp.eq.s32.totalorder %s9, 1
    %p69 = scmp.ne.s32.totalorder %s64, %s66
    %p70 = scmp.eq.s32.totalorder %s9, 0
    %p71 = por %p69, %p70
    %p72 = scmp.ne.s32.totalorder %s64, %s66
    %p73 = scmp.eq.s32.totalorder %s14, 1
    %p74 = por %p72, %p73
    %p75 = scmp.ne.s32.totalorder %s66, %s67
    %p76 = scmp.eq.s32.totalorder %s14, 0
    %p77 = por %p75, %p76
    %p78 = scmp.ne.s32.totalorder %s66, %s67
    %p79 = scmp.eq.s32.totalorder %s15, 1
    %p80 = por %p78, %p79
    %p82 = scmp.ne.s32.totalorder %s67, %s81
    %p83 = scmp.eq.s32.totalorder %s15, 0
    %p84 = por %p82, %p83
    %s85 = ssub.s32 %s9, %s16
    %p86 = scmp.eq.s32.totalorder %s85, 0
    %s88 = sadd.s32 %s87, 1
    %s89 = scalar_select %p86, %s87, %s88
    %p92 = pneg %p86
    %p93 = scmp.eq.s32.totalorder %s9, 1
    %p94 = por %p92, %p93
    %p95 = scmp.ne.s32.totalorder %s87, %s90
    %p96 = scmp.eq.s32.totalorder %s9, 0
    %p97 = por %p95, %p96
    %p98 = scmp.ne.s32.totalorder %s87, %s90
    %p99 = scmp.eq.s32.totalorder %s14, 1
    %p100 = por %p98, %p99
    %p101 = scmp.ne.s32.totalorder %s90, %s91
    %p102 = scmp.eq.s32.totalorder %s14, 0
    %p103 = por %p101, %p102
    %p104 = scmp.ne.s32.totalorder %s90, %s91
    %p105 = scmp.eq.s32.totalorder %s15, 1
    %p106 = por %p104, %p105
    %p108 = scmp.ne.s32.totalorder %s91, %s107
    %p109 = scmp.eq.s32.totalorder %s15, 0
    %p110 = por %p108, %p109
    %p111 = scmp.le.s32.totalorder 1, %s9
    %p112 = scmp.lt.s32.totalorder %s9, 3
    %p113 = pnand %p111, %p112
    %p114 = pneg %p113
    // Predicated region
    $region9: #{decoder_forward.7} parent=5 // pred_check
      _
    $region10: #{decoder_forward.7} parent=5 // pred_check_branch
      %116 = sbr.rel (%p113) target = $region12
    $region11: #{decoder_forward.7} parent=5 // pred_region
      %s117 = ssub.s32 %s9, 1
      // Predicated region
      $region13: #{decoder_forward.7} parent=11 // pred_check
        %p118 = pneg %p56
      $region14: #{decoder_forward.7} parent=11 // pred_check_branch
        %120 = sbr.rel (%p118) target = $region16
      $region15: #{decoder_forward.7} parent=11 // pred_region
        _
      $region16: #{decoder_forward.7} parent=11 // pred_fallthru
        _
      // Predicated region
      $region17: #{decoder_forward.7} parent=11 // pred_check
        %p121 = pneg %p77
      $region18: #{decoder_forward.7} parent=11 // pred_check_branch
        %123 = sbr.rel (%p121) target = $region20
      $region19: #{decoder_forward.7} parent=11 // pred_region
        _
      $region20: #{decoder_forward.7} parent=11 // pred_fallthru
        _
    $region12: #{decoder_forward.7} parent=5 // pred_fallthru
      _
    %p124 = scmp.lt.s32.totalorder %s9, 2
    // Predicated region
    $region21: #{decoder_forward.7} parent=5 // pred_check
      %p125 = pneg %p124
    $region22: #{decoder_forward.7} parent=5 // pred_check_branch
      %127 = sbr.rel (%p125) target = $region24
    $region23: #{decoder_forward.7} parent=5 // pred_region
      // Predicated region
      $region25: #{decoder_forward.7} parent=23 // pred_check
        %p128 = pneg %p29
      $region26: #{decoder_forward.7} parent=23 // pred_check_branch
        %130 = sbr.rel (%p128) target = $region28
      $region27: #{decoder_forward.7} parent=23 // pred_region
        %s131 = smul.u32 32, %s9
        %p132 = scmp.lt.s32.totalorder %s131, 63
        %s133 = scalar_select %p132, %s131, 63
        %s134 = smul.addr %s133, 4
        %s135 = scalar_lea.vmem %s0, %s134
        %s136 = smul.u32 32, %s9
      $region28: #{decoder_forward.7} parent=23 // pred_fallthru
        _
    $region24: #{decoder_forward.7} parent=5 // pred_fallthru
      _
    %p137 = scmp.le.s32.totalorder 1, %s9
    %p138 = scmp.lt.s32.totalorder %s9, 3
    %p139 = pnand %p137, %p138
    %p140 = pneg %p139
    // Predicated region
    $region29: #{decoder_forward.7} parent=5 // pred_check
      _
    $region30: #{decoder_forward.7} parent=5 // pred_check_branch
      %142 = sbr.rel (%p139) target = $region32
    $region31: #{decoder_forward.7} parent=5 // pred_region
      %s143 = ssub.s32 %s9, 1
      %s144 = smul.u32 32, %s14
      %p145 = scmp.lt.s32.totalorder %s144, 63
      %s146 = scalar_select %p145, %s144, 63
      %s147 = smul.addr %s146, 4
      %s148 = scalar_lea.vmem %s0, %s147
      %p149 = pneg %p35
      %p150 = pneg %p32
      %p151 = pneg %p56
      %p152 = pneg %p53
      %p153 = pneg %p77
      %p154 = pneg %p74
      %p155 = pneg %p103
      %p156 = pneg %p100
      %s157 = smul.u32 32, %s14
      %p158 = scmp.lt.s32.totalorder %s157, 63
      %s159 = scalar_select %p158, %s157, 63
      %s160 = smul.addr %s159, 8
      %s161 = scalar_lea.vmem %s3, %s160
      %s162 = smul.u32 32, %s14
      %p163 = scmp.lt.s32.totalorder %s162, 63
      %s164 = scalar_select %p163, %s162, 63
      %s165 = smul.addr %s164, 4
      %s166 = scalar_lea.vmem %s0, %s165
      %s167 = smul.u32 32, %s14
      %s168 = smul.u32 32, %s14
      %p169 = scmp.lt.s32.totalorder %s168, 63
      %s170 = scalar_select %p169, %s168, 63
      %s171 = smul.addr %s170, 8
      %s172 = scalar_lea.vmem %s3, %s171
      %s173 = smul.u32 32, %s14
      %v174 = vld [vmem:[%s166] sm:$0xf]
      %v175 = vld [vmem:[%s166 + $0x4] sm:$0xf]
      %v176 = vld [vmem:[%s166 + $0x8] sm:$0xf]
      %v177 = vld [vmem:[%s166 + $0xc] sm:$0xf]
      %v178 = vld [vmem:[%s166 + $0x10] sm:$0xf]
      %v179 = vld [vmem:[%s166 + $0x14] sm:$0xf]
      %v180 = vld [vmem:[%s166 + $0x18] sm:$0xf]
      %v181 = vld [vmem:[%s166 + $0x1c] sm:$0xf]
      %v182 = vld [vmem:[%s166 + $0x20] sm:$0xf]
      %v183 = vld [vmem:[%s166 + $0x24] sm:$0xf]
      %v184 = vld [vmem:[%s166 + $0x28] sm:$0xf]
      %v185 = vld [vmem:[%s166 + $0x2c] sm:$0xf]
      %v186 = vld [vmem:[%s166 + $0x30] sm:$0xf]
      %v187 = vld [vmem:[%s166 + $0x34] sm:$0xf]
      %v188 = vld [vmem:[%s166 + $0x38] sm:$0xf]
      %v189 = vld [vmem:[%s166 + $0x3c] sm:$0xf]
      %v190 = vld [vmem:[%s166 + $0x40] sm:$0xf]
      %v191 = vld [vmem:[%s166 + $0x44] sm:$0xf]
      %v192 = vld [vmem:[%s166 + $0x48] sm:$0xf]
      %v193 = vld [vmem:[%s166 + $0x4c] sm:$0xf]
      %v194 = vld [vmem:[%s166 + $0x50] sm:$0xf]
      %v195 = vld [vmem:[%s166 + $0x54] sm:$0xf]
      %v196 = vld [vmem:[%s166 + $0x58] sm:$0xf]
      %v197 = vld [vmem:[%s166 + $0x5c] sm:$0xf]
      %v198 = vld [vmem:[%s166 + $0x60] sm:$0xf]
      %v199 = vld [vmem:[%s166 + $0x64] sm:$0xf]
      %v200 = vld [vmem:[%s166 + $0x68] sm:$0xf]
      %v201 = vld [vmem:[%s166 + $0x6c] sm:$0xf]
      %v202 = vld [vmem:[%s166 + $0x70] sm:$0xf]
      %v203 = vld [vmem:[%s166 + $0x74] sm:$0xf]
      %v204 = vld [vmem:[%s166 + $0x78] sm:$0xf]
      %v205 = vld [vmem:[%s166 + $0x7c] sm:$0xf]
      %v206 = vunpack.c.l.bf16 %v174
      %v207 = vunpack.c.l.bf16 %v175
      %v208 = vunpack.c.l.bf16 %v176
      %v209 = vunpack.c.l.bf16 %v177
      %v210 = vunpack.c.l.bf16 %v178
      %v211 = vunpack.c.l.bf16 %v179
      %v212 = vunpack.c.l.bf16 %v180
      %v213 = vunpack.c.l.bf16 %v181
      %v214 = vunpack.c.l.bf16 %v182
      %v215 = vunpack.c.l.bf16 %v183
      %v216 = vunpack.c.l.bf16 %v184
      %v217 = vunpack.c.l.bf16 %v185
      %v218 = vunpack.c.l.bf16 %v186
      %v219 = vunpack.c.l.bf16 %v187
      %v220 = vunpack.c.l.bf16 %v188
      %v221 = vunpack.c.l.bf16 %v189
      %v222 = vunpack.c.l.bf16 %v190
      %v223 = vunpack.c.l.bf16 %v191
      %v224 = vunpack.c.l.bf16 %v192
      %v225 = vunpack.c.l.bf16 %v193
      %v226 = vunpack.c.l.bf16 %v194
      %v227 = vunpack.c.l.bf16 %v195
      %v228 = vunpack.c.l.bf16 %v196
      %v229 = vunpack.c.l.bf16 %v197
      %v230 = vunpack.c.l.bf16 %v198
      %v231 = vunpack.c.l.bf16 %v199
      %v232 = vunpack.c.l.bf16 %v200
      %v233 = vunpack.c.l.bf16 %v201
      %v234 = vunpack.c.l.bf16 %v202
      %v235 = vunpack.c.l.bf16 %v203
      %v236 = vunpack.c.l.bf16 %v204
      %v237 = vunpack.c.l.bf16 %v205
      %v238 = vld [vmem:[%s1] sm:$0x1]
      %v240 = vlaneseq
      %v241 = vshrl.u32 %v240, 7
      %v242 = vsub.s32 0, %v241
      %v243 = vrot.slane %v238, %v242
      %v245 = vmul.f32 %v206, %v243
      %v246 = vmul.f32 %v207, %v243
      %v247 = vmul.f32 %v208, %v243
      %v248 = vmul.f32 %v209, %v243
      %v249 = vmul.f32 %v210, %v243
      %v250 = vmul.f32 %v211, %v243
      %v251 = vmul.f32 %v212, %v243
      %v252 = vmul.f32 %v213, %v243
      %v253 = vmul.f32 %v214, %v243
      %v254 = vmul.f32 %v215, %v243
      %v255 = vmul.f32 %v216, %v243
      %v256 = vmul.f32 %v217, %v243
      %v257 = vmul.f32 %v218, %v243
      %v258 = vmul.f32 %v219, %v243
      %v259 = vmul.f32 %v220, %v243
      %v260 = vmul.f32 %v221, %v243
      %v261 = vmul.f32 %v222, %v243
      %v262 = vmul.f32 %v223, %v243
      %v263 = vmul.f32 %v224, %v243
      %v264 = vmul.f32 %v225, %v243
      %v265 = vmul.f32 %v226, %v243
      %v266 = vmul.f32 %v227, %v243
      %v267 = vmul.f32 %v228, %v243
      %v268 = vmul.f32 %v229, %v243
      %v269 = vmul.f32 %v230, %v243
      %v270 = vmul.f32 %v231, %v243
      %v271 = vmul.f32 %v232, %v243
      %v272 = vmul.f32 %v233, %v243
      %v273 = vmul.f32 %v234, %v243
      %v274 = vmul.f32 %v235, %v243
      %v275 = vmul.f32 %v236, %v243
      %v276 = vmul.f32 %v237, %v243
      %v277 = vld [vmem:[%s2] sm:$0x1]
      %v279 = vlaneseq
      %v280 = vshrl.u32 %v279, 7
      %v281 = vsub.s32 0, %v280
      %v282 = vrot.slane %v277, %v281
      %v284 = vadd.f32 %v245, %v282
      %v285 = vadd.f32 %v246, %v282
      %v286 = vadd.f32 %v247, %v282
      %v287 = vadd.f32 %v248, %v282
      %v288 = vadd.f32 %v249, %v282
      %v289 = vadd.f32 %v250, %v282
      %v290 = vadd.f32 %v251, %v282
      %v291 = vadd.f32 %v252, %v282
      %v292 = vadd.f32 %v253, %v282
      %v293 = vadd.f32 %v254, %v282
      %v294 = vadd.f32 %v255, %v282
      %v295 = vadd.f32 %v256, %v282
      %v296 = vadd.f32 %v257, %v282
      %v297 = vadd.f32 %v258, %v282
      %v298 = vadd.f32 %v259, %v282
      %v299 = vadd.f32 %v260, %v282
      %v300 = vadd.f32 %v261, %v282
      %v301 = vadd.f32 %v262, %v282
      %v302 = vadd.f32 %v263, %v282
      %v303 = vadd.f32 %v264, %v282
      %v304 = vadd.f32 %v265, %v282
      %v305 = vadd.f32 %v266, %v282
      %v306 = vadd.f32 %v267, %v282
      %v307 = vadd.f32 %v268, %v282
      %v308 = vadd.f32 %v269, %v282
      %v309 = vadd.f32 %v270, %v282
      %v310 = vadd.f32 %v271, %v282
      %v311 = vadd.f32 %v272, %v282
      %v312 = vadd.f32 %v273, %v282
      %v313 = vadd.f32 %v274, %v282
      %v314 = vadd.f32 %v275, %v282
      %v315 = vadd.f32 %v276, %v282
      %v316 = vmax.f32 %v284, 0.0
      %v317 = vmax.f32 %v285, 0.0
      %v318 = vmax.f32 %v286, 0.0
      %v319 = vmax.f32 %v287, 0.0
      %v320 = vmax.f32 %v288, 0.0
      %v321 = vmax.f32 %v289, 0.0
      %v322 = vmax.f32 %v290, 0.0
      %v323 = vmax.f32 %v291, 0.0
      %v324 = vmax.f32 %v292, 0.0
      %v325 = vmax.f32 %v293, 0.0
      %v326 = vmax.f32 %v294, 0.0
      %v327 = vmax.f32 %v295, 0.0
      %v328 = vmax.f32 %v296, 0.0
      %v329 = vmax.f32 %v297, 0.0
      %v330 = vmax.f32 %v298, 0.0
      %v331 = vmax.f32 %v299, 0.0
      %v332 = vmax.f32 %v300, 0.0
      %v333 = vmax.f32 %v301, 0.0
      %v334 = vmax.f32 %v302, 0.0
      %v335 = vmax.f32 %v303, 0.0
      %v336 = vmax.f32 %v304, 0.0
      %v337 = vmax.f32 %v305, 0.0
      %v338 = vmax.f32 %v306, 0.0
      %v339 = vmax.f32 %v307, 0.0
      %v340 = vmax.f32 %v308, 0.0
      %v341 = vmax.f32 %v309, 0.0
      %v342 = vmax.f32 %v310, 0.0
      %v343 = vmax.f32 %v311, 0.0
      %v344 = vmax.f32 %v312, 0.0
      %v345 = vmax.f32 %v313, 0.0
      %v346 = vmax.f32 %v314, 0.0
      %v347 = vmax.f32 %v315, 0.0
      %vm348 = vcmask 64512
      %349 = vst.msk [vmem:[%s172] sm:$0xff] %vm348, %v316
      %350 = vst.msk [vmem:[%s172 + $0x8] sm:$0xff] %vm348, %v317
      %351 = vst.msk [vmem:[%s172 + $0x10] sm:$0xff] %vm348, %v318
      %352 = vst.msk [vmem:[%s172 + $0x18] sm:$0xff] %vm348, %v319
      %353 = vst.msk [vmem:[%s172 + $0x20] sm:$0xff] %vm348, %v320
      %354 = vst.msk [vmem:[%s172 + $0x28] sm:$0xff] %vm348, %v321
      %355 = vst.msk [vmem:[%s172 + $0x30] sm:$0xff] %vm348, %v322
      %356 = vst.msk [vmem:[%s172 + $0x38] sm:$0xff] %vm348, %v323
      %357 = vst.msk [vmem:[%s172 + $0x40] sm:$0xff] %vm348, %v324
      %358 = vst.msk [vmem:[%s172 + $0x48] sm:$0xff] %vm348, %v325
      %359 = vst.msk [vmem:[%s172 + $0x50] sm:$0xff] %vm348, %v326
      %360 = vst.msk [vmem:[%s172 + $0x58] sm:$0xff] %vm348, %v327
      %361 = vst.msk [vmem:[%s172 + $0x60] sm:$0xff] %vm348, %v328
      %362 = vst.msk [vmem:[%s172 + $0x68] sm:$0xff] %vm348, %v329
      %363 = vst.msk [vmem:[%s172 + $0x70] sm:$0xff] %vm348, %v330
      %364 = vst.msk [vmem:[%s172 + $0x78] sm:$0xff] %vm348, %v331
      %365 = vst.msk [vmem:[%s172 + $0x80] sm:$0xff] %vm348, %v332
      %366 = vst.msk [vmem:[%s172 + $0x88] sm:$0xff] %vm348, %v333
      %367 = vst.msk [vmem:[%s172 + $0x90] sm:$0xff] %vm348, %v334
      %368 = vst.msk [vmem:[%s172 + $0x98] sm:$0xff] %vm348, %v335
      %369 = vst.msk [vmem:[%s172 + $0xa0] sm:$0xff] %vm348, %v336
      %370 = vst.msk [vmem:[%s172 + $0xa8] sm:$0xff] %vm348, %v337
      %371 = vst.msk [vmem:[%s172 + $0xb0] sm:$0xff] %vm348, %v338
      %372 = vst.msk [vmem:[%s172 + $0xb8] sm:$0xff] %vm348, %v339
      %373 = vst.msk [vmem:[%s172 + $0xc0] sm:$0xff] %vm348, %v340
      %374 = vst.msk [vmem:[%s172 + $0xc8] sm:$0xff] %vm348, %v341
      %375 = vst.msk [vmem:[%s172 + $0xd0] sm:$0xff] %vm348, %v342
      %376 = vst.msk [vmem:[%s172 + $0xd8] sm:$0xff] %vm348, %v343
      %377 = vst.msk [vmem:[%s172 + $0xe0] sm:$0xff] %vm348, %v344
      %378 = vst.msk [vmem:[%s172 + $0xe8] sm:$0xff] %vm348, %v345
      %379 = vst.msk [vmem:[%s172 + $0xf0] sm:$0xff] %vm348, %v346
      %380 = vst.msk [vmem:[%s172 + $0xf8] sm:$0xff] %vm348, %v347
      %s381 = smul.u32 32, %s14
      %p382 = scmp.lt.s32.totalorder %s381, 63
      %s383 = scalar_select %p382, %s381, 63
      %s384 = smul.addr %s383, 8
      %s385 = scalar_lea.vmem %s3, %s384
      // Predicated region
      $region33: #{decoder_forward.7} parent=31 // pred_check
        %p386 = pneg %p100
      $region34: #{decoder_forward.7} parent=31 // pred_check_branch
        %388 = sbr.rel (%p386) target = $region36
      $region35: #{decoder_forward.7} parent=31 // pred_region
        %s389 = smul.u32 32, %s14
      $region36: #{decoder_forward.7} parent=31 // pred_fallthru
        _
    $region32: #{decoder_forward.7} parent=5 // pred_fallthru
      _
    %p390 = scmp.le.s32.totalorder 2, %s9
    // Predicated region
    $region37: #{decoder_forward.7} parent=5 // pred_check
      %p391 = pneg %p390
    $region38: #{decoder_forward.7} parent=5 // pred_check_branch
      %393 = sbr.rel (%p391) target = $region40
    $region39: #{decoder_forward.7} parent=5 // pred_region
      %s394 = ssub.s32 %s9, 2
      // Predicated region
      $region41: #{decoder_forward.7} parent=39 // pred_check
        %p395 = pneg %p106
      $region42: #{decoder_forward.7} parent=39 // pred_check_branch
        %397 = sbr.rel (%p395) target = $region44
      $region43: #{decoder_forward.7} parent=39 // pred_region
        %s398 = smul.u32 32, %s15
        %p399 = scmp.lt.s32.totalorder %s398, 63
        %s400 = scalar_select %p399, %s398, 63
        %s401 = smul.addr %s400, 8
        %s402 = scalar_lea.vmem %s3, %s401
      $region44: #{decoder_forward.7} parent=39 // pred_fallthru
        _
    $region40: #{decoder_forward.7} parent=5 // pred_fallthru
      _
  $region6: #{decoder_forward.7} parent=0 // loop_footer
    %s13 = sadd.s32 1, %s9
  $region7: #{decoder_forward.7} parent=0 // loop_footer_branch
    %8 = sbr.rel target = $region3
  $region8: #{decoder_forward.7} parent=0 // loop_exit
    _

// kernel: decoder_forward.6
$region0: #{decoder_forward.6}
  #allocation0 [shape = 'u32[]', space=smem, size = 0x4, offset = 0x4, fixed_abs, tag = 'smem constant byte address 0x4 - core index']
  #allocation1 [shape = 'u32[144,128]{1,0:T(1,128)}', space=vmem, size = 0x12000, scoped, tag = 'internal scratch']
  %s0 = inlined_call_operand.vmem [shape: bf16[512,128], index: 0, kind: input, shape index: {}]
  %s1 = inlined_call_operand.vmem [shape: bf16[128,128], index: 1, kind: input, shape index: {}]
  %s2 = inlined_call_operand.vmem [shape: f32[1,128], index: 2, kind: input, shape index: {}]
  %s3 = inlined_call_operand.vmem [shape: f32[1,128], index: 3, kind: input, shape index: {}]
  %s4 = inlined_call_operand.vmem [shape: bf16[512,128], index: 4, kind: output, shape index: {0}]
  %s5 = inlined_call_operand.vmem [shape: f32[2,2,128], index: 5, kind: output, shape index: {1}]
  %6 = xla_tuple %s4, %s5
  %s7 = sld [smem:[#allocation0]]
  $region57: #{decoder_forward.6} parent=0
    _
  %s9 = ssub.s32 1, %s7
  %s10 = scalar_select 0, %s9, %s7
  loop: start=0, step=1, limit=4
  $region2: #{decoder_forward.6} parent=0 // loop_pre_header
    _
  $region3: #{decoder_forward.6} parent=0 // loop_header
    %s12 = sphi 0, %s16
    %p13 = scmp.ge.s32.totalorder %s12, 4
    %s22 = sphi 0, %s24
    %s25 = sphi 0, %s22
    %s26 = sphi 0, %s25
    %s42 = sphi 0, %s26
    %s46 = sphi 0, %s46
    %s48 = sphi 0, %s46
    %s49 = sphi 0, %s48
    %s63 = sphi 0, %s49
    %s67 = sphi 0, %s67
    %s69 = sphi 0, %s67
    %s70 = sphi 0, %s69
    %s84 = sphi 0, %s70
    %s88 = sphi 0, %s88
    %s90 = sphi 0, %s88
    %s91 = sphi 0, %s90
    %s105 = sphi 0, %s91
    %s111 = sphi 0, %s113
    %s114 = sphi 0, %s111
    %s115 = sphi 0, %s114
    %s131 = sphi 0, %s115
    %s137 = sphi 0, %s139
    %s140 = sphi 0, %s137
    %s141 = sphi 0, %s140
    %s157 = sphi 0, %s141
  $region4: #{decoder_forward.6} parent=0 // loop_header_branch
    %15 = sbr.rel (%p13) target = $region8
  $region5: #{decoder_forward.6} parent=0 // loop_body
    %s17 = ssub.s32 %s12, 1
    %s18 = ssub.s32 %s12, 2
    %s19 = sadd.s32 %s12, 1
    %s20 = ssub.s32 %s12, %s19
    %p21 = scmp.eq.s32.totalorder %s20, 0
    %s23 = sadd.s32 %s22, 1
    %s24 = scalar_select %p21, %s22, %s23
    %p27 = pneg %p21
    %p28 = scmp.eq.s32.totalorder %s12, 1
    %p29 = por %p27, %p28
    %p30 = scmp.ne.s32.totalorder %s22, %s25
    %p31 = scmp.eq.s32.totalorder %s12, 0
    %p32 = por %p30, %p31
    %p33 = scmp.ne.s32.totalorder %s22, %s25
    %p34 = scmp.eq.s32.totalorder %s17, 1
    %p35 = por %p33, %p34
    %p36 = scmp.ne.s32.totalorder %s25, %s26
    %p37 = scmp.eq.s32.totalorder %s17, 0
    %p38 = por %p36, %p37
    %p39 = scmp.ne.s32.totalorder %s25, %s26
    %p40 = scmp.eq.s32.totalorder %s18, 1
    %p41 = por %p39, %p40
    %p43 = scmp.ne.s32.totalorder %s26, %s42
    %p44 = scmp.eq.s32.totalorder %s18, 0
    %p45 = por %p43, %p44
    %s47 = sadd.s32 %s46, 1
    %p50 = scmp.eq.s32.totalorder %s12, 1
    %p51 = scmp.ne.s32.totalorder %s46, %s48
    %p52 = scmp.eq.s32.totalorder %s12, 0
    %p53 = por %p51, %p52
    %p54 = scmp.ne.s32.totalorder %s46, %s48
    %p55 = scmp.eq.s32.totalorder %s17, 1
    %p56 = por %p54, %p55
    %p57 = scmp.ne.s32.totalorder %s48, %s49
    %p58 = scmp.eq.s32.totalorder %s17, 0
    %p59 = por %p57, %p58
    %p60 = scmp.ne.s32.totalorder %s48, %s49
    %p61 = scmp.eq.s32.totalorder %s18, 1
    %p62 = por %p60, %p61
    %p64 = scmp.ne.s32.totalorder %s49, %s63
    %p65 = scmp.eq.s32.totalorder %s18, 0
    %p66 = por %p64, %p65
    %s68 = sadd.s32 %s67, 1
    %p71 = scmp.eq.s32.totalorder %s12, 1
    %p72 = scmp.ne.s32.totalorder %s67, %s69
    %p73 = scmp.eq.s32.totalorder %s12, 0
    %p74 = por %p72, %p73
    %p75 = scmp.ne.s32.totalorder %s67, %s69
    %p76 = scmp.eq.s32.totalorder %s17, 1
    %p77 = por %p75, %p76
    %p78 = scmp.ne.s32.totalorder %s69, %s70
    %p79 = scmp.eq.s32.totalorder %s17, 0
    %p80 = por %p78, %p79
    %p81 = scmp.ne.s32.totalorder %s69, %s70
    %p82 = scmp.eq.s32.totalorder %s18, 1
    %p83 = por %p81, %p82
    %p85 = scmp.ne.s32.totalorder %s70, %s84
    %p86 = scmp.eq.s32.totalorder %s18, 0
    %p87 = por %p85, %p86
    %s89 = sadd.s32 %s88, 1
    %p92 = scmp.eq.s32.totalorder %s12, 1
    %p93 = scmp.ne.s32.totalorder %s88, %s90
    %p94 = scmp.eq.s32.totalorder %s12, 0
    %p95 = por %p93, %p94
    %p96 = scmp.ne.s32.totalorder %s88, %s90
    %p97 = scmp.eq.s32.totalorder %s17, 1
    %p98 = por %p96, %p97
    %p99 = scmp.ne.s32.totalorder %s90, %s91
    %p100 = scmp.eq.s32.totalorder %s17, 0
    %p101 = por %p99, %p100
    %p102 = scmp.ne.s32.totalorder %s90, %s91
    %p103 = scmp.eq.s32.totalorder %s18, 1
    %p104 = por %p102, %p103
    %p106 = scmp.ne.s32.totalorder %s91, %s105
    %p107 = scmp.eq.s32.totalorder %s18, 0
    %p108 = por %p106, %p107
    %s109 = ssub.s32 %s12, %s19
    %p110 = scmp.eq.s32.totalorder %s109, 0
    %s112 = sadd.s32 %s111, 1
    %s113 = scalar_select %p110, %s111, %s112
    %p116 = pneg %p110
    %p117 = scmp.eq.s32.totalorder %s12, 1
    %p118 = por %p116, %p117
    %p119 = scmp.ne.s32.totalorder %s111, %s114
    %p120 = scmp.eq.s32.totalorder %s12, 0
    %p121 = por %p119, %p120
    %p122 = scmp.ne.s32.totalorder %s111, %s114
    %p123 = scmp.eq.s32.totalorder %s17, 1
    %p124 = por %p122, %p123
    %p125 = scmp.ne.s32.totalorder %s114, %s115
    %p126 = scmp.eq.s32.totalorder %s17, 0
    %p127 = por %p125, %p126
    %p128 = scmp.ne.s32.totalorder %s114, %s115
    %p129 = scmp.eq.s32.totalorder %s18, 1
    %p130 = por %p128, %p129
    %p132 = scmp.ne.s32.totalorder %s115, %s131
    %p133 = scmp.eq.s32.totalorder %s18, 0
    %p134 = por %p132, %p133
    %s135 = ssub.s32 %s12, %s19
    %p136 = scmp.eq.s32.totalorder %s135, 0
    %s138 = sadd.s32 %s137, 1
    %s139 = scalar_select %p136, %s137, %s138
    %p142 = pneg %p136
    %p143 = scmp.eq.s32.totalorder %s12, 1
    %p144 = por %p142, %p143
    %p145 = scmp.ne.s32.totalorder %s137, %s140
    %p146 = scmp.eq.s32.totalorder %s12, 0
    %p147 = por %p145, %p146
    %p148 = scmp.ne.s32.totalorder %s137, %s140
    %p149 = scmp.eq.s32.totalorder %s17, 1
    %p150 = por %p148, %p149
    %p151 = scmp.ne.s32.totalorder %s140, %s141
    %p152 = scmp.eq.s32.totalorder %s17, 0
    %p153 = por %p151, %p152
    %p154 = scmp.ne.s32.totalorder %s140, %s141
    %p155 = scmp.eq.s32.totalorder %s18, 1
    %p156 = por %p154, %p155
    %p158 = scmp.ne.s32.totalorder %s141, %s157
    %p159 = scmp.eq.s32.totalorder %s18, 0
    %p160 = por %p158, %p159
    %p161 = scmp.le.s32.totalorder 1, %s12
    %p162 = scmp.lt.s32.totalorder %s12, 3
    %p163 = pnand %p161, %p162
    %p164 = pneg %p163
    // Predicated region
    $region9: #{decoder_forward.6} parent=5 // pred_check
      _
    $region10: #{decoder_forward.6} parent=5 // pred_check_branch
      %166 = sbr.rel (%p163) target = $region12
    $region11: #{decoder_forward.6} parent=5 // pred_region
      %s167 = ssub.s32 %s12, 1
      // Predicated region
      $region13: #{decoder_forward.6} parent=11 // pred_check
        %p168 = pneg %p59
      $region14: #{decoder_forward.6} parent=11 // pred_check_branch
        %170 = sbr.rel (%p168) target = $region16
      $region15: #{decoder_forward.6} parent=11 // pred_region
        _
      $region16: #{decoder_forward.6} parent=11 // pred_fallthru
        _
      // Predicated region
      $region17: #{decoder_forward.6} parent=11 // pred_check
        %p171 = pneg %p80
      $region18: #{decoder_forward.6} parent=11 // pred_check_branch
        %173 = sbr.rel (%p171) target = $region20
      $region19: #{decoder_forward.6} parent=11 // pred_region
        _
      $region20: #{decoder_forward.6} parent=11 // pred_fallthru
        _
      // Predicated region
      $region21: #{decoder_forward.6} parent=11 // pred_check
        %p174 = pneg %p101
      $region22: #{decoder_forward.6} parent=11 // pred_check_branch
        %176 = sbr.rel (%p174) target = $region24
      $region23: #{decoder_forward.6} parent=11 // pred_region
        _
      $region24: #{decoder_forward.6} parent=11 // pred_fallthru
        _
    $region12: #{decoder_forward.6} parent=5 // pred_fallthru
      _
    %p177 = scmp.lt.s32.totalorder %s12, 2
    // Predicated region
    $region25: #{decoder_forward.6} parent=5 // pred_check
      %p178 = pneg %p177
    $region26: #{decoder_forward.6} parent=5 // pred_check_branch
      %180 = sbr.rel (%p178) target = $region28
    $region27: #{decoder_forward.6} parent=5 // pred_region
      // Predicated region
      $region29: #{decoder_forward.6} parent=27 // pred_check
        %p181 = pneg %p32
      $region30: #{decoder_forward.6} parent=27 // pred_check_branch
        %183 = sbr.rel (%p181) target = $region32
      $region31: #{decoder_forward.6} parent=27 // pred_region
        %s184 = smul.u32 32, %s12
        %p185 = scmp.lt.s32.totalorder %s184, 63
        %s186 = scalar_select %p185, %s184, 63
        %s187 = smul.addr %s186, 4
        %s188 = scalar_lea.vmem %s0, %s187
        %s189 = smul.u32 32, %s12
      $region32: #{decoder_forward.6} parent=27 // pred_fallthru
        _
    $region28: #{decoder_forward.6} parent=5 // pred_fallthru
      _
    %p190 = scmp.le.s32.totalorder 1, %s12
    %p191 = scmp.lt.s32.totalorder %s12, 3
    %p192 = pnand %p190, %p191
    %p193 = pneg %p192
    // Predicated region
    $region33: #{decoder_forward.6} parent=5 // pred_check
      _
    $region34: #{decoder_forward.6} parent=5 // pred_check_branch
      %195 = sbr.rel (%p192) target = $region36
    $region35: #{decoder_forward.6} parent=5 // pred_region
      %s196 = ssub.s32 %s12, 1
      %s197 = smul.u32 32, %s17
      %p198 = scmp.lt.s32.totalorder %s197, 63
      %s199 = scalar_select %p198, %s197, 63
      %s200 = smul.addr %s199, 4
      %s201 = scalar_lea.vmem %s0, %s200
      %p202 = pneg %p38
      %p203 = pneg %p35
      %p204 = pneg %p59
      %p205 = pneg %p56
      %p206 = pneg %p80
      %p207 = pneg %p77
      %p208 = pneg %p101
      %p209 = pneg %p98
      %p210 = pneg %p127
      %p211 = pneg %p124
      %s212 = smul.u32 32, %s17
      %p213 = scmp.lt.s32.totalorder %s212, 63
      %s214 = scalar_select %p213, %s212, 63
      %s215 = smul.addr %s214, 4
      %s216 = scalar_lea.vmem %s4, %s215
      %p217 = pneg %p153
      %p218 = pneg %p150
      %p219 = scmp.lt.s32.totalorder %s17, 1
      %s220 = scalar_select %p219, %s17, 1
      %s221 = smul.addr %s220, 2
      %s222 = scalar_lea.vmem %s5, %s221
      %s223 = smul.u32 32, %s17
      %p224 = scmp.lt.s32.totalorder %s223, 63
      %s225 = scalar_select %p224, %s223, 63
      %s226 = smul.addr %s225, 4
      %s227 = scalar_lea.vmem %s0, %s226
      %s228 = smul.u32 32, %s17
      %s229 = smul.u32 32, %s17
      %p230 = scmp.lt.s32.totalorder %s229, 63
      %s231 = scalar_select %p230, %s229, 63
      %s232 = smul.addr %s231, 4
      %s233 = scalar_lea.vmem %s4, %s232
      %s234 = smul.u32 32, %s17
      %p235 = scmp.lt.s32.totalorder %s17, 1
      %s236 = scalar_select %p235, %s17, 1
      %s237 = smul.addr %s236, 2
      %s238 = scalar_lea.vmem %s5, %s237
      %v240 = vld [vmem:[%s227] sm:$0xf]
      %v241 = vld [vmem:[%s227 + $0x4] sm:$0xf]
      %v242 = vld [vmem:[%s227 + $0x8] sm:$0xf]
      %v243 = vld [vmem:[%s227 + $0xc] sm:$0xf]
      %v244 = vld [vmem:[%s227 + $0x10] sm:$0xf]
      %v245 = vld [vmem:[%s227 + $0x14] sm:$0xf]
      %v246 = vld [vmem:[%s227 + $0x18] sm:$0xf]
      %v247 = vld [vmem:[%s227 + $0x1c] sm:$0xf]
      %v248 = vld [vmem:[%s227 + $0x20] sm:$0xf]
      %v249 = vld [vmem:[%s227 + $0x24] sm:$0xf]
      %v250 = vld [vmem:[%s227 + $0x28] sm:$0xf]
      %v251 = vld [vmem:[%s227 + $0x2c] sm:$0xf]
      %v252 = vld [vmem:[%s227 + $0x30] sm:$0xf]
      %v253 = vld [vmem:[%s227 + $0x34] sm:$0xf]
      %v254 = vld [vmem:[%s227 + $0x38] sm:$0xf]
      %v255 = vld [vmem:[%s227 + $0x3c] sm:$0xf]
      %v256 = vld [vmem:[%s227 + $0x40] sm:$0xf]
      %v257 = vld [vmem:[%s227 + $0x44] sm:$0xf]
      %v258 = vld [vmem:[%s227 + $0x48] sm:$0xf]
      %v259 = vld [vmem:[%s227 + $0x4c] sm:$0xf]
      %v260 = vld [vmem:[%s227 + $0x50] sm:$0xf]
      %v261 = vld [vmem:[%s227 + $0x54] sm:$0xf]
      %v262 = vld [vmem:[%s227 + $0x58] sm:$0xf]
      %v263 = vld [vmem:[%s227 + $0x5c] sm:$0xf]
      %v264 = vld [vmem:[%s227 + $0x60] sm:$0xf]
      %v265 = vld [vmem:[%s227 + $0x64] sm:$0xf]
      %v266 = vld [vmem:[%s227 + $0x68] sm:$0xf]
      %v267 = vld [vmem:[%s227 + $0x6c] sm:$0xf]
      %v268 = vld [vmem:[%s227 + $0x70] sm:$0xf]
      %v269 = vld [vmem:[%s227 + $0x74] sm:$0xf]
      %v270 = vld [vmem:[%s227 + $0x78] sm:$0xf]
      %v271 = vld [vmem:[%s227 + $0x7c] sm:$0xf]
      %v272 = vunpack.c.l.bf16 %v240
      %v273 = vunpack.c.l.bf16 %v241
      %v274 = vunpack.c.l.bf16 %v242
      %v275 = vunpack.c.l.bf16 %v243
      %v276 = vunpack.c.l.bf16 %v244
      %v277 = vunpack.c.l.bf16 %v245
      %v278 = vunpack.c.l.bf16 %v246
      %v279 = vunpack.c.l.bf16 %v247
      %v280 = vunpack.c.l.bf16 %v248
      %v281 = vunpack.c.l.bf16 %v249
      %v282 = vunpack.c.l.bf16 %v250
      %v283 = vunpack.c.l.bf16 %v251
      %v284 = vunpack.c.l.bf16 %v252
      %v285 = vunpack.c.l.bf16 %v253
      %v286 = vunpack.c.l.bf16 %v254
      %v287 = vunpack.c.l.bf16 %v255
      %v288 = vunpack.c.l.bf16 %v256
      %v289 = vunpack.c.l.bf16 %v257
      %v290 = vunpack.c.l.bf16 %v258
      %v291 = vunpack.c.l.bf16 %v259
      %v292 = vunpack.c.l.bf16 %v260
      %v293 = vunpack.c.l.bf16 %v261
      %v294 = vunpack.c.l.bf16 %v262
      %v295 = vunpack.c.l.bf16 %v263
      %v296 = vunpack.c.l.bf16 %v264
      %v297 = vunpack.c.l.bf16 %v265
      %v298 = vunpack.c.l.bf16 %v266
      %v299 = vunpack.c.l.bf16 %v267
      %v300 = vunpack.c.l.bf16 %v268
      %v301 = vunpack.c.l.bf16 %v269
      %v302 = vunpack.c.l.bf16 %v270
      %v303 = vunpack.c.l.bf16 %v271
      %v304 = vld [vmem:[%s2] sm:$0x1]
      %v306 = vlaneseq
      %v307 = vshrl.u32 %v306, 7
      %v308 = vsub.s32 0, %v307
      %v309 = vrot.slane %v304, %v308
      %v311 = vmul.f32 %v272, %v309
      %v312 = vmul.f32 %v273, %v309
      %v313 = vmul.f32 %v274, %v309
      %v314 = vmul.f32 %v275, %v309
      %v315 = vmul.f32 %v276, %v309
      %v316 = vmul.f32 %v277, %v309
      %v317 = vmul.f32 %v278, %v309
      %v318 = vmul.f32 %v279, %v309
      %v319 = vmul.f32 %v280, %v309
      %v320 = vmul.f32 %v281, %v309
      %v321 = vmul.f32 %v282, %v309
      %v322 = vmul.f32 %v283, %v309
      %v323 = vmul.f32 %v284, %v309
      %v324 = vmul.f32 %v285, %v309
      %v325 = vmul.f32 %v286, %v309
      %v326 = vmul.f32 %v287, %v309
      %v327 = vmul.f32 %v288, %v309
      %v328 = vmul.f32 %v289, %v309
      %v329 = vmul.f32 %v290, %v309
      %v330 = vmul.f32 %v291, %v309
      %v331 = vmul.f32 %v292, %v309
      %v332 = vmul.f32 %v293, %v309
      %v333 = vmul.f32 %v294, %v309
      %v334 = vmul.f32 %v295, %v309
      %v335 = vmul.f32 %v296, %v309
      %v336 = vmul.f32 %v297, %v309
      %v337 = vmul.f32 %v298, %v309
      %v338 = vmul.f32 %v299, %v309
      %v339 = vmul.f32 %v300, %v309
      %v340 = vmul.f32 %v301, %v309
      %v341 = vmul.f32 %v302, %v309
      %v342 = vmul.f32 %v303, %v309
      %v343 = vld [vmem:[%s3] sm:$0x1]
      %v345 = vlaneseq
      %v346 = vshrl.u32 %v345, 7
      %v347 = vsub.s32 0, %v346
      %v348 = vrot.slane %v343, %v347
      %v350 = vadd.f32 %v311, %v348
      %v351 = vadd.f32 %v312, %v348
      %v352 = vadd.f32 %v313, %v348
      %v353 = vadd.f32 %v314, %v348
      %v354 = vadd.f32 %v315, %v348
      %v355 = vadd.f32 %v316, %v348
      %v356 = vadd.f32 %v317, %v348
      %v357 = vadd.f32 %v318, %v348
      %v358 = vadd.f32 %v319, %v348
      %v359 = vadd.f32 %v320, %v348
      %v360 = vadd.f32 %v321, %v348
      %v361 = vadd.f32 %v322, %v348
      %v362 = vadd.f32 %v323, %v348
      %v363 = vadd.f32 %v324, %v348
      %v364 = vadd.f32 %v325, %v348
      %v365 = vadd.f32 %v326, %v348
      %v366 = vadd.f32 %v327, %v348
      %v367 = vadd.f32 %v328, %v348
      %v368 = vadd.f32 %v329, %v348
      %v369 = vadd.f32 %v330, %v348
      %v370 = vadd.f32 %v331, %v348
      %v371 = vadd.f32 %v332, %v348
      %v372 = vadd.f32 %v333, %v348
      %v373 = vadd.f32 %v334, %v348
      %v374 = vadd.f32 %v335, %v348
      %v375 = vadd.f32 %v336, %v348
      %v376 = vadd.f32 %v337, %v348
      %v377 = vadd.f32 %v338, %v348
      %v378 = vadd.f32 %v339, %v348
      %v379 = vadd.f32 %v340, %v348
      %v380 = vadd.f32 %v341, %v348
      %v381 = vadd.f32 %v342, %v348
      %v382 = vmax.f32 %v350, 0.0
      %v383 = vmax.f32 %v351, 0.0
      %v384 = vmax.f32 %v352, 0.0
      %v385 = vmax.f32 %v353, 0.0
      %v386 = vmax.f32 %v354, 0.0
      %v387 = vmax.f32 %v355, 0.0
      %v388 = vmax.f32 %v356, 0.0
      %v389 = vmax.f32 %v357, 0.0
      %v390 = vmax.f32 %v358, 0.0
      %v391 = vmax.f32 %v359, 0.0
      %v392 = vmax.f32 %v360, 0.0
      %v393 = vmax.f32 %v361, 0.0
      %v394 = vmax.f32 %v362, 0.0
      %v395 = vmax.f32 %v363, 0.0
      %v396 = vmax.f32 %v364, 0.0
      %v397 = vmax.f32 %v365, 0.0
      %v398 = vmax.f32 %v366, 0.0
      %v399 = vmax.f32 %v367, 0.0
      %v400 = vmax.f32 %v368, 0.0
      %v401 = vmax.f32 %v369, 0.0
      %v402 = vmax.f32 %v370, 0.0
      %v403 = vmax.f32 %v371, 0.0
      %v404 = vmax.f32 %v372, 0.0
      %v405 = vmax.f32 %v373, 0.0
      %v406 = vmax.f32 %v374, 0.0
      %v407 = vmax.f32 %v375, 0.0
      %v408 = vmax.f32 %v376, 0.0
      %v409 = vmax.f32 %v377, 0.0
      %v410 = vmax.f32 %v378, 0.0
      %v411 = vmax.f32 %v379, 0.0
      %v412 = vmax.f32 %v380, 0.0
      %v413 = vmax.f32 %v381, 0.0
      %v414 = vpack.c.bf16 %v383, %v382
      %v415 = vpack.c.bf16 %v385, %v384
      %v416 = vpack.c.bf16 %v387, %v386
      %v417 = vpack.c.bf16 %v389, %v388
      %v418 = vpack.c.bf16 %v391, %v390
      %v419 = vpack.c.bf16 %v393, %v392
      %v420 = vpack.c.bf16 %v395, %v394
      %v421 = vpack.c.bf16 %v397, %v396
      %v422 = vpack.c.bf16 %v399, %v398
      %v423 = vpack.c.bf16 %v401, %v400
      %v424 = vpack.c.bf16 %v403, %v402
      %v425 = vpack.c.bf16 %v405, %v404
      %v426 = vpack.c.bf16 %v407, %v406
      %v427 = vpack.c.bf16 %v409, %v408
      %v428 = vpack.c.bf16 %v411, %v410
      %v429 = vpack.c.bf16 %v413, %v412
      %v430 = vld [vmem:[%s1] sm:$0xf]
      %v431 = vld [vmem:[%s1 + $0x4] sm:$0xf]
      %v432 = vld [vmem:[%s1 + $0x8] sm:$0xf]
      %v433 = vld [vmem:[%s1 + $0xc] sm:$0xf]
      %v434 = vld [vmem:[%s1 + $0x10] sm:$0xf]
      %v435 = vld [vmem:[%s1 + $0x14] sm:$0xf]
      %v436 = vld [vmem:[%s1 + $0x18] sm:$0xf]
      %v437 = vld [vmem:[%s1 + $0x1c] sm:$0xf]
      %v438 = vld [vmem:[%s1 + $0x20] sm:$0xf]
      %v439 = vld [vmem:[%s1 + $0x24] sm:$0xf]
      %v440 = vld [vmem:[%s1 + $0x28] sm:$0xf]
      %v441 = vld [vmem:[%s1 + $0x2c] sm:$0xf]
      %v442 = vld [vmem:[%s1 + $0x30] sm:$0xf]
      %v443 = vld [vmem:[%s1 + $0x34] sm:$0xf]
      %v444 = vld [vmem:[%s1 + $0x38] sm:$0xf]
      %v445 = vld [vmem:[%s1 + $0x3c] sm:$0xf]
      %v462 = vunpack.c.l.b16 %v430
      %v463 = vunpack.c.l.b16 %v431
      %v464 = vunpack.c.l.b16 %v432
      %v465 = vunpack.c.l.b16 %v433
      %v466 = vunpack.c.l.b16 %v434
      %v467 = vunpack.c.l.b16 %v435
      %v468 = vunpack.c.l.b16 %v436
      %v469 = vunpack.c.l.b16 %v437
      %v470 = vunpack.c.l.b16 %v438
      %v471 = vunpack.c.l.b16 %v439
      %v472 = vunpack.c.l.b16 %v440
      %v473 = vunpack.c.l.b16 %v441
      %v474 = vunpack.c.l.b16 %v442
      %v475 = vunpack.c.l.b16 %v443
      %v476 = vunpack.c.l.b16 %v444
      %v477 = vunpack.c.l.b16 %v445
      %v478 = vpack.c.b16 %v463, %v462
      %v479 = vpack.c.b16 %v465, %v464
      %v480 = vpack.c.b16 %v467, %v466
      %v481 = vpack.c.b16 %v469, %v468
      %v482 = vpack.c.b16 %v471, %v470
      %v483 = vpack.c.b16 %v473, %v472
      %v484 = vpack.c.b16 %v475, %v474
      %v485 = vpack.c.b16 %v477, %v476
      %494 = vmatprep.subr.bf16.mxu0 0
      %495 = vmatpush1.bf16.msra.mxu0 %v478
      %496 = vmatprep.subr.bf16.mxu0 0
      %497 = vmatpush1.bf16.msra.mxu0 %v479
      %498 = vmatprep.subr.bf16.mxu0 0
      %499 = vmatpush1.bf16.msra.mxu0 %v480
      %500 = vmatprep.subr.bf16.mxu0 0
      %501 = vmatpush1.bf16.msra.mxu0 %v481
      %502 = vmatprep.subr.bf16.mxu0 0
      %503 = vmatpush1.bf16.msra.mxu0 %v482
      %504 = vmatprep.subr.bf16.mxu0 0
      %505 = vmatpush1.bf16.msra.mxu0 %v483
      %506 = vmatprep.subr.bf16.mxu0 0
      %507 = vmatpush1.bf16.msra.mxu0 %v484
      %508 = vmatprep.subr.bf16.mxu0 0
      %509 = vmatpush1.bf16.msra.mxu0 %v485
      %510 = vmatprep.subr.bf16.mxu0 0
      %511 = vmatpush1.bf16.msra.mxu0 0
      %512 = vmatprep.subr.bf16.mxu0 0
      %513 = vmatpush1.bf16.msra.mxu0 0
      %514 = vmatprep.subr.bf16.mxu0 0
      %515 = vmatpush1.bf16.msra.mxu0 0
      %516 = vmatprep.subr.bf16.mxu0 0
      %517 = vmatpush1.bf16.msra.mxu0 0
      %518 = vmatprep.subr.bf16.mxu0 0
      %519 = vmatpush1.bf16.msra.mxu0 0
      %520 = vmatprep.subr.bf16.mxu0 0
      %521 = vmatpush1.bf16.msra.mxu0 0
      %522 = vmatprep.subr.bf16.mxu0 0
      %523 = vmatpush1.bf16.msra.mxu0 0
      %524 = vmatprep.subr.bf16.mxu0 0
      %525 = vmatpush1.bf16.msra.mxu0 0
      %526 = vmatprep.mubr.bf16.mxu0 0
      %527 = vmatmul.mubr.bf16.gmra.mrb[0].mxu0 %v414
      %v528 = vpop.f32.mrb[0].mxu0
      %v529 = vadd.f32 0.0, %v528
      %v530 = vpop.f32.mrb[0].mxu0
      %v531 = vpop.f32.mrb[0].mxu0
      %v532 = vadd.f32 0.0, %v531
      %v533 = vpop.f32.mrb[0].mxu0
      %534 = vmatprep.mubr.bf16.mxu0 0
      %535 = vmatmul.mubr.bf16.gmra.mrb[0].mxu0 %v415
      %v536 = vpop.f32.mrb[0].mxu0
      %v537 = vadd.f32 0.0, %v536
      %v538 = vpop.f32.mrb[0].mxu0
      %v539 = vpop.f32.mrb[0].mxu0
      %v540 = vadd.f32 0.0, %v539
      %v541 = vpop.f32.mrb[0].mxu0
      %542 = vmatprep.mubr.bf16.mxu0 0
      %543 = vmatmul.mubr.bf16.gmra.mrb[0].mxu0 %v416
      %v544 = vpop.f32.mrb[0].mxu0
      %v545 = vadd.f32 0.0, %v544
      %v546 = vpop.f32.mrb[0].mxu0
      %v547 = vpop.f32.mrb[0].mxu0
      %v548 = vadd.f32 0.0, %v547
      %v549 = vpop.f32.mrb[0].mxu0
      %550 = vmatprep.mubr.bf16.mxu0 0
      %551 = vmatmul.mubr.bf16.gmra.mrb[0].mxu0 %v417
      %v552 = vpop.f32.mrb[0].mxu0
      %v553 = vadd.f32 0.0, %v552
      %v554 = vpop.f32.mrb[0].mxu0
      %v555 = vpop.f32.mrb[0].mxu0
      %v556 = vadd.f32 0.0, %v555
      %v557 = vpop.f32.mrb[0].mxu0
      %558 = vmatprep.mubr.bf16.mxu0 0
      %559 = vmatmul.mubr.bf16.gmra.mrb[0].mxu0 %v418
      %v560 = vpop.f32.mrb[0].mxu0
      %v561 = vadd.f32 0.0, %v560
      %v562 = vpop.f32.mrb[0].mxu0
      %v563 = vpop.f32.mrb[0].mxu0
      %v564 = vadd.f32 0.0, %v563
      %v565 = vpop.f32.mrb[0].mxu0
      %566 = vmatprep.mubr.bf16.mxu0 0
      %567 = vmatmul.mubr.bf16.gmra.mrb[0].mxu0 %v419
      %v568 = vpop.f32.mrb[0].mxu0
      %v569 = vadd.f32 0.0, %v568
      %v570 = vpop.f32.mrb[0].mxu0
      %v571 = vpop.f32.mrb[0].mxu0
      %v572 = vadd.f32 0.0, %v571
      %v573 = vpop.f32.mrb[0].mxu0
      %574 = vmatprep.mubr.bf16.mxu0 0
      %575 = vmatmul.mubr.bf16.gmra.mrb[0].mxu0 %v420
      %v576 = vpop.f32.mrb[0].mxu0
      %v577 = vadd.f32 0.0, %v576
      %v578 = vpop.f32.mrb[0].mxu0
      %v579 = vpop.f32.mrb[0].mxu0
      %v580 = vadd.f32 0.0, %v579
      %v581 = vpop.f32.mrb[0].mxu0
      %582 = vmatprep.mubr.bf16.mxu0 0
      %583 = vmatmul.mubr.bf16.gmra.mrb[0].mxu0 %v421
      %v584 = vpop.f32.mrb[0].mxu0
      %v585 = vadd.f32 0.0, %v584
      %v586 = vpop.f32.mrb[0].mxu0
      %v587 = vpop.f32.mrb[0].mxu0
      %v588 = vadd.f32 0.0, %v587
      %v589 = vpop.f32.mrb[0].mxu0
      %590 = vmatprep.mubr.bf16.mxu0 0
      %591 = vmatmul.mubr.bf16.gmra.mrb[0].mxu0 %v422
      %v592 = vpop.f32.mrb[0].mxu0
      %v593 = vadd.f32 0.0, %v592
      %v594 = vpop.f32.mrb[0].mxu0
      %v595 = vpop.f32.mrb[0].mxu0
      %v596 = vadd.f32 0.0, %v595
      %v597 = vpop.f32.mrb[0].mxu0
      %598 = vmatprep.mubr.bf16.mxu0 0
      %599 = vmatmul.mubr.bf16.gmra.mrb[0].mxu0 %v423
      %v600 = vpop.f32.mrb[0].mxu0
      %v601 = vadd.f32 0.0, %v600
      %v602 = vpop.f32.mrb[0].mxu0
      %v603 = vpop.f32.mrb[0].mxu0
      %v604 = vadd.f32 0.0, %v603
      %v605 = vpop.f32.mrb[0].mxu0
      %606 = vmatprep.mubr.bf16.mxu0 0
      %607 = vmatmul.mubr.bf16.gmra.mrb[0].mxu0 %v424
      %v608 = vpop.f32.mrb[0].mxu0
      %v609 = vadd.f32 0.0, %v608
      %v610 = vpop.f32.mrb[0].mxu0
      %v611 = vpop.f32.mrb[0].mxu0
      %v612 = vadd.f32 0.0, %v611
      %v613 = vpop.f32.mrb[0].mxu0
      %614 = vmatprep.mubr.bf16.mxu0 0
      %615 = vmatmul.mubr.bf16.gmra.mrb[0].mxu0 %v425
      %v616 = vpop.f32.mrb[0].mxu0
      %v617 = vadd.f32 0.0, %v616
      %v618 = vpop.f32.mrb[0].mxu0
      %v619 = vpop.f32.mrb[0].mxu0
      %v620 = vadd.f32 0.0, %v619
      %v621 = vpop.f32.mrb[0].mxu0
      %622 = vmatprep.mubr.bf16.mxu0 0
      %623 = vmatmul.mubr.bf16.gmra.mrb[0].mxu0 %v426
      %v624 = vpop.f32.mrb[0].mxu0
      %v625 = vadd.f32 0.0, %v624
      %v626 = vpop.f32.mrb[0].mxu0
      %v627 = vpop.f32.mrb[0].mxu0
      %v628 = vadd.f32 0.0, %v627
      %v629 = vpop.f32.mrb[0].mxu0
      %630 = vmatprep.mubr.bf16.mxu0 0
      %631 = vmatmul.mubr.bf16.gmra.mrb[0].mxu0 %v427
      %v632 = vpop.f32.mrb[0].mxu0
      %v633 = vadd.f32 0.0, %v632
      %v634 = vpop.f32.mrb[0].mxu0
      %v635 = vpop.f32.mrb[0].mxu0
      %v636 = vadd.f32 0.0, %v635
      %v637 = vpop.f32.mrb[0].mxu0
      %638 = vmatprep.mubr.bf16.mxu0 0
      %639 = vmatmul.mubr.bf16.gmra.mrb[0].mxu0 %v428
      %v640 = vpop.f32.mrb[0].mxu0
      %v641 = vadd.f32 0.0, %v640
      %v642 = vpop.f32.mrb[0].mxu0
      %v643 = vpop.f32.mrb[0].mxu0
      %v644 = vadd.f32 0.0, %v643
      %v645 = vpop.f32.mrb[0].mxu0
      %646 = vmatprep.mubr.bf16.mxu0 0
      %647 = vmatmul.mubr.bf16.gmra.mrb[0].mxu0 %v429
      %v648 = vpop.f32.mrb[0].mxu0
      %v649 = vadd.f32 0.0, %v648
      %v650 = vpop.f32.mrb[0].mxu0
      %v651 = vpop.f32.mrb[0].mxu0
      %v652 = vadd.f32 0.0, %v651
      %v653 = vpop.f32.mrb[0].mxu0
      %654 = vdwg.mxu0
      %v655 = vpack.c.bf16 %v532, %v529
      %v656 = vpack.c.bf16 %v540, %v537
      %v657 = vpack.c.bf16 %v548, %v545
      %v658 = vpack.c.bf16 %v556, %v553
      %v659 = vpack.c.bf16 %v564, %v561
      %v660 = vpack.c.bf16 %v572, %v569
      %v661 = vpack.c.bf16 %v580, %v577
      %v662 = vpack.c.bf16 %v588, %v585
      %v663 = vpack.c.bf16 %v596, %v593
      %v664 = vpack.c.bf16 %v604, %v601
      %v665 = vpack.c.bf16 %v612, %v609
      %v666 = vpack.c.bf16 %v620, %v617
      %v667 = vpack.c.bf16 %v628, %v625
      %v668 = vpack.c.bf16 %v636, %v633
      %v669 = vpack.c.bf16 %v644, %v641
      %v670 = vpack.c.bf16 %v652, %v649
      %v687 = vunpack.c.l.b16 %v655
      %v688 = vunpack.c.h.b16 %v655
      %v689 = vunpack.c.l.b16 %v656
      %v690 = vunpack.c.h.b16 %v656
      %v691 = vunpack.c.l.b16 %v657
      %v692 = vunpack.c.h.b16 %v657
      %v693 = vunpack.c.l.b16 %v658
      %v694 = vunpack.c.h.b16 %v658
      %v695 = vunpack.c.l.b16 %v659
      %v696 = vunpack.c.h.b16 %v659
      %v697 = vunpack.c.l.b16 %v660
      %v698 = vunpack.c.h.b16 %v660
      %v699 = vunpack.c.l.b16 %v661
      %v700 = vunpack.c.h.b16 %v661
      %v701 = vunpack.c.l.b16 %v662
      %v702 = vunpack.c.h.b16 %v662
      %v703 = vunpack.c.l.b16 %v663
      %v704 = vunpack.c.h.b16 %v663
      %v705 = vunpack.c.l.b16 %v664
      %v706 = vunpack.c.h.b16 %v664
      %v707 = vunpack.c.l.b16 %v665
      %v708 = vunpack.c.h.b16 %v665
      %v709 = vunpack.c.l.b16 %v666
      %v710 = vunpack.c.h.b16 %v666
      %v711 = vunpack.c.l.b16 %v667
      %v712 = vunpack.c.h.b16 %v667
      %v713 = vunpack.c.l.b16 %v668
      %v714 = vunpack.c.h.b16 %v668
      %v715 = vunpack.c.l.b16 %v669
      %v716 = vunpack.c.h.b16 %v669
      %v717 = vunpack.c.l.b16 %v670
      %v718 = vunpack.c.h.b16 %v670
      %v719 = vpack.c.b16 %v687, %v687
      %v720 = vpack.c.b16 %v688, %v688
      %v721 = vpack.c.b16 %v689, %v689
      %v722 = vpack.c.b16 %v690, %v690
      %v723 = vpack.c.b16 %v691, %v691
      %v724 = vpack.c.b16 %v692, %v692
      %v725 = vpack.c.b16 %v693, %v693
      %v726 = vpack.c.b16 %v694, %v694
      %v727 = vpack.c.b16 %v695, %v695
      %v728 = vpack.c.b16 %v696, %v696
      %v729 = vpack.c.b16 %v697, %v697
      %v730 = vpack.c.b16 %v698, %v698
      %v731 = vpack.c.b16 %v699, %v699
      %v732 = vpack.c.b16 %v700, %v700
      %v733 = vpack.c.b16 %v701, %v701
      %v734 = vpack.c.b16 %v702, %v702
      %v735 = vpack.c.b16 %v703, %v703
      %v736 = vpack.c.b16 %v704, %v704
      %v737 = vpack.c.b16 %v705, %v705
      %v738 = vpack.c.b16 %v706, %v706
      %v739 = vpack.c.b16 %v707, %v707
      %v740 = vpack.c.b16 %v708, %v708
      %v741 = vpack.c.b16 %v709, %v709
      %v742 = vpack.c.b16 %v710, %v710
      %v743 = vpack.c.b16 %v711, %v711
      %v744 = vpack.c.b16 %v712, %v712
      %v745 = vpack.c.b16 %v713, %v713
      %v746 = vpack.c.b16 %v714, %v714
      %v747 = vpack.c.b16 %v715, %v715
      %v748 = vpack.c.b16 %v716, %v716
      %v749 = vpack.c.b16 %v717, %v717
      %v750 = vpack.c.b16 %v718, %v718
      %783 = vst [vmem:[%s233] sm:$0xf] %v719
      %784 = vst [vmem:[%s233 + $0x4] sm:$0xf] %v720
      %785 = vst [vmem:[%s233 + $0x8] sm:$0xf] %v721
      %786 = vst [vmem:[%s233 + $0xc] sm:$0xf] %v722
      %787 = vst [vmem:[%s233 + $0x10] sm:$0xf] %v723
      %788 = vst [vmem:[%s233 + $0x14] sm:$0xf] %v724
      %789 = vst [vmem:[%s233 + $0x18] sm:$0xf] %v725
      %790 = vst [vmem:[%s233 + $0x1c] sm:$0xf] %v726
      %791 = vst [vmem:[%s233 + $0x20] sm:$0xf] %v727
      %792 = vst [vmem:[%s233 + $0x24] sm:$0xf] %v728
      %793 = vst [vmem:[%s233 + $0x28] sm:$0xf] %v729
      %794 = vst [vmem:[%s233 + $0x2c] sm:$0xf] %v730
      %795 = vst [vmem:[%s233 + $0x30] sm:$0xf] %v731
      %796 = vst [vmem:[%s233 + $0x34] sm:$0xf] %v732
      %797 = vst [vmem:[%s233 + $0x38] sm:$0xf] %v733
      %798 = vst [vmem:[%s233 + $0x3c] sm:$0xf] %v734
      %799 = vst [vmem:[%s233 + $0x40] sm:$0xf] %v735
      %800 = vst [vmem:[%s233 + $0x44] sm:$0xf] %v736
      %801 = vst [vmem:[%s233 + $0x48] sm:$0xf] %v737
      %802 = vst [vmem:[%s233 + $0x4c] sm:$0xf] %v738
      %803 = vst [vmem:[%s233 + $0x50] sm:$0xf] %v739
      %804 = vst [vmem:[%s233 + $0x54] sm:$0xf] %v740
      %805 = vst [vmem:[%s233 + $0x58] sm:$0xf] %v741
      %806 = vst [vmem:[%s233 + $0x5c] sm:$0xf] %v742
      %807 = vst [vmem:[%s233 + $0x60] sm:$0xf] %v743
      %808 = vst [vmem:[%s233 + $0x64] sm:$0xf] %v744
      %809 = vst [vmem:[%s233 + $0x68] sm:$0xf] %v745
      %810 = vst [vmem:[%s233 + $0x6c] sm:$0xf] %v746
      %811 = vst [vmem:[%s233 + $0x70] sm:$0xf] %v747
      %812 = vst [vmem:[%s233 + $0x74] sm:$0xf] %v748
      %813 = vst [vmem:[%s233 + $0x78] sm:$0xf] %v749
      %814 = vst [vmem:[%s233 + $0x7c] sm:$0xf] %v750
      %v815 = vadd.f32 %v529, %v532
      %v816 = vadd.f32 %v815, %v537
      %v817 = vadd.f32 %v816, %v540
      %v818 = vadd.f32 %v817, %v545
      %v819 = vadd.f32 %v818, %v548
      %v820 = vadd.f32 %v819, %v553
      %v821 = vadd.f32 %v820, %v556
      %v822 = vadd.f32 %v821, %v561
      %v823 = vadd.f32 %v822, %v564
      %v824 = vadd.f32 %v823, %v569
      %v825 = vadd.f32 %v824, %v572
      %v826 = vadd.f32 %v825, %v577
      %v827 = vadd.f32 %v826, %v580
      %v828 = vadd.f32 %v827, %v585
      %v829 = vadd.f32 %v828, %v588
      %v830 = vadd.f32 %v829, %v593
      %v831 = vadd.f32 %v830, %v596
      %v832 = vadd.f32 %v831, %v601
      %v833 = vadd.f32 %v832, %v604
      %v834 = vadd.f32 %v833, %v609
      %v835 = vadd.f32 %v834, %v612
      %v836 = vadd.f32 %v835, %v617
      %v837 = vadd.f32 %v836, %v620
      %v838 = vadd.f32 %v837, %v625
      %v839 = vadd.f32 %v838, %v628
      %v840 = vadd.f32 %v839, %v633
      %v841 = vadd.f32 %v840, %v636
      %v842 = vadd.f32 %v841, %v641
      %v843 = vadd.f32 %v842, %v644
      %v844 = vadd.f32 %v843, %v649
      %v845 = vadd.f32 %v844, %v652
      %v846 = vrot.slane %v845, 4
      %v847 = vadd.f32 %v845, %v846
      %v848 = vrot.slane %v847, 2
      %v849 = vadd.f32 %v847, %v848
      %v850 = vrot.slane %v849, 1
      %v851 = vadd.f32 %v849, %v850
      %v852 = vmul.f32 %v529, %v529
      %v853 = vmul.f32 %v532, %v532
      %v854 = vmul.f32 %v537, %v537
      %v855 = vmul.f32 %v540, %v540
      %v856 = vmul.f32 %v545, %v545
      %v857 = vmul.f32 %v548, %v548
      %v858 = vmul.f32 %v553, %v553
      %v859 = vmul.f32 %v556, %v556
      %v860 = vmul.f32 %v561, %v561
      %v861 = vmul.f32 %v564, %v564
      %v862 = vmul.f32 %v569, %v569
      %v863 = vmul.f32 %v572, %v572
      %v864 = vmul.f32 %v577, %v577
      %v865 = vmul.f32 %v580, %v580
      %v866 = vmul.f32 %v585, %v585
      %v867 = vmul.f32 %v588, %v588
      %v868 = vmul.f32 %v593, %v593
      %v869 = vmul.f32 %v596, %v596
      %v870 = vmul.f32 %v601, %v601
      %v871 = vmul.f32 %v604, %v604
      %v872 = vmul.f32 %v609, %v609
      %v873 = vmul.f32 %v612, %v612
      %v874 = vmul.f32 %v617, %v617
      %v875 = vmul.f32 %v620, %v620
      %v876 = vmul.f32 %v625, %v625
      %v877 = vmul.f32 %v628, %v628
      %v878 = vmul.f32 %v633, %v633
      %v879 = vmul.f32 %v636, %v636
      %v880 = vmul.f32 %v641, %v641
      %v881 = vmul.f32 %v644, %v644
      %v882 = vmul.f32 %v649, %v649
      %v883 = vmul.f32 %v652, %v652
      %v884 = vadd.f32 %v852, %v853
      %v885 = vadd.f32 %v884, %v854
      %v886 = vadd.f32 %v885, %v855
      %v887 = vadd.f32 %v886, %v856
      %v888 = vadd.f32 %v887, %v857
      %v889 = vadd.f32 %v888, %v858
      %v890 = vadd.f32 %v889, %v859
      %v891 = vadd.f32 %v890, %v860
      %v892 = vadd.f32 %v891, %v861
      %v893 = vadd.f32 %v892, %v862
      %v894 = vadd.f32 %v893, %v863
      %v895 = vadd.f32 %v894, %v864
      %v896 = vadd.f32 %v895, %v865
      %v897 = vadd.f32 %v896, %v866
      %v898 = vadd.f32 %v897, %v867
      %v899 = vadd.f32 %v898, %v868
      %v900 = vadd.f32 %v899, %v869
      %v901 = vadd.f32 %v900, %v870
      %v902 = vadd.f32 %v901, %v871
      %v903 = vadd.f32 %v902, %v872
      %v904 = vadd.f32 %v903, %v873
      %v905 = vadd.f32 %v904, %v874
      %v906 = vadd.f32 %v905, %v875
      %v907 = vadd.f32 %v906, %v876
      %v908 = vadd.f32 %v907, %v877
      %v909 = vadd.f32 %v908, %v878
      %v910 = vadd.f32 %v909, %v879
      %v911 = vadd.f32 %v910, %v880
      %v912 = vadd.f32 %v911, %v881
      %v913 = vadd.f32 %v912, %v882
      %v914 = vadd.f32 %v913, %v883
      %v915 = vrot.slane %v914, 4
      %v916 = vadd.f32 %v914, %v915
      %v917 = vrot.slane %v916, 2
      %v918 = vadd.f32 %v916, %v917
      %v919 = vrot.slane %v918, 1
      %v920 = vadd.f32 %v918, %v919
      %vm921 = vcmask 1040384
      %v922 = vsel %vm921, %v851, %v920
      %923 = vst [vmem:[%s238] sm:$0x3] %v922
      %s924 = smul.u32 32, %s17
      %p925 = scmp.lt.s32.totalorder %s924, 63
      %s926 = scalar_select %p925, %s924, 63
      %s927 = smul.addr %s926, 4
      %s928 = scalar_lea.vmem %s4, %s927
      %p929 = scmp.lt.s32.totalorder %s17, 1
      %s930 = scalar_select %p929, %s17, 1
      %s931 = smul.addr %s930, 2
      %s932 = scalar_lea.vmem %s5, %s931
      // Predicated region
      $region37: #{decoder_forward.6} parent=35 // pred_check
        %p933 = pneg %p124
      $region38: #{decoder_forward.6} parent=35 // pred_check_branch
        %935 = sbr.rel (%p933) target = $region40
      $region39: #{decoder_forward.6} parent=35 // pred_region
        %s936 = smul.u32 32, %s17
      $region40: #{decoder_forward.6} parent=35 // pred_fallthru
        _
      // Predicated region
      $region41: #{decoder_forward.6} parent=35 // pred_check
        %p937 = pneg %p150
      $region42: #{decoder_forward.6} parent=35 // pred_check_branch
        %939 = sbr.rel (%p937) target = $region44
      $region43: #{decoder_forward.6} parent=35 // pred_region
        _
      $region44: #{decoder_forward.6} parent=35 // pred_fallthru
        _
    $region36: #{decoder_forward.6} parent=5 // pred_fallthru
      _
    %p940 = scmp.le.s32.totalorder 2, %s12
    // Predicated region
    $region45: #{decoder_forward.6} parent=5 // pred_check
      %p941 = pneg %p940
    $region46: #{decoder_forward.6} parent=5 // pred_check_branch
      %943 = sbr.rel (%p941) target = $region48
    $region47: #{decoder_forward.6} parent=5 // pred_region
      %s944 = ssub.s32 %s12, 2
      // Predicated region
      $region49: #{decoder_forward.6} parent=47 // pred_check
        %p945 = pneg %p130
      $region50: #{decoder_forward.6} parent=47 // pred_check_branch
        %947 = sbr.rel (%p945) target = $region52
      $region51: #{decoder_forward.6} parent=47 // pred_region
        %s948 = smul.u32 32, %s18
        %p949 = scmp.lt.s32.totalorder %s948, 63
        %s950 = scalar_select %p949, %s948, 63
        %s951 = smul.addr %s950, 4
        %s952 = scalar_lea.vmem %s4, %s951
      $region52: #{decoder_forward.6} parent=47 // pred_fallthru
        _
      // Predicated region
      $region53: #{decoder_forward.6} parent=47 // pred_check
        %p953 = pneg %p156
      $region54: #{decoder_forward.6} parent=47 // pred_check_branch
        %955 = sbr.rel (%p953) target = $region56
      $region55: #{decoder_forward.6} parent=47 // pred_region
        %p956 = scmp.lt.s32.totalorder %s18, 1
        %s957 = scalar_select %p956, %s18, 1
        %s958 = smul.addr %s957, 2
        %s959 = scalar_lea.vmem %s5, %s958
      $region56: #{decoder_forward.6} parent=47 // pred_fallthru
        _
    $region48: #{decoder_forward.6} parent=5 // pred_fallthru
      _
  $region6: #{decoder_forward.6} parent=0 // loop_footer
    %s16 = sadd.s32 1, %s12
  $region7: #{decoder_forward.6} parent=0 // loop_footer_branch
    %11 = sbr.rel target = $region3
  $region8: #{decoder_forward.6} parent=0 // loop_exit
    _

// kernel: decoder_forward.5
$region0: #{decoder_forward.5}
  #allocation0 [shape = 'u32[]', space=smem, size = 0x4, offset = 0x4, fixed_abs, tag = 'smem constant byte address 0x4 - core index']
  #allocation1 [shape = 'u32[144,128]{1,0:T(1,128)}', space=vmem, size = 0x12000, scoped, tag = 'internal scratch']
  #allocation2 [shape = 'f32[9,9,128]{2,1,0:T(8,128)}', space=vmem, size = 0x12000, scoped, tag = 'scratch operand']
  %s0 = inlined_call_operand.vmem [shape: bf16[2,8,8,128], index: 0, kind: input, shape index: {}, may-alias: {0,1}]
  %s1 = inlined_call_operand.vmem [shape: bf16[2,8,8,128], index: 1, kind: input, shape index: {}, may-alias: {0,1}]
  %s2 = inlined_call_operand.vmem [shape: f32[1,128], index: 2, kind: input, shape index: {}]
  %s3 = inlined_call_operand.vmem [shape: f32[1,128], index: 3, kind: input, shape index: {}]
  %s4 = inlined_call_operand.hbm [shape: bf16[6,128,256], index: 4, kind: input, shape index: {}]
  %s5 = inlined_call_operand.vmem [shape: bf16[2,8,2,8,256], index: 5, kind: output, shape index: {0}]
  %s6 = inlined_call_operand.vmem [shape: f32[2,1,2,128], index: 6, kind: output, shape index: {1}]
  %7 = xla_tuple %s5, %s6
  %s8 = sld [smem:[#allocation0]]
  $region65: #{decoder_forward.5} parent=0
    _
  %s10 = ssub.s32 1, %s8
  %s11 = scalar_select 0, %s10, %s8
  $region1: #{decoder_forward.5} parent=0
    #allocation3 [shape = 'u8[393216]{0}', space=vmem, size = 0x60000, scoped, tag = 'input window, operand 4, single buffered']
    #allocation4 [shape = 's32[2]{0}', space=sflag, size = 0x8, scoped, tag = 'scoped memory for decoder_forward.5']
    %12 = vsyncpa [#allocation4], 0
    loop: start=0, step=1, limit=4
    $region2: #{decoder_forward.5} parent=1 // loop_pre_header
      _
    $region3: #{decoder_forward.5} parent=1 // loop_header
      %s14 = sphi 0, %s18
      %p15 = scmp.ge.s32.totalorder %s14, 4
      %s21 = sphi 0, %s33
      %s22 = sphi 0, %s29
      %s23 = sphi 0, %s21
      %s24 = sphi 0, %s22
      %s25 = sphi 0, %s23
      %s26 = sphi 0, %s24
      %s38 = sphi 0, %s40
      %s41 = sphi 0, %s38
      %s42 = sphi 0, %s41
      %s58 = sphi 0, %s42
      %s74 = sphi 0, %s76
      %s77 = sphi 0, %s74
      %s78 = sphi 0, %s77
      %s94 = sphi 0, %s78
      %s98 = sphi 0, %s98
      %s100 = sphi 0, %s98
      %s101 = sphi 0, %s100
      %s115 = sphi 0, %s101
      %s119 = sphi 0, %s119
      %s121 = sphi 0, %s119
      %s122 = sphi 0, %s121
      %s136 = sphi 0, %s122
      %s140 = sphi 0, %s140
      %s142 = sphi 0, %s140
      %s143 = sphi 0, %s142
      %s157 = sphi 0, %s143
      %s165 = sphi 0, %s167
      %s168 = sphi 0, %s165
      %s169 = sphi 0, %s168
      %s185 = sphi 0, %s169
      %s193 = sphi 0, %s195
      %s196 = sphi 0, %s193
      %s197 = sphi 0, %s196
      %s213 = sphi 0, %s197
    $region4: #{decoder_forward.5} parent=1 // loop_header_branch
      %17 = sbr.rel (%p15) target = $region8
    $region5: #{decoder_forward.5} parent=1 // loop_body
      %s19 = ssub.s32 %s14, 1
      %s20 = ssub.s32 %s14, 2
      %s27 = sadd.s32 1, %s22
      %p28 = scmp.ge.s32.totalorder %s27, 1
      %s29 = scalar_select %p28, 0, %s27
      %s30 = sadd.s32 1, %s21
      %s31 = scalar_select %p28, %s30, %s21
      %p32 = scmp.ge.s32.totalorder %s31, 2
      %s33 = scalar_select %p32, 0, %s31
      %s34 = ssub.s32 %s21, %s33
      %s35 = ssub.s32 %s22, %s29
      %s36 = sor.u32 %s34, %s35
      %p37 = scmp.eq.s32.totalorder %s36, 0
      %s39 = sadd.s32 %s38, 1
      %s40 = scalar_select %p37, %s38, %s39
      %p43 = pneg %p37
      %p44 = scmp.eq.s32.totalorder %s14, 1
      %p45 = por %p43, %p44
      %p46 = scmp.ne.s32.totalorder %s38, %s41
      %p47 = scmp.eq.s32.totalorder %s14, 0
      %p48 = por %p46, %p47
      %p49 = scmp.ne.s32.totalorder %s38, %s41
      %p50 = scmp.eq.s32.totalorder %s19, 1
      %p51 = por %p49, %p50
      %p52 = scmp.ne.s32.totalorder %s41, %s42
      %p53 = scmp.eq.s32.totalorder %s19, 0
      %p54 = por %p52, %p53
      %p55 = scmp.ne.s32.totalorder %s41, %s42
      %p56 = scmp.eq.s32.totalorder %s20, 1
      %p57 = por %p55, %p56
      %p59 = scmp.ne.s32.totalorder %s42, %s58
      %p60 = scmp.eq.s32.totalorder %s20, 0
      %p61 = por %p59, %p60
      %s62 = sadd.s32 %s22, 1
      %s63 = smul.u32 %s62, 8
      %p64 = scmp.lt.s32.totalorder %s63, 7
      %s65 = scalar_select %p64, %s63, 7
      %s66 = sadd.s32 %s29, 1
      %s67 = smul.u32 %s66, 8
      %p68 = scmp.lt.s32.totalorder %s67, 7
      %s69 = scalar_select %p68, %s67, 7
      %s70 = ssub.s32 %s21, %s33
      %s71 = ssub.s32 %s65, %s69
      %s72 = sor.u32 %s70, %s71
      %p73 = scmp.eq.s32.totalorder %s72, 0
      %s75 = sadd.s32 %s74, 1
      %s76 = scalar_select %p73, %s74, %s75
      %p79 = pneg %p73
      %p80 = scmp.eq.s32.totalorder %s14, 1
      %p81 = por %p79, %p80
      %p82 = scmp.ne.s32.totalorder %s74, %s77
      %p83 = scmp.eq.s32.totalorder %s14, 0
      %p84 = por %p82, %p83
      %p85 = scmp.ne.s32.totalorder %s74, %s77
      %p86 = scmp.eq.s32.totalorder %s19, 1
      %p87 = por %p85, %p86
      %p88 = scmp.ne.s32.totalorder %s77, %s78
      %p89 = scmp.eq.s32.totalorder %s19, 0
      %p90 = por %p88, %p89
      %p91 = scmp.ne.s32.totalorder %s77, %s78
      %p92 = scmp.eq.s32.totalorder %s20, 1
      %p93 = por %p91, %p92
      %p95 = scmp.ne.s32.totalorder %s78, %s94
      %p96 = scmp.eq.s32.totalorder %s20, 0
      %p97 = por %p95, %p96
      %s99 = sadd.s32 %s98, 1
      %p102 = scmp.eq.s32.totalorder %s14, 1
      %p103 = scmp.ne.s32.totalorder %s98, %s100
      %p104 = scmp.eq.s32.totalorder %s14, 0
      %p105 = por %p103, %p104
      %p106 = scmp.ne.s32.totalorder %s98, %s100
      %p107 = scmp.eq.s32.totalorder %s19, 1
      %p108 = por %p106, %p107
      %p109 = scmp.ne.s32.totalorder %s100, %s101
      %p110 = scmp.eq.s32.totalorder %s19, 0
      %p111 = por %p109, %p110
      %p112 = scmp.ne.s32.totalorder %s100, %s101
      %p113 = scmp.eq.s32.totalorder %s20, 1
      %p114 = por %p112, %p113
      %p116 = scmp.ne.s32.totalorder %s101, %s115
      %p117 = scmp.eq.s32.totalorder %s20, 0
      %p118 = por %p116, %p117
      %s120 = sadd.s32 %s119, 1
      %p123 = scmp.eq.s32.totalorder %s14, 1
      %p124 = scmp.ne.s32.totalorder %s119, %s121
      %p125 = scmp.eq.s32.totalorder %s14, 0
      %p126 = por %p124, %p125
      %p127 = scmp.ne.s32.totalorder %s119, %s121
      %p128 = scmp.eq.s32.totalorder %s19, 1
      %p129 = por %p127, %p128
      %p130 = scmp.ne.s32.totalorder %s121, %s122
      %p131 = scmp.eq.s32.totalorder %s19, 0
      %p132 = por %p130, %p131
      %p133 = scmp.ne.s32.totalorder %s121, %s122
      %p134 = scmp.eq.s32.totalorder %s20, 1
      %p135 = por %p133, %p134
      %p137 = scmp.ne.s32.totalorder %s122, %s136
      %p138 = scmp.eq.s32.totalorder %s20, 0
      %p139 = por %p137, %p138
      %s141 = sadd.s32 %s140, 1
      %p144 = scmp.eq.s32.totalorder %s14, 1
      %p145 = scmp.ne.s32.totalorder %s140, %s142
      %p146 = scmp.eq.s32.totalorder %s14, 0
      %p147 = por %p145, %p146
      %p148 = scmp.ne.s32.totalorder %s140, %s142
      %p149 = scmp.eq.s32.totalorder %s19, 1
      %p150 = por %p148, %p149
      %p151 = scmp.ne.s32.totalorder %s142, %s143
      %p152 = scmp.eq.s32.totalorder %s19, 0
      %p153 = por %p151, %p152
      %p154 = scmp.ne.s32.totalorder %s142, %s143
      %p155 = scmp.eq.s32.totalorder %s20, 1
      %p156 = por %p154, %p155
      %p158 = scmp.ne.s32.totalorder %s143, %s157
      %p159 = scmp.eq.s32.totalorder %s20, 0
      %p160 = por %p158, %p159
      %s161 = ssub.s32 %s21, %s33
      %s162 = ssub.s32 %s22, %s29
      %s163 = sor.u32 %s161, %s162
      %p164 = scmp.eq.s32.totalorder %s163, 0
      %s166 = sadd.s32 %s165, 1
      %s167 = scalar_select %p164, %s165, %s166
      %p170 = pneg %p164
      %p171 = scmp.eq.s32.totalorder %s14, 1
      %p172 = por %p170, %p171
      %p173 = scmp.ne.s32.totalorder %s165, %s168
      %p174 = scmp.eq.s32.totalorder %s14, 0
      %p175 = por %p173, %p174
      %p176 = scmp.ne.s32.totalorder %s165, %s168
      %p177 = scmp.eq.s32.totalorder %s19, 1
      %p178 = por %p176, %p177
      %p179 = scmp.ne.s32.totalorder %s168, %s169
      %p180 = scmp.eq.s32.totalorder %s19, 0
      %p181 = por %p179, %p180
      %p182 = scmp.ne.s32.totalorder %s168, %s169
      %p183 = scmp.eq.s32.totalorder %s20, 1
      %p184 = por %p182, %p183
      %p186 = scmp.ne.s32.totalorder %s169, %s185
      %p187 = scmp.eq.s32.totalorder %s20, 0
      %p188 = por %p186, %p187
      %s189 = ssub.s32 %s21, %s33
      %s190 = ssub.s32 %s22, %s29
      %s191 = sor.u32 %s189, %s190
      %p192 = scmp.eq.s32.totalorder %s191, 0
      %s194 = sadd.s32 %s193, 1
      %s195 = scalar_select %p192, %s193, %s194
      %p198 = pneg %p192
      %p199 = scmp.eq.s32.totalorder %s14, 1
      %p200 = por %p198, %p199
      %p201 = scmp.ne.s32.totalorder %s193, %s196
      %p202 = scmp.eq.s32.totalorder %s14, 0
      %p203 = por %p201, %p202
      %p204 = scmp.ne.s32.totalorder %s193, %s196
      %p205 = scmp.eq.s32.totalorder %s19, 1
      %p206 = por %p204, %p205
      %p207 = scmp.ne.s32.totalorder %s196, %s197
      %p208 = scmp.eq.s32.totalorder %s19, 0
      %p209 = por %p207, %p208
      %p210 = scmp.ne.s32.totalorder %s196, %s197
      %p211 = scmp.eq.s32.totalorder %s20, 1
      %p212 = por %p210, %p211
      %p214 = scmp.ne.s32.totalorder %s197, %s213
      %p215 = scmp.eq.s32.totalorder %s20, 0
      %p216 = por %p214, %p215
      %p217 = scmp.le.s32.totalorder 1, %s14
      %p218 = scmp.lt.s32.totalorder %s14, 3
      %p219 = pnand %p217, %p218
      %p220 = pneg %p219
      // Predicated region
      $region9: #{decoder_forward.5} parent=5 // pred_check
        _
      $region10: #{decoder_forward.5} parent=5 // pred_check_branch
        %222 = sbr.rel (%p219) target = $region12
      $region11: #{decoder_forward.5} parent=5 // pred_region
        %s223 = ssub.s32 %s14, 1
        // Predicated region
        $region13: #{decoder_forward.5} parent=11 // pred_check
          %p224 = pneg %p111
        $region14: #{decoder_forward.5} parent=11 // pred_check_branch
          %226 = sbr.rel (%p224) target = $region16
        $region15: #{decoder_forward.5} parent=11 // pred_region
          _
        $region16: #{decoder_forward.5} parent=11 // pred_fallthru
          _
        // Predicated region
        $region17: #{decoder_forward.5} parent=11 // pred_check
          %p227 = pneg %p132
        $region18: #{decoder_forward.5} parent=11 // pred_check_branch
          %229 = sbr.rel (%p227) target = $region20
        $region19: #{decoder_forward.5} parent=11 // pred_region
          _
        $region20: #{decoder_forward.5} parent=11 // pred_fallthru
          _
        // Predicated region
        $region21: #{decoder_forward.5} parent=11 // pred_check
          %p230 = pneg %p153
        $region22: #{decoder_forward.5} parent=11 // pred_check_branch
          %232 = sbr.rel (%p230) target = $region24
        $region23: #{decoder_forward.5} parent=11 // pred_region
          %s234 = ssub.s32 12288, 12288
          %235 = vsyncadd [#allocation4], %s234
          %s236 = sshll.u32 [#allocation3], 4
          %s237 = int_to_ptr.vmem [resolvable:$true] %s236
          %242 = dma.hbm_to_vmem [thread:$0]  %s4, 12288, %s237, [#allocation4], 128, 128, 8
        $region24: #{decoder_forward.5} parent=11 // pred_fallthru
          _
      $region12: #{decoder_forward.5} parent=5 // pred_fallthru
        _
      %p243 = scmp.lt.s32.totalorder %s14, 2
      // Predicated region
      $region25: #{decoder_forward.5} parent=5 // pred_check
        %p244 = pneg %p243
      $region26: #{decoder_forward.5} parent=5 // pred_check_branch
        %246 = sbr.rel (%p244) target = $region28
      $region27: #{decoder_forward.5} parent=5 // pred_region
        // Predicated region
        $region29: #{decoder_forward.5} parent=27 // pred_check
          %p247 = pneg %p48
        $region30: #{decoder_forward.5} parent=27 // pred_check_branch
          %249 = sbr.rel (%p247) target = $region32
        $region31: #{decoder_forward.5} parent=27 // pred_region
          %s250 = smul.u32 8, %s22
          %p251 = scmp.lt.s32.totalorder %s21, 1
          %s252 = scalar_select %p251, %s21, 1
          %p253 = scmp.lt.s32.totalorder %s250, 7
          %s254 = scalar_select %p253, %s250, 7
          %s255 = smul.addr %s252, 8
          %s256 = sadd.s32 %s254, %s255
          %s257 = smul.addr %s256, 4
          %s258 = scalar_lea.vmem %s0, %s257
          %s259 = smul.u32 8, %s22
        $region32: #{decoder_forward.5} parent=27 // pred_fallthru
          _
        // Predicated region
        $region33: #{decoder_forward.5} parent=27 // pred_check
          %p260 = pneg %p84
        $region34: #{decoder_forward.5} parent=27 // pred_check_branch
          %262 = sbr.rel (%p260) target = $region36
        $region35: #{decoder_forward.5} parent=27 // pred_region
          %s263 = sadd.s32 %s22, 1
          %s264 = smul.u32 %s263, 8
          %p265 = scmp.lt.s32.totalorder %s264, 7
          %s266 = scalar_select %p265, %s264, 7
          %p267 = scmp.lt.s32.totalorder %s21, 1
          %s268 = scalar_select %p267, %s21, 1
          %p269 = scmp.lt.s32.totalorder %s266, 7
          %s270 = scalar_select %p269, %s266, 7
          %s271 = smul.addr %s268, 8
          %s272 = sadd.s32 %s270, %s271
          %s273 = smul.addr %s272, 4
          %s274 = scalar_lea.vmem %s1, %s273
          %s275 = sadd.s32 %s22, 1
          %s276 = smul.u32 %s275, 8
          %p277 = scmp.lt.s32.totalorder %s276, 7
          %s278 = scalar_select %p277, %s276, 7
        $region36: #{decoder_forward.5} parent=27 // pred_fallthru
          _
      $region28: #{decoder_forward.5} parent=5 // pred_fallthru
        _
      %p279 = scmp.le.s32.totalorder 1, %s14
      %p280 = scmp.lt.s32.totalorder %s14, 3
      %p281 = pnand %p279, %p280
      %p282 = pneg %p281
      // Predicated region
      $region37: #{decoder_forward.5} parent=5 // pred_check
        _
      $region38: #{decoder_forward.5} parent=5 // pred_check_branch
        %284 = sbr.rel (%p281) target = $region40
      $region39: #{decoder_forward.5} parent=5 // pred_region
        %s285 = ssub.s32 %s14, 1
        // Predicated region
        $region41: #{decoder_forward.5} parent=39 // pred_check
          %p286 = pneg %p153
        $region42: #{decoder_forward.5} parent=39 // pred_check_branch
          %288 = sbr.rel (%p286) target = $region44
        $region43: #{decoder_forward.5} parent=39 // pred_region
          %289 = dma.done [#allocation4], 12288
        $region44: #{decoder_forward.5} parent=39 // pred_fallthru
          _
        %s290 = smul.u32 8, %s24
        %p291 = scmp.lt.s32.totalorder %s23, 1
        %s292 = scalar_select %p291, %s23, 1
        %p293 = scmp.lt.s32.totalorder %s290, 7
        %s294 = scalar_select %p293, %s290, 7
        %s295 = smul.addr %s292, 8
        %s296 = sadd.s32 %s294, %s295
        %s297 = smul.addr %s296, 4
        %s298 = scalar_lea.vmem %s0, %s297
        %p299 = pneg %p54
        %p300 = pneg %p51
        %s301 = sadd.s32 %s24, 1
        %s302 = smul.u32 %s301, 8
        %p303 = scmp.lt.s32.totalorder %s302, 7
        %s304 = scalar_select %p303, %s302, 7
        %p305 = scmp.lt.s32.totalorder %s23, 1
        %s306 = scalar_select %p305, %s23, 1
        %p307 = scmp.lt.s32.totalorder %s304, 7
        %s308 = scalar_select %p307, %s304, 7
        %s309 = smul.addr %s306, 8
        %s310 = sadd.s32 %s308, %s309
        %s311 = smul.addr %s310, 4
        %s312 = scalar_lea.vmem %s1, %s311
        %p313 = pneg %p90
        %p314 = pneg %p87
        %p315 = pneg %p111
        %p316 = pneg %p108
        %p317 = pneg %p132
        %p318 = pneg %p129
        %p319 = pneg %p153
        %p320 = pneg %p150
        %p321 = pneg %p181
        %p322 = pneg %p178
        %s323 = smul.u32 8, %s24
        %p324 = scmp.lt.s32.totalorder %s23, 1
        %s325 = scalar_select %p324, %s23, 1
        %p326 = scmp.lt.s32.totalorder %s323, 7
        %s327 = scalar_select %p326, %s323, 7
        %s328 = smul.addr %s327, 4
        %s329 = smul.addr %s325, 32
        %s330 = sadd.s32 %s328, %s329
        %s331 = smul.addr %s330, 4
        %s332 = scalar_lea.vmem %s5, %s331
        %p333 = pneg %p209
        %p334 = pneg %p206
        %p335 = scmp.lt.s32.totalorder %s23, 1
        %s336 = scalar_select %p335, %s23, 1
        %p337 = scmp.lt.s32.totalorder %s24, 0
        %s338 = scalar_select %p337, %s24, 0
        %s339 = sadd.s32 %s338, %s336
        %s340 = smul.addr %s339, 2
        %s341 = scalar_lea.vmem %s6, %s340
        %s342 = smul.u32 8, %s24
        %p343 = scmp.lt.s32.totalorder %s23, 1
        %s344 = scalar_select %p343, %s23, 1
        %p345 = scmp.lt.s32.totalorder %s342, 7
        %s346 = scalar_select %p345, %s342, 7
        %s347 = smul.addr %s344, 8
        %s348 = sadd.s32 %s346, %s347
        %s349 = smul.addr %s348, 4
        %s350 = scalar_lea.vmem %s0, %s349
        %s351 = smul.u32 8, %s24
        %s352 = sadd.s32 %s24, 1
        %s353 = smul.u32 %s352, 8
        %p354 = scmp.lt.s32.totalorder %s353, 7
        %s355 = scalar_select %p354, %s353, 7
        %p356 = scmp.lt.s32.totalorder %s23, 1
        %s357 = scalar_select %p356, %s23, 1
        %p358 = scmp.lt.s32.totalorder %s355, 7
        %s359 = scalar_select %p358, %s355, 7
        %s360 = smul.addr %s357, 8
        %s361 = sadd.s32 %s359, %s360
        %s362 = smul.addr %s361, 4
        %s363 = scalar_lea.vmem %s1, %s362
        %s364 = sadd.s32 %s24, 1
        %s365 = smul.u32 %s364, 8
        %p366 = scmp.lt.s32.totalorder %s365, 7
        %s367 = scalar_select %p366, %s365, 7
        %s368 = smul.u32 8, %s24
        %p369 = scmp.lt.s32.totalorder %s23, 1
        %s370 = scalar_select %p369, %s23, 1
        %p371 = scmp.lt.s32.totalorder %s368, 7
        %s372 = scalar_select %p371, %s368, 7
        %s373 = smul.addr %s372, 4
        %s374 = smul.addr %s370, 32
        %s375 = sadd.s32 %s373, %s374
        %s376 = smul.addr %s375, 4
        %s377 = scalar_lea.vmem %s5, %s376
        %s378 = smul.u32 8, %s24
        %p379 = scmp.lt.s32.totalorder %s23, 1
        %s380 = scalar_select %p379, %s23, 1
        %p381 = scmp.lt.s32.totalorder %s24, 0
        %s382 = scalar_select %p381, %s24, 0
        %s383 = sadd.s32 %s382, %s380
        %s384 = smul.addr %s383, 2
        %s385 = scalar_lea.vmem %s6, %s384
        %v387 = vld [vmem:[%s2] sm:$0x1]
        %v388 = vld [vmem:[%s3] sm:$0x1]
        %v389 = vld [vmem:[%s350] sm:$0xf]
        %v390 = vld [vmem:[%s350 + $0x4] sm:$0xf]
        %v391 = vld [vmem:[%s350 + $0x8] sm:$0xf]
        %v392 = vld [vmem:[%s350 + $0xc] sm:$0xf]
        %v393 = vld [vmem:[%s350 + $0x10] sm:$0xf]
        %v394 = vld [vmem:[%s350 + $0x14] sm:$0xf]
        %v395 = vld [vmem:[%s350 + $0x18] sm:$0xf]
        %v396 = vld [vmem:[%s350 + $0x1c] sm:$0xf]
        %v397 = vunpack.c.l.bf16 %v389
        %v398 = vunpack.c.l.bf16 %v390
        %v399 = vunpack.c.l.bf16 %v391
        %v400 = vunpack.c.l.bf16 %v392
        %v401 = vunpack.c.l.bf16 %v393
        %v402 = vunpack.c.l.bf16 %v394
        %v403 = vunpack.c.l.bf16 %v395
        %v404 = vunpack.c.l.bf16 %v396
        %v406 = vlaneseq
        %v407 = vshrl.u32 %v406, 7
        %v408 = vsub.s32 0, %v407
        %v409 = vrot.slane %v387, %v408
        %v411 = vmul.f32 %v397, %v409
        %v412 = vmul.f32 %v398, %v409
        %v413 = vmul.f32 %v399, %v409
        %v414 = vmul.f32 %v400, %v409
        %v415 = vmul.f32 %v401, %v409
        %v416 = vmul.f32 %v402, %v409
        %v417 = vmul.f32 %v403, %v409
        %v418 = vmul.f32 %v404, %v409
        %v420 = vlaneseq
        %v421 = vshrl.u32 %v420, 7
        %v422 = vsub.s32 0, %v421
        %v423 = vrot.slane %v388, %v422
        %v425 = vadd.f32 %v411, %v423
        %v426 = vadd.f32 %v412, %v423
        %v427 = vadd.f32 %v413, %v423
        %v428 = vadd.f32 %v414, %v423
        %v429 = vadd.f32 %v415, %v423
        %v430 = vadd.f32 %v416, %v423
        %v431 = vadd.f32 %v417, %v423
        %v432 = vadd.f32 %v418, %v423
        %v433 = vmax.f32 %v425, 0.0
        %v434 = vmax.f32 %v426, 0.0
        %v435 = vmax.f32 %v427, 0.0
        %v436 = vmax.f32 %v428, 0.0
        %v437 = vmax.f32 %v429, 0.0
        %v438 = vmax.f32 %v430, 0.0
        %v439 = vmax.f32 %v431, 0.0
        %v440 = vmax.f32 %v432, 0.0
        %v441 = vld [vmem:[%s363] sm:$0xf]
        %v442 = vunpack.c.l.bf16 %v441
        %v443 = vmul.f32 %v442, %v409
        %v444 = vadd.f32 %v443, %v423
        %v445 = vmax.f32 %v444, 0.0
        %s446 = sadd.s32 %s24, 1
        %p447 = scmp.lt.s32.totalorder %s446, 1
        %s448 = scalar_select %p447, 1, 0
        %s449 = scvt.s32.f32 %s448
        %v450 = vstv %s449
        %v451 = vmul.f32 %v445, %v450
        %452 = vst [vmem:[#allocation2] sm:$0xff] %v433
        %453 = vst [vmem:[#allocation2 + $0x10] sm:$0xff] %v434
        %454 = vst [vmem:[#allocation2 + $0x20] sm:$0xff] %v435
        %455 = vst [vmem:[#allocation2 + $0x30] sm:$0xff] %v436
        %456 = vst [vmem:[#allocation2 + $0x40] sm:$0xff] %v437
        %457 = vst [vmem:[#allocation2 + $0x50] sm:$0xff] %v438
        %458 = vst [vmem:[#allocation2 + $0x60] sm:$0xff] %v439
        %459 = vst [vmem:[#allocation2 + $0x70] sm:$0xff] %v440
        %s460 = scalar_lea.vmem [#allocation2], 128
        %461 = vst [vmem:[%s460] sm:$0xff] %v451
        %462 = vst [vmem:[#allocation2 + $0x8] sm:$0x1] 0.0
        %463 = vst [vmem:[#allocation2 + $0x18] sm:$0x1] 0.0
        %464 = vst [vmem:[#allocation2 + $0x28] sm:$0x1] 0.0
        %465 = vst [vmem:[#allocation2 + $0x38] sm:$0x1] 0.0
        %466 = vst [vmem:[#allocation2 + $0x48] sm:$0x1] 0.0
        %467 = vst [vmem:[#allocation2 + $0x58] sm:$0x1] 0.0
        %468 = vst [vmem:[#allocation2 + $0x68] sm:$0x1] 0.0
        %469 = vst [vmem:[#allocation2 + $0x78] sm:$0x1] 0.0
        %470 = vst [vmem:[#allocation2 + $0x88] sm:$0x1] 0.0
        %v471 = vld [vmem:[#allocation2] sm:$0xff]
        %v472 = vld [vmem:[#allocation2 + $0x10] sm:$0xff]
        %v473 = vld [vmem:[#allocation2 + $0x20] sm:$0xff]
        %v474 = vld [vmem:[#allocation2 + $0x30] sm:$0xff]
        %v475 = vld [vmem:[#allocation2 + $0x40] sm:$0xff]
        %v476 = vld [vmem:[#allocation2 + $0x50] sm:$0xff]
        %v477 = vld [vmem:[#allocation2 + $0x60] sm:$0xff]
        %v478 = vld [vmem:[#allocation2 + $0x70] sm:$0xff]
        %v479 = vpack.c.bf16 %v472, %v471
        %v480 = vpack.c.bf16 %v474, %v473
        %v481 = vpack.c.bf16 %v476, %v475
        %v482 = vpack.c.bf16 %v478, %v477
        %v483 = vld [vmem:[#allocation2 + $0x1] sm:$0xff]
        %v484 = vld [vmem:[#allocation2 + $0x11] sm:$0xff]
        %v485 = vld [vmem:[#allocation2 + $0x21] sm:$0xff]
        %v486 = vld [vmem:[#allocation2 + $0x31] sm:$0xff]
        %v487 = vld [vmem:[#allocation2 + $0x41] sm:$0xff]
        %v488 = vld [vmem:[#allocation2 + $0x51] sm:$0xff]
        %v489 = vld [vmem:[#allocation2 + $0x61] sm:$0xff]
        %v490 = vld [vmem:[#allocation2 + $0x71] sm:$0xff]
        %v491 = vpack.c.bf16 %v484, %v483
        %v492 = vpack.c.bf16 %v486, %v485
        %v493 = vpack.c.bf16 %v488, %v487
        %v494 = vpack.c.bf16 %v490, %v489
        %s495 = scalar_lea.vmem [#allocation2], 16
        %v496 = vld [vmem:[%s495] sm:$0xff]
        %v497 = vld [vmem:[%s495 + $0x10] sm:$0xff]
        %v498 = vld [vmem:[%s495 + $0x20] sm:$0xff]
        %v499 = vld [vmem:[%s495 + $0x30] sm:$0xff]
        %v500 = vld [vmem:[%s495 + $0x40] sm:$0xff]
        %v501 = vld [vmem:[%s495 + $0x50] sm:$0xff]
        %v502 = vld [vmem:[%s495 + $0x60] sm:$0xff]
        %v503 = vld [vmem:[%s495 + $0x70] sm:$0xff]
        %v504 = vpack.c.bf16 %v497, %v496
        %v505 = vpack.c.bf16 %v499, %v498
        %v506 = vpack.c.bf16 %v501, %v500
        %v507 = vpack.c.bf16 %v503, %v502
        %v508 = vld [vmem:[%s495 + $0x1] sm:$0xff]
        %v509 = vld [vmem:[%s495 + $0x11] sm:$0xff]
        %v510 = vld [vmem:[%s495 + $0x21] sm:$0xff]
        %v511 = vld [vmem:[%s495 + $0x31] sm:$0xff]
        %v512 = vld [vmem:[%s495 + $0x41] sm:$0xff]
        %v513 = vld [vmem:[%s495 + $0x51] sm:$0xff]
        %v514 = vld [vmem:[%s495 + $0x61] sm:$0xff]
        %v515 = vld [vmem:[%s495 + $0x71] sm:$0xff]
        %v516 = vpack.c.bf16 %v509, %v508
        %v517 = vpack.c.bf16 %v511, %v510
        %v518 = vpack.c.bf16 %v513, %v512
        %v519 = vpack.c.bf16 %v515, %v514
        %v520 = vld [vmem:[#allocation3] sm:$0xff]
        %v521 = vld [vmem:[#allocation3 + $0x8] sm:$0xff]
        %v522 = vld [vmem:[#allocation3 + $0x10] sm:$0xff]
        %v523 = vld [vmem:[#allocation3 + $0x18] sm:$0xff]
        %v524 = vld [vmem:[#allocation3 + $0x20] sm:$0xff]
        %v525 = vld [vmem:[#allocation3 + $0x28] sm:$0xff]
        %v526 = vld [vmem:[#allocation3 + $0x30] sm:$0xff]
        %v527 = vld [vmem:[#allocation3 + $0x38] sm:$0xff]
        %v528 = vld [vmem:[#allocation3 + $0x40] sm:$0xff]
        %v529 = vld [vmem:[#allocation3 + $0x48] sm:$0xff]
        %v530 = vld [vmem:[#allocation3 + $0x50] sm:$0xff]
        %v531 = vld [vmem:[#allocation3 + $0x58] sm:$0xff]
        %v532 = vld [vmem:[#allocation3 + $0x60] sm:$0xff]
        %v533 = vld [vmem:[#allocation3 + $0x68] sm:$0xff]
        %v534 = vld [vmem:[#allocation3 + $0x70] sm:$0xff]
        %v535 = vld [vmem:[#allocation3 + $0x78] sm:$0xff]
        %s536 = scalar_lea.vmem [#allocation3], 128
        %v537 = vld [vmem:[%s536] sm:$0xff]
        %v538 = vld [vmem:[%s536 + $0x8] sm:$0xff]
        %v539 = vld [vmem:[%s536 + $0x10] sm:$0xff]
        %v540 = vld [vmem:[%s536 + $0x18] sm:$0xff]
        %v541 = vld [vmem:[%s536 + $0x20] sm:$0xff]
        %v542 = vld [vmem:[%s536 + $0x28] sm:$0xff]
        %v543 = vld [vmem:[%s536 + $0x30] sm:$0xff]
        %v544 = vld [vmem:[%s536 + $0x38] sm:$0xff]
        %v545 = vld [vmem:[%s536 + $0x40] sm:$0xff]
        %v546 = vld [vmem:[%s536 + $0x48] sm:$0xff]
        %v547 = vld [vmem:[%s536 + $0x50] sm:$0xff]
        %v548 = vld [vmem:[%s536 + $0x58] sm:$0xff]
        %v549 = vld [vmem:[%s536 + $0x60] sm:$0xff]
        %v550 = vld [vmem:[%s536 + $0x68] sm:$0xff]
        %v551 = vld [vmem:[%s536 + $0x70] sm:$0xff]
        %v552 = vld [vmem:[%s536 + $0x78] sm:$0xff]
        %v569 = vunpack.c.l.b16 %v537
        %v570 = vunpack.c.h.b16 %v537
        %v571 = vunpack.c.l.b16 %v538
        %v572 = vunpack.c.h.b16 %v538
        %v573 = vunpack.c.l.b16 %v539
        %v574 = vunpack.c.h.b16 %v539
        %v575 = vunpack.c.l.b16 %v540
        %v576 = vunpack.c.h.b16 %v540
        %v577 = vunpack.c.l.b16 %v541
        %v578 = vunpack.c.h.b16 %v541
        %v579 = vunpack.c.l.b16 %v542
        %v580 = vunpack.c.h.b16 %v542
        %v581 = vunpack.c.l.b16 %v543
        %v582 = vunpack.c.h.b16 %v543
        %v583 = vunpack.c.l.b16 %v544
        %v584 = vunpack.c.h.b16 %v544
        %v585 = vunpack.c.l.b16 %v545
        %v586 = vunpack.c.h.b16 %v545
        %v587 = vunpack.c.l.b16 %v546
        %v588 = vunpack.c.h.b16 %v546
        %v589 = vunpack.c.l.b16 %v547
        %v590 = vunpack.c.h.b16 %v547
        %v591 = vunpack.c.l.b16 %v548
        %v592 = vunpack.c.h.b16 %v548
        %v593 = vunpack.c.l.b16 %v549
        %v594 = vunpack.c.h.b16 %v549
        %v595 = vunpack.c.l.b16 %v550
        %v596 = vunpack.c.h.b16 %v550
        %v597 = vunpack.c.l.b16 %v551
        %v598 = vunpack.c.h.b16 %v551
        %v599 = vunpack.c.l.b16 %v552
        %v600 = vunpack.c.h.b16 %v552
        %v601 = vpack.c.b16 %v571, %v569
        %v602 = vpack.c.b16 %v572, %v570
        %v603 = vpack.c.b16 %v575, %v573
        %v604 = vpack.c.b16 %v576, %v574
        %v605 = vpack.c.b16 %v579, %v577
        %v606 = vpack.c.b16 %v580, %v578
        %v607 = vpack.c.b16 %v583, %v581
        %v608 = vpack.c.b16 %v584, %v582
        %v609 = vpack.c.b16 %v587, %v585
        %v610 = vpack.c.b16 %v588, %v586
        %v611 = vpack.c.b16 %v591, %v589
        %v612 = vpack.c.b16 %v592, %v590
        %v613 = vpack.c.b16 %v595, %v593
        %v614 = vpack.c.b16 %v596, %v594
        %v615 = vpack.c.b16 %v599, %v597
        %v616 = vpack.c.b16 %v600, %v598
        %633 = vmatprep.subr.bf16.mxu0 %v602
        %634 = vmatpush1.bf16.msra.mxu0 %v601
        %635 = vmatprep.subr.bf16.mxu0 %v604
        %636 = vmatpush1.bf16.msra.mxu0 %v603
        %637 = vmatprep.subr.bf16.mxu0 %v606
        %638 = vmatpush1.bf16.msra.mxu0 %v605
        %639 = vmatprep.subr.bf16.mxu0 %v608
        %640 = vmatpush1.bf16.msra.mxu0 %v607
        %641 = vmatprep.subr.bf16.mxu0 %v610
        %642 = vmatpush1.bf16.msra.mxu0 %v609
        %643 = vmatprep.subr.bf16.mxu0 %v612
        %644 = vmatpush1.bf16.msra.mxu0 %v611
        %645 = vmatprep.subr.bf16.mxu0 %v614
        %646 = vmatpush1.bf16.msra.mxu0 %v613
        %647 = vmatprep.subr.bf16.mxu0 %v616
        %648 = vmatpush1.bf16.msra.mxu0 %v615
        %649 = vmatprep.subr.bf16.mxu0 0
        %650 = vmatpush1.bf16.msra.mxu0 0
        %651 = vmatprep.subr.bf16.mxu0 0
        %652 = vmatpush1.bf16.msra.mxu0 0
        %653 = vmatprep.subr.bf16.mxu0 0
        %654 = vmatpush1.bf16.msra.mxu0 0
        %655 = vmatprep.subr.bf16.mxu0 0
        %656 = vmatpush1.bf16.msra.mxu0 0
        %657 = vmatprep.subr.bf16.mxu0 0
        %658 = vmatpush1.bf16.msra.mxu0 0
        %659 = vmatprep.subr.bf16.mxu0 0
        %660 = vmatpush1.bf16.msra.mxu0 0
        %661 = vmatprep.subr.bf16.mxu0 0
        %662 = vmatpush1.bf16.msra.mxu0 0
        %663 = vmatprep.subr.bf16.mxu0 0
        %664 = vmatpush1.bf16.msra.mxu0 0
        %665 = vmatprep.mubr.bf16.mxu0 0
        %666 = vmatmul.mubr.bf16.gmra.mrb[0].mxu0 %v491
        %v667 = vpop.f32.mrb[0].mxu0
        %v668 = vadd.f32 0.0, %v667
        %v669 = vpop.f32.mrb[0].mxu0
        %v670 = vadd.f32 0.0, %v669
        %v671 = vpop.f32.mrb[0].mxu0
        %v672 = vadd.f32 0.0, %v671
        %v673 = vpop.f32.mrb[0].mxu0
        %v674 = vadd.f32 0.0, %v673
        %675 = vmatprep.mubr.bf16.mxu0 0
        %676 = vmatmul.mubr.bf16.gmra.mrb[0].mxu0 %v492
        %v677 = vpop.f32.mrb[0].mxu0
        %v678 = vadd.f32 0.0, %v677
        %v679 = vpop.f32.mrb[0].mxu0
        %v680 = vadd.f32 0.0, %v679
        %v681 = vpop.f32.mrb[0].mxu0
        %v682 = vadd.f32 0.0, %v681
        %v683 = vpop.f32.mrb[0].mxu0
        %v684 = vadd.f32 0.0, %v683
        %685 = vmatprep.mubr.bf16.mxu0 0
        %686 = vmatmul.mubr.bf16.gmra.mrb[0].mxu0 %v493
        %v687 = vpop.f32.mrb[0].mxu0
        %v688 = vadd.f32 0.0, %v687
        %v689 = vpop.f32.mrb[0].mxu0
        %v690 = vadd.f32 0.0, %v689
        %v691 = vpop.f32.mrb[0].mxu0
        %v692 = vadd.f32 0.0, %v691
        %v693 = vpop.f32.mrb[0].mxu0
        %v694 = vadd.f32 0.0, %v693
        %695 = vmatprep.mubr.bf16.mxu0 0
        %696 = vmatmul.mubr.bf16.gmra.mrb[0].mxu0 %v494
        %v697 = vpop.f32.mrb[0].mxu0
        %v698 = vadd.f32 0.0, %v697
        %v699 = vpop.f32.mrb[0].mxu0
        %v700 = vadd.f32 0.0, %v699
        %v701 = vpop.f32.mrb[0].mxu0
        %v702 = vadd.f32 0.0, %v701
        %v703 = vpop.f32.mrb[0].mxu0
        %v704 = vadd.f32 0.0, %v703
        %705 = vdwg.mxu0
        %v722 = vunpack.c.l.b16 %v520
        %v723 = vunpack.c.h.b16 %v520
        %v724 = vunpack.c.l.b16 %v521
        %v725 = vunpack.c.h.b16 %v521
        %v726 = vunpack.c.l.b16 %v522
        %v727 = vunpack.c.h.b16 %v522
        %v728 = vunpack.c.l.b16 %v523
        %v729 = vunpack.c.h.b16 %v523
        %v730 = vunpack.c.l.b16 %v524
        %v731 = vunpack.c.h.b16 %v524
        %v732 = vunpack.c.l.b16 %v525
        %v733 = vunpack.c.h.b16 %v525
        %v734 = vunpack.c.l.b16 %v526
        %v735 = vunpack.c.h.b16 %v526
        %v736 = vunpack.c.l.b16 %v527
        %v737 = vunpack.c.h.b16 %v527
        %v738 = vunpack.c.l.b16 %v528
        %v739 = vunpack.c.h.b16 %v528
        %v740 = vunpack.c.l.b16 %v529
        %v741 = vunpack.c.h.b16 %v529
        %v742 = vunpack.c.l.b16 %v530
        %v743 = vunpack.c.h.b16 %v530
        %v744 = vunpack.c.l.b16 %v531
        %v745 = vunpack.c.h.b16 %v531
        %v746 = vunpack.c.l.b16 %v532
        %v747 = vunpack.c.h.b16 %v532
        %v748 = vunpack.c.l.b16 %v533
        %v749 = vunpack.c.h.b16 %v533
        %v750 = vunpack.c.l.b16 %v534
        %v751 = vunpack.c.h.b16 %v534
        %v752 = vunpack.c.l.b16 %v535
        %v753 = vunpack.c.h.b16 %v535
        %v754 = vpack.c.b16 %v724, %v722
        %v755 = vpack.c.b16 %v725, %v723
        %v756 = vpack.c.b16 %v728, %v726
        %v757 = vpack.c.b16 %v729, %v727
        %v758 = vpack.c.b16 %v732, %v730
        %v759 = vpack.c.b16 %v733, %v731
        %v760 = vpack.c.b16 %v736, %v734
        %v761 = vpack.c.b16 %v737, %v735
        %v762 = vpack.c.b16 %v740, %v738
        %v763 = vpack.c.b16 %v741, %v739
        %v764 = vpack.c.b16 %v744, %v742
        %v765 = vpack.c.b16 %v745, %v743
        %v766 = vpack.c.b16 %v748, %v746
        %v767 = vpack.c.b16 %v749, %v747
        %v768 = vpack.c.b16 %v752, %v750
        %v769 = vpack.c.b16 %v753, %v751
        %786 = vmatprep.subr.bf16.mxu0 %v755
        %787 = vmatpush1.bf16.msra.mxu0 %v754
        %788 = vmatprep.subr.bf16.mxu0 %v757
        %789 = vmatpush1.bf16.msra.mxu0 %v756
        %790 = vmatprep.subr.bf16.mxu0 %v759
        %791 = vmatpush1.bf16.msra.mxu0 %v758
        %792 = vmatprep.subr.bf16.mxu0 %v761
        %793 = vmatpush1.bf16.msra.mxu0 %v760
        %794 = vmatprep.subr.bf16.mxu0 %v763
        %795 = vmatpush1.bf16.msra.mxu0 %v762
        %796 = vmatprep.subr.bf16.mxu0 %v765
        %797 = vmatpush1.bf16.msra.mxu0 %v764
        %798 = vmatprep.subr.bf16.mxu0 %v767
        %799 = vmatpush1.bf16.msra.mxu0 %v766
        %800 = vmatprep.subr.bf16.mxu0 %v769
        %801 = vmatpush1.bf16.msra.mxu0 %v768
        %802 = vmatprep.subr.bf16.mxu0 0
        %803 = vmatpush1.bf16.msra.mxu0 0
        %804 = vmatprep.subr.bf16.mxu0 0
        %805 = vmatpush1.bf16.msra.mxu0 0
        %806 = vmatprep.subr.bf16.mxu0 0
        %807 = vmatpush1.bf16.msra.mxu0 0
        %808 = vmatprep.subr.bf16.mxu0 0
        %809 = vmatpush1.bf16.msra.mxu0 0
        %810 = vmatprep.subr.bf16.mxu0 0
        %811 = vmatpush1.bf16.msra.mxu0 0
        %812 = vmatprep.subr.bf16.mxu0 0
        %813 = vmatpush1.bf16.msra.mxu0 0
        %814 = vmatprep.subr.bf16.mxu0 0
        %815 = vmatpush1.bf16.msra.mxu0 0
        %816 = vmatprep.subr.bf16.mxu0 0
        %817 = vmatpush1.bf16.msra.mxu0 0
        %818 = vmatprep.mubr.bf16.mxu0 0
        %819 = vmatmul.mubr.bf16.gmra.mrb[0].mxu0 %v479
        %v820 = vpop.f32.mrb[0].mxu0
        %v821 = vadd.f32 %v668, %v820
        %v822 = vpop.f32.mrb[0].mxu0
        %v823 = vadd.f32 %v670, %v822
        %v824 = vpop.f32.mrb[0].mxu0
        %v825 = vadd.f32 %v672, %v824
        %v826 = vpop.f32.mrb[0].mxu0
        %v827 = vadd.f32 %v674, %v826
        %828 = vmatprep.mubr.bf16.mxu0 0
        %829 = vmatmul.mubr.bf16.gmra.mrb[0].mxu0 %v480
        %v830 = vpop.f32.mrb[0].mxu0
        %v831 = vadd.f32 %v678, %v830
        %v832 = vpop.f32.mrb[0].mxu0
        %v833 = vadd.f32 %v680, %v832
        %v834 = vpop.f32.mrb[0].mxu0
        %v835 = vadd.f32 %v682, %v834
        %v836 = vpop.f32.mrb[0].mxu0
        %v837 = vadd.f32 %v684, %v836
        %838 = vmatprep.mubr.bf16.mxu0 0
        %839 = vmatmul.mubr.bf16.gmra.mrb[0].mxu0 %v481
        %v840 = vpop.f32.mrb[0].mxu0
        %v841 = vadd.f32 %v688, %v840
        %v842 = vpop.f32.mrb[0].mxu0
        %v843 = vadd.f32 %v690, %v842
        %v844 = vpop.f32.mrb[0].mxu0
        %v845 = vadd.f32 %v692, %v844
        %v846 = vpop.f32.mrb[0].mxu0
        %v847 = vadd.f32 %v694, %v846
        %848 = vmatprep.mubr.bf16.mxu0 0
        %849 = vmatmul.mubr.bf16.gmra.mrb[0].mxu0 %v482
        %v850 = vpop.f32.mrb[0].mxu0
        %v851 = vadd.f32 %v698, %v850
        %v852 = vpop.f32.mrb[0].mxu0
        %v853 = vadd.f32 %v700, %v852
        %v854 = vpop.f32.mrb[0].mxu0
        %v855 = vadd.f32 %v702, %v854
        %v856 = vpop.f32.mrb[0].mxu0
        %v857 = vadd.f32 %v704, %v856
        %858 = vdwg.mxu0
        %s859 = scalar_lea.vmem [#allocation3], 256
        %v860 = vld [vmem:[%s859] sm:$0xff]
        %v861 = vld [vmem:[%s859 + $0x8] sm:$0xff]
        %v862 = vld [vmem:[%s859 + $0x10] sm:$0xff]
        %v863 = vld [vmem:[%s859 + $0x18] sm:$0xff]
        %v864 = vld [vmem:[%s859 + $0x20] sm:$0xff]
        %v865 = vld [vmem:[%s859 + $0x28] sm:$0xff]
        %v866 = vld [vmem:[%s859 + $0x30] sm:$0xff]
        %v867 = vld [vmem:[%s859 + $0x38] sm:$0xff]
        %v868 = vld [vmem:[%s859 + $0x40] sm:$0xff]
        %v869 = vld [vmem:[%s859 + $0x48] sm:$0xff]
        %v870 = vld [vmem:[%s859 + $0x50] sm:$0xff]
        %v871 = vld [vmem:[%s859 + $0x58] sm:$0xff]
        %v872 = vld [vmem:[%s859 + $0x60] sm:$0xff]
        %v873 = vld [vmem:[%s859 + $0x68] sm:$0xff]
        %v874 = vld [vmem:[%s859 + $0x70] sm:$0xff]
        %v875 = vld [vmem:[%s859 + $0x78] sm:$0xff]
        %s876 = scalar_lea.vmem [#allocation3], 384
        %v877 = vld [vmem:[%s876] sm:$0xff]
        %v878 = vld [vmem:[%s876 + $0x8] sm:$0xff]
        %v879 = vld [vmem:[%s876 + $0x10] sm:$0xff]
        %v880 = vld [vmem:[%s876 + $0x18] sm:$0xff]
        %v881 = vld [vmem:[%s876 + $0x20] sm:$0xff]
        %v882 = vld [vmem:[%s876 + $0x28] sm:$0xff]
        %v883 = vld [vmem:[%s876 + $0x30] sm:$0xff]
        %v884 = vld [vmem:[%s876 + $0x38] sm:$0xff]
        %v885 = vld [vmem:[%s876 + $0x40] sm:$0xff]
        %v886 = vld [vmem:[%s876 + $0x48] sm:$0xff]
        %v887 = vld [vmem:[%s876 + $0x50] sm:$0xff]
        %v888 = vld [vmem:[%s876 + $0x58] sm:$0xff]
        %v889 = vld [vmem:[%s876 + $0x60] sm:$0xff]
        %v890 = vld [vmem:[%s876 + $0x68] sm:$0xff]
        %v891 = vld [vmem:[%s876 + $0x70] sm:$0xff]
        %v892 = vld [vmem:[%s876 + $0x78] sm:$0xff]
        %v909 = vunpack.c.l.b16 %v877
        %v910 = vunpack.c.h.b16 %v877
        %v911 = vunpack.c.l.b16 %v878
        %v912 = vunpack.c.h.b16 %v878
        %v913 = vunpack.c.l.b16 %v879
        %v914 = vunpack.c.h.b16 %v879
        %v915 = vunpack.c.l.b16 %v880
        %v916 = vunpack.c.h.b16 %v880
        %v917 = vunpack.c.l.b16 %v881
        %v918 = vunpack.c.h.b16 %v881
        %v919 = vunpack.c.l.b16 %v882
        %v920 = vunpack.c.h.b16 %v882
        %v921 = vunpack.c.l.b16 %v883
        %v922 = vunpack.c.h.b16 %v883
        %v923 = vunpack.c.l.b16 %v884
        %v924 = vunpack.c.h.b16 %v884
        %v925 = vunpack.c.l.b16 %v885
        %v926 = vunpack.c.h.b16 %v885
        %v927 = vunpack.c.l.b16 %v886
        %v928 = vunpack.c.h.b16 %v886
        %v929 = vunpack.c.l.b16 %v887
        %v930 = vunpack.c.h.b16 %v887
        %v931 = vunpack.c.l.b16 %v888
        %v932 = vunpack.c.h.b16 %v888
        %v933 = vunpack.c.l.b16 %v889
        %v934 = vunpack.c.h.b16 %v889
        %v935 = vunpack.c.l.b16 %v890
        %v936 = vunpack.c.h.b16 %v890
        %v937 = vunpack.c.l.b16 %v891
        %v938 = vunpack.c.h.b16 %v891
        %v939 = vunpack.c.l.b16 %v892
        %v940 = vunpack.c.h.b16 %v892
        %v941 = vpack.c.b16 %v911, %v909
        %v942 = vpack.c.b16 %v912, %v910
        %v943 = vpack.c.b16 %v915, %v913
        %v944 = vpack.c.b16 %v916, %v914
        %v945 = vpack.c.b16 %v919, %v917
        %v946 = vpack.c.b16 %v920, %v918
        %v947 = vpack.c.b16 %v923, %v921
        %v948 = vpack.c.b16 %v924, %v922
        %v949 = vpack.c.b16 %v927, %v925
        %v950 = vpack.c.b16 %v928, %v926
        %v951 = vpack.c.b16 %v931, %v929
        %v952 = vpack.c.b16 %v932, %v930
        %v953 = vpack.c.b16 %v935, %v933
        %v954 = vpack.c.b16 %v936, %v934
        %v955 = vpack.c.b16 %v939, %v937
        %v956 = vpack.c.b16 %v940, %v938
        %973 = vmatprep.subr.bf16.mxu0 %v942
        %974 = vmatpush1.bf16.msra.mxu0 %v941
        %975 = vmatprep.subr.bf16.mxu0 %v944
        %976 = vmatpush1.bf16.msra.mxu0 %v943
        %977 = vmatprep.subr.bf16.mxu0 %v946
        %978 = vmatpush1.bf16.msra.mxu0 %v945
        %979 = vmatprep.subr.bf16.mxu0 %v948
        %980 = vmatpush1.bf16.msra.mxu0 %v947
        %981 = vmatprep.subr.bf16.mxu0 %v950
        %982 = vmatpush1.bf16.msra.mxu0 %v949
        %983 = vmatprep.subr.bf16.mxu0 %v952
        %984 = vmatpush1.bf16.msra.mxu0 %v951
        %985 = vmatprep.subr.bf16.mxu0 %v954
        %986 = vmatpush1.bf16.msra.mxu0 %v953
        %987 = vmatprep.subr.bf16.mxu0 %v956
        %988 = vmatpush1.bf16.msra.mxu0 %v955
        %989 = vmatprep.subr.bf16.mxu0 0
        %990 = vmatpush1.bf16.msra.mxu0 0
        %991 = vmatprep.subr.bf16.mxu0 0
        %992 = vmatpush1.bf16.msra.mxu0 0
        %993 = vmatprep.subr.bf16.mxu0 0
        %994 = vmatpush1.bf16.msra.mxu0 0
        %995 = vmatprep.subr.bf16.mxu0 0
        %996 = vmatpush1.bf16.msra.mxu0 0
        %997 = vmatprep.subr.bf16.mxu0 0
        %998 = vmatpush1.bf16.msra.mxu0 0
        %999 = vmatprep.subr.bf16.mxu0 0
        %1000 = vmatpush1.bf16.msra.mxu0 0
        %1001 = vmatprep.subr.bf16.mxu0 0
        %1002 = vmatpush1.bf16.msra.mxu0 0
        %1003 = vmatprep.subr.bf16.mxu0 0
        %1004 = vmatpush1.bf16.msra.mxu0 0
        %1005 = vmatprep.mubr.bf16.mxu0 0
        %1006 = vmatmul.mubr.bf16.gmra.mrb[0].mxu0 %v491
        %v1007 = vpop.f32.mrb[0].mxu0
        %v1008 = vadd.f32 0.0, %v1007
        %v1009 = vpop.f32.mrb[0].mxu0
        %v1010 = vadd.f32 0.0, %v1009
        %v1011 = vpop.f32.mrb[0].mxu0
        %v1012 = vadd.f32 0.0, %v1011
        %v1013 = vpop.f32.mrb[0].mxu0
        %v1014 = vadd.f32 0.0, %v1013
        %1015 = vmatprep.mubr.bf16.mxu0 0
        %1016 = vmatmul.mubr.bf16.gmra.mrb[0].mxu0 %v492
        %v1017 = vpop.f32.mrb[0].mxu0
        %v1018 = vadd.f32 0.0, %v1017
        %v1019 = vpop.f32.mrb[0].mxu0
        %v1020 = vadd.f32 0.0, %v1019
        %v1021 = vpop.f32.mrb[0].mxu0
        %v1022 = vadd.f32 0.0, %v1021
        %v1023 = vpop.f32.mrb[0].mxu0
        %v1024 = vadd.f32 0.0, %v1023
        %1025 = vmatprep.mubr.bf16.mxu0 0
        %1026 = vmatmul.mubr.bf16.gmra.mrb[0].mxu0 %v493
        %v1027 = vpop.f32.mrb[0].mxu0
        %v1028 = vadd.f32 0.0, %v1027
        %v1029 = vpop.f32.mrb[0].mxu0
        %v1030 = vadd.f32 0.0, %v1029
        %v1031 = vpop.f32.mrb[0].mxu0
        %v1032 = vadd.f32 0.0, %v1031
        %v1033 = vpop.f32.mrb[0].mxu0
        %v1034 = vadd.f32 0.0, %v1033
        %1035 = vmatprep.mubr.bf16.mxu0 0
        %1036 = vmatmul.mubr.bf16.gmra.mrb[0].mxu0 %v494
        %v1037 = vpop.f32.mrb[0].mxu0
        %v1038 = vadd.f32 0.0, %v1037
        %v1039 = vpop.f32.mrb[0].mxu0
        %v1040 = vadd.f32 0.0, %v1039
        %v1041 = vpop.f32.mrb[0].mxu0
        %v1042 = vadd.f32 0.0, %v1041
        %v1043 = vpop.f32.mrb[0].mxu0
        %v1044 = vadd.f32 0.0, %v1043
        %1045 = vdwg.mxu0
        %v1062 = vunpack.c.l.b16 %v860
        %v1063 = vunpack.c.h.b16 %v860
        %v1064 = vunpack.c.l.b16 %v861
        %v1065 = vunpack.c.h.b16 %v861
        %v1066 = vunpack.c.l.b16 %v862
        %v1067 = vunpack.c.h.b16 %v862
        %v1068 = vunpack.c.l.b16 %v863
        %v1069 = vunpack.c.h.b16 %v863
        %v1070 = vunpack.c.l.b16 %v864
        %v1071 = vunpack.c.h.b16 %v864
        %v1072 = vunpack.c.l.b16 %v865
        %v1073 = vunpack.c.h.b16 %v865
        %v1074 = vunpack.c.l.b16 %v866
        %v1075 = vunpack.c.h.b16 %v866
        %v1076 = vunpack.c.l.b16 %v867
        %v1077 = vunpack.c.h.b16 %v867
        %v1078 = vunpack.c.l.b16 %v868
        %v1079 = vunpack.c.h.b16 %v868
        %v1080 = vunpack.c.l.b16 %v869
        %v1081 = vunpack.c.h.b16 %v869
        %v1082 = vunpack.c.l.b16 %v870
        %v1083 = vunpack.c.h.b16 %v870
        %v1084 = vunpack.c.l.b16 %v871
        %v1085 = vunpack.c.h.b16 %v871
        %v1086 = vunpack.c.l.b16 %v872
        %v1087 = vunpack.c.h.b16 %v872
        %v1088 = vunpack.c.l.b16 %v873
        %v1089 = vunpack.c.h.b16 %v873
        %v1090 = vunpack.c.l.b16 %v874
        %v1091 = vunpack.c.h.b16 %v874
        %v1092 = vunpack.c.l.b16 %v875
        %v1093 = vunpack.c.h.b16 %v875
        %v1094 = vpack.c.b16 %v1064, %v1062
        %v1095 = vpack.c.b16 %v1065, %v1063
        %v1096 = vpack.c.b16 %v1068, %v1066
        %v1097 = vpack.c.b16 %v1069, %v1067
        %v1098 = vpack.c.b16 %v1072, %v1070
        %v1099 = vpack.c.b16 %v1073, %v1071
        %v1100 = vpack.c.b16 %v1076, %v1074
        %v1101 = vpack.c.b16 %v1077, %v1075
        %v1102 = vpack.c.b16 %v1080, %v1078
        %v1103 = vpack.c.b16 %v1081, %v1079
        %v1104 = vpack.c.b16 %v1084, %v1082
        %v1105 = vpack.c.b16 %v1085, %v1083
        %v1106 = vpack.c.b16 %v1088, %v1086
        %v1107 = vpack.c.b16 %v1089, %v1087
        %v1108 = vpack.c.b16 %v1092, %v1090
        %v1109 = vpack.c.b16 %v1093, %v1091
        %1126 = vmatprep.subr.bf16.mxu0 %v1095
        %1127 = vmatpush1.bf16.msra.mxu0 %v1094
        %1128 = vmatprep.subr.bf16.mxu0 %v1097
        %1129 = vmatpush1.bf16.msra.mxu0 %v1096
        %1130 = vmatprep.subr.bf16.mxu0 %v1099
        %1131 = vmatpush1.bf16.msra.mxu0 %v1098
        %1132 = vmatprep.subr.bf16.mxu0 %v1101
        %1133 = vmatpush1.bf16.msra.mxu0 %v1100
        %1134 = vmatprep.subr.bf16.mxu0 %v1103
        %1135 = vmatpush1.bf16.msra.mxu0 %v1102
        %1136 = vmatprep.subr.bf16.mxu0 %v1105
        %1137 = vmatpush1.bf16.msra.mxu0 %v1104
        %1138 = vmatprep.subr.bf16.mxu0 %v1107
        %1139 = vmatpush1.bf16.msra.mxu0 %v1106
        %1140 = vmatprep.subr.bf16.mxu0 %v1109
        %1141 = vmatpush1.bf16.msra.mxu0 %v1108
        %1142 = vmatprep.subr.bf16.mxu0 0
        %1143 = vmatpush1.bf16.msra.mxu0 0
        %1144 = vmatprep.subr.bf16.mxu0 0
        %1145 = vmatpush1.bf16.msra.mxu0 0
        %1146 = vmatprep.subr.bf16.mxu0 0
        %1147 = vmatpush1.bf16.msra.mxu0 0
        %1148 = vmatprep.subr.bf16.mxu0 0
        %1149 = vmatpush1.bf16.msra.mxu0 0
        %1150 = vmatprep.subr.bf16.mxu0 0
        %1151 = vmatpush1.bf16.msra.mxu0 0
        %1152 = vmatprep.subr.bf16.mxu0 0
        %1153 = vmatpush1.bf16.msra.mxu0 0
        %1154 = vmatprep.subr.bf16.mxu0 0
        %1155 = vmatpush1.bf16.msra.mxu0 0
        %1156 = vmatprep.subr.bf16.mxu0 0
        %1157 = vmatpush1.bf16.msra.mxu0 0
        %1158 = vmatprep.mubr.bf16.mxu0 0
        %1159 = vmatmul.mubr.bf16.gmra.mrb[0].mxu0 %v479
        %v1160 = vpop.f32.mrb[0].mxu0
        %v1161 = vadd.f32 %v1008, %v1160
        %v1162 = vpop.f32.mrb[0].mxu0
        %v1163 = vadd.f32 %v1010, %v1162
        %v1164 = vpop.f32.mrb[0].mxu0
        %v1165 = vadd.f32 %v1012, %v1164
        %v1166 = vpop.f32.mrb[0].mxu0
        %v1167 = vadd.f32 %v1014, %v1166
        %1168 = vmatprep.mubr.bf16.mxu0 0
        %1169 = vmatmul.mubr.bf16.gmra.mrb[0].mxu0 %v480
        %v1170 = vpop.f32.mrb[0].mxu0
        %v1171 = vadd.f32 %v1018, %v1170
        %v1172 = vpop.f32.mrb[0].mxu0
        %v1173 = vadd.f32 %v1020, %v1172
        %v1174 = vpop.f32.mrb[0].mxu0
        %v1175 = vadd.f32 %v1022, %v1174
        %v1176 = vpop.f32.mrb[0].mxu0
        %v1177 = vadd.f32 %v1024, %v1176
        %1178 = vmatprep.mubr.bf16.mxu0 0
        %1179 = vmatmul.mubr.bf16.gmra.mrb[0].mxu0 %v481
        %v1180 = vpop.f32.mrb[0].mxu0
        %v1181 = vadd.f32 %v1028, %v1180
        %v1182 = vpop.f32.mrb[0].mxu0
        %v1183 = vadd.f32 %v1030, %v1182
        %v1184 = vpop.f32.mrb[0].mxu0
        %v1185 = vadd.f32 %v1032, %v1184
        %v1186 = vpop.f32.mrb[0].mxu0
        %v1187 = vadd.f32 %v1034, %v1186
        %1188 = vmatprep.mubr.bf16.mxu0 0
        %1189 = vmatmul.mubr.bf16.gmra.mrb[0].mxu0 %v482
        %v1190 = vpop.f32.mrb[0].mxu0
        %v1191 = vadd.f32 %v1038, %v1190
        %v1192 = vpop.f32.mrb[0].mxu0
        %v1193 = vadd.f32 %v1040, %v1192
        %v1194 = vpop.f32.mrb[0].mxu0
        %v1195 = vadd.f32 %v1042, %v1194
        %v1196 = vpop.f32.mrb[0].mxu0
        %v1197 = vadd.f32 %v1044, %v1196
        %1198 = vdwg.mxu0
        %s1199 = scalar_lea.vmem [#allocation3], 512
        %v1200 = vld [vmem:[%s1199] sm:$0xff]
        %v1201 = vld [vmem:[%s1199 + $0x8] sm:$0xff]
        %v1202 = vld [vmem:[%s1199 + $0x10] sm:$0xff]
        %v1203 = vld [vmem:[%s1199 + $0x18] sm:$0xff]
        %v1204 = vld [vmem:[%s1199 + $0x20] sm:$0xff]
        %v1205 = vld [vmem:[%s1199 + $0x28] sm:$0xff]
        %v1206 = vld [vmem:[%s1199 + $0x30] sm:$0xff]
        %v1207 = vld [vmem:[%s1199 + $0x38] sm:$0xff]
        %v1208 = vld [vmem:[%s1199 + $0x40] sm:$0xff]
        %v1209 = vld [vmem:[%s1199 + $0x48] sm:$0xff]
        %v1210 = vld [vmem:[%s1199 + $0x50] sm:$0xff]
        %v1211 = vld [vmem:[%s1199 + $0x58] sm:$0xff]
        %v1212 = vld [vmem:[%s1199 + $0x60] sm:$0xff]
        %v1213 = vld [vmem:[%s1199 + $0x68] sm:$0xff]
        %v1214 = vld [vmem:[%s1199 + $0x70] sm:$0xff]
        %v1215 = vld [vmem:[%s1199 + $0x78] sm:$0xff]
        %v1232 = vunpack.c.l.b16 %v1200
        %v1233 = vunpack.c.h.b16 %v1200
        %v1234 = vunpack.c.l.b16 %v1201
        %v1235 = vunpack.c.h.b16 %v1201
        %v1236 = vunpack.c.l.b16 %v1202
        %v1237 = vunpack.c.h.b16 %v1202
        %v1238 = vunpack.c.l.b16 %v1203
        %v1239 = vunpack.c.h.b16 %v1203
        %v1240 = vunpack.c.l.b16 %v1204
        %v1241 = vunpack.c.h.b16 %v1204
        %v1242 = vunpack.c.l.b16 %v1205
        %v1243 = vunpack.c.h.b16 %v1205
        %v1244 = vunpack.c.l.b16 %v1206
        %v1245 = vunpack.c.h.b16 %v1206
        %v1246 = vunpack.c.l.b16 %v1207
        %v1247 = vunpack.c.h.b16 %v1207
        %v1248 = vunpack.c.l.b16 %v1208
        %v1249 = vunpack.c.h.b16 %v1208
        %v1250 = vunpack.c.l.b16 %v1209
        %v1251 = vunpack.c.h.b16 %v1209
        %v1252 = vunpack.c.l.b16 %v1210
        %v1253 = vunpack.c.h.b16 %v1210
        %v1254 = vunpack.c.l.b16 %v1211
        %v1255 = vunpack.c.h.b16 %v1211
        %v1256 = vunpack.c.l.b16 %v1212
        %v1257 = vunpack.c.h.b16 %v1212
        %v1258 = vunpack.c.l.b16 %v1213
        %v1259 = vunpack.c.h.b16 %v1213
        %v1260 = vunpack.c.l.b16 %v1214
        %v1261 = vunpack.c.h.b16 %v1214
        %v1262 = vunpack.c.l.b16 %v1215
        %v1263 = vunpack.c.h.b16 %v1215
        %v1264 = vpack.c.b16 %v1234, %v1232
        %v1265 = vpack.c.b16 %v1235, %v1233
        %v1266 = vpack.c.b16 %v1238, %v1236
        %v1267 = vpack.c.b16 %v1239, %v1237
        %v1268 = vpack.c.b16 %v1242, %v1240
        %v1269 = vpack.c.b16 %v1243, %v1241
        %v1270 = vpack.c.b16 %v1246, %v1244
        %v1271 = vpack.c.b16 %v1247, %v1245
        %v1272 = vpack.c.b16 %v1250, %v1248
        %v1273 = vpack.c.b16 %v1251, %v1249
        %v1274 = vpack.c.b16 %v1254, %v1252
        %v1275 = vpack.c.b16 %v1255, %v1253
        %v1276 = vpack.c.b16 %v1258, %v1256
        %v1277 = vpack.c.b16 %v1259, %v1257
        %v1278 = vpack.c.b16 %v1262, %v1260
        %v1279 = vpack.c.b16 %v1263, %v1261
        %1296 = vmatprep.subr.bf16.mxu0 %v1265
        %1297 = vmatpush1.bf16.msra.mxu0 %v1264
        %1298 = vmatprep.subr.bf16.mxu0 %v1267
        %1299 = vmatpush1.bf16.msra.mxu0 %v1266
        %1300 = vmatprep.subr.bf16.mxu0 %v1269
        %1301 = vmatpush1.bf16.msra.mxu0 %v1268
        %1302 = vmatprep.subr.bf16.mxu0 %v1271
        %1303 = vmatpush1.bf16.msra.mxu0 %v1270
        %1304 = vmatprep.subr.bf16.mxu0 %v1273
        %1305 = vmatpush1.bf16.msra.mxu0 %v1272
        %1306 = vmatprep.subr.bf16.mxu0 %v1275
        %1307 = vmatpush1.bf16.msra.mxu0 %v1274
        %1308 = vmatprep.subr.bf16.mxu0 %v1277
        %1309 = vmatpush1.bf16.msra.mxu0 %v1276
        %1310 = vmatprep.subr.bf16.mxu0 %v1279
        %1311 = vmatpush1.bf16.msra.mxu0 %v1278
        %1312 = vmatprep.subr.bf16.mxu0 0
        %1313 = vmatpush1.bf16.msra.mxu0 0
        %1314 = vmatprep.subr.bf16.mxu0 0
        %1315 = vmatpush1.bf16.msra.mxu0 0
        %1316 = vmatprep.subr.bf16.mxu0 0
        %1317 = vmatpush1.bf16.msra.mxu0 0
        %1318 = vmatprep.subr.bf16.mxu0 0
        %1319 = vmatpush1.bf16.msra.mxu0 0
        %1320 = vmatprep.subr.bf16.mxu0 0
        %1321 = vmatpush1.bf16.msra.mxu0 0
        %1322 = vmatprep.subr.bf16.mxu0 0
        %1323 = vmatpush1.bf16.msra.mxu0 0
        %1324 = vmatprep.subr.bf16.mxu0 0
        %1325 = vmatpush1.bf16.msra.mxu0 0
        %1326 = vmatprep.subr.bf16.mxu0 0
        %1327 = vmatpush1.bf16.msra.mxu0 0
        %1328 = vmatprep.mubr.bf16.mxu0 0
        %1329 = vmatmul.mubr.bf16.gmra.mrb[0].mxu0 %v504
        %v1330 = vpop.f32.mrb[0].mxu0
        %v1331 = vadd.f32 0.0, %v1330
        %v1332 = vpop.f32.mrb[0].mxu0
        %v1333 = vadd.f32 0.0, %v1332
        %v1334 = vpop.f32.mrb[0].mxu0
        %v1335 = vadd.f32 0.0, %v1334
        %v1336 = vpop.f32.mrb[0].mxu0
        %v1337 = vadd.f32 0.0, %v1336
        %1338 = vmatprep.mubr.bf16.mxu0 0
        %1339 = vmatmul.mubr.bf16.gmra.mrb[0].mxu0 %v505
        %v1340 = vpop.f32.mrb[0].mxu0
        %v1341 = vadd.f32 0.0, %v1340
        %v1342 = vpop.f32.mrb[0].mxu0
        %v1343 = vadd.f32 0.0, %v1342
        %v1344 = vpop.f32.mrb[0].mxu0
        %v1345 = vadd.f32 0.0, %v1344
        %v1346 = vpop.f32.mrb[0].mxu0
        %v1347 = vadd.f32 0.0, %v1346
        %1348 = vmatprep.mubr.bf16.mxu0 0
        %1349 = vmatmul.mubr.bf16.gmra.mrb[0].mxu0 %v506
        %v1350 = vpop.f32.mrb[0].mxu0
        %v1351 = vadd.f32 0.0, %v1350
        %v1352 = vpop.f32.mrb[0].mxu0
        %v1353 = vadd.f32 0.0, %v1352
        %v1354 = vpop.f32.mrb[0].mxu0
        %v1355 = vadd.f32 0.0, %v1354
        %v1356 = vpop.f32.mrb[0].mxu0
        %v1357 = vadd.f32 0.0, %v1356
        %1358 = vmatprep.mubr.bf16.mxu0 0
        %1359 = vmatmul.mubr.bf16.gmra.mrb[0].mxu0 %v507
        %v1360 = vpop.f32.mrb[0].mxu0
        %v1361 = vadd.f32 0.0, %v1360
        %v1362 = vpop.f32.mrb[0].mxu0
        %v1363 = vadd.f32 0.0, %v1362
        %v1364 = vpop.f32.mrb[0].mxu0
        %v1365 = vadd.f32 0.0, %v1364
        %v1366 = vpop.f32.mrb[0].mxu0
        %v1367 = vadd.f32 0.0, %v1366
        %1368 = vdwg.mxu0
        %v1369 = vadd.f32 %v1161, %v1331
        %v1370 = vadd.f32 %v1163, %v1333
        %v1371 = vadd.f32 %v1165, %v1335
        %v1372 = vadd.f32 %v1167, %v1337
        %v1373 = vadd.f32 %v1171, %v1341
        %v1374 = vadd.f32 %v1173, %v1343
        %v1375 = vadd.f32 %v1175, %v1345
        %v1376 = vadd.f32 %v1177, %v1347
        %v1377 = vadd.f32 %v1181, %v1351
        %v1378 = vadd.f32 %v1183, %v1353
        %v1379 = vadd.f32 %v1185, %v1355
        %v1380 = vadd.f32 %v1187, %v1357
        %v1381 = vadd.f32 %v1191, %v1361
        %v1382 = vadd.f32 %v1193, %v1363
        %v1383 = vadd.f32 %v1195, %v1365
        %v1384 = vadd.f32 %v1197, %v1367
        %s1385 = scalar_lea.vmem [#allocation3], 640
        %v1386 = vld [vmem:[%s1385] sm:$0xff]
        %v1387 = vld [vmem:[%s1385 + $0x8] sm:$0xff]
        %v1388 = vld [vmem:[%s1385 + $0x10] sm:$0xff]
        %v1389 = vld [vmem:[%s1385 + $0x18] sm:$0xff]
        %v1390 = vld [vmem:[%s1385 + $0x20] sm:$0xff]
        %v1391 = vld [vmem:[%s1385 + $0x28] sm:$0xff]
        %v1392 = vld [vmem:[%s1385 + $0x30] sm:$0xff]
        %v1393 = vld [vmem:[%s1385 + $0x38] sm:$0xff]
        %v1394 = vld [vmem:[%s1385 + $0x40] sm:$0xff]
        %v1395 = vld [vmem:[%s1385 + $0x48] sm:$0xff]
        %v1396 = vld [vmem:[%s1385 + $0x50] sm:$0xff]
        %v1397 = vld [vmem:[%s1385 + $0x58] sm:$0xff]
        %v1398 = vld [vmem:[%s1385 + $0x60] sm:$0xff]
        %v1399 = vld [vmem:[%s1385 + $0x68] sm:$0xff]
        %v1400 = vld [vmem:[%s1385 + $0x70] sm:$0xff]
        %v1401 = vld [vmem:[%s1385 + $0x78] sm:$0xff]
        %v1418 = vunpack.c.l.b16 %v1386
        %v1419 = vunpack.c.h.b16 %v1386
        %v1420 = vunpack.c.l.b16 %v1387
        %v1421 = vunpack.c.h.b16 %v1387
        %v1422 = vunpack.c.l.b16 %v1388
        %v1423 = vunpack.c.h.b16 %v1388
        %v1424 = vunpack.c.l.b16 %v1389
        %v1425 = vunpack.c.h.b16 %v1389
        %v1426 = vunpack.c.l.b16 %v1390
        %v1427 = vunpack.c.h.b16 %v1390
        %v1428 = vunpack.c.l.b16 %v1391
        %v1429 = vunpack.c.h.b16 %v1391
        %v1430 = vunpack.c.l.b16 %v1392
        %v1431 = vunpack.c.h.b16 %v1392
        %v1432 = vunpack.c.l.b16 %v1393
        %v1433 = vunpack.c.h.b16 %v1393
        %v1434 = vunpack.c.l.b16 %v1394
        %v1435 = vunpack.c.h.b16 %v1394
        %v1436 = vunpack.c.l.b16 %v1395
        %v1437 = vunpack.c.h.b16 %v1395
        %v1438 = vunpack.c.l.b16 %v1396
        %v1439 = vunpack.c.h.b16 %v1396
        %v1440 = vunpack.c.l.b16 %v1397
        %v1441 = vunpack.c.h.b16 %v1397
        %v1442 = vunpack.c.l.b16 %v1398
        %v1443 = vunpack.c.h.b16 %v1398
        %v1444 = vunpack.c.l.b16 %v1399
        %v1445 = vunpack.c.h.b16 %v1399
        %v1446 = vunpack.c.l.b16 %v1400
        %v1447 = vunpack.c.h.b16 %v1400
        %v1448 = vunpack.c.l.b16 %v1401
        %v1449 = vunpack.c.h.b16 %v1401
        %v1450 = vpack.c.b16 %v1420, %v1418
        %v1451 = vpack.c.b16 %v1421, %v1419
        %v1452 = vpack.c.b16 %v1424, %v1422
        %v1453 = vpack.c.b16 %v1425, %v1423
        %v1454 = vpack.c.b16 %v1428, %v1426
        %v1455 = vpack.c.b16 %v1429, %v1427
        %v1456 = vpack.c.b16 %v1432, %v1430
        %v1457 = vpack.c.b16 %v1433, %v1431
        %v1458 = vpack.c.b16 %v1436, %v1434
        %v1459 = vpack.c.b16 %v1437, %v1435
        %v1460 = vpack.c.b16 %v1440, %v1438
        %v1461 = vpack.c.b16 %v1441, %v1439
        %v1462 = vpack.c.b16 %v1444, %v1442
        %v1463 = vpack.c.b16 %v1445, %v1443
        %v1464 = vpack.c.b16 %v1448, %v1446
        %v1465 = vpack.c.b16 %v1449, %v1447
        %1482 = vmatprep.subr.bf16.mxu0 %v1451
        %1483 = vmatpush1.bf16.msra.mxu0 %v1450
        %1484 = vmatprep.subr.bf16.mxu0 %v1453
        %1485 = vmatpush1.bf16.msra.mxu0 %v1452
        %1486 = vmatprep.subr.bf16.mxu0 %v1455
        %1487 = vmatpush1.bf16.msra.mxu0 %v1454
        %1488 = vmatprep.subr.bf16.mxu0 %v1457
        %1489 = vmatpush1.bf16.msra.mxu0 %v1456
        %1490 = vmatprep.subr.bf16.mxu0 %v1459
        %1491 = vmatpush1.bf16.msra.mxu0 %v1458
        %1492 = vmatprep.subr.bf16.mxu0 %v1461
        %1493 = vmatpush1.bf16.msra.mxu0 %v1460
        %1494 = vmatprep.subr.bf16.mxu0 %v1463
        %1495 = vmatpush1.bf16.msra.mxu0 %v1462
        %1496 = vmatprep.subr.bf16.mxu0 %v1465
        %1497 = vmatpush1.bf16.msra.mxu0 %v1464
        %1498 = vmatprep.subr.bf16.mxu0 0
        %1499 = vmatpush1.bf16.msra.mxu0 0
        %1500 = vmatprep.subr.bf16.mxu0 0
        %1501 = vmatpush1.bf16.msra.mxu0 0
        %1502 = vmatprep.subr.bf16.mxu0 0
        %1503 = vmatpush1.bf16.msra.mxu0 0
        %1504 = vmatprep.subr.bf16.mxu0 0
        %1505 = vmatpush1.bf16.msra.mxu0 0
        %1506 = vmatprep.subr.bf16.mxu0 0
        %1507 = vmatpush1.bf16.msra.mxu0 0
        %1508 = vmatprep.subr.bf16.mxu0 0
        %1509 = vmatpush1.bf16.msra.mxu0 0
        %1510 = vmatprep.subr.bf16.mxu0 0
        %1511 = vmatpush1.bf16.msra.mxu0 0
        %1512 = vmatprep.subr.bf16.mxu0 0
        %1513 = vmatpush1.bf16.msra.mxu0 0
        %1514 = vmatprep.mubr.bf16.mxu0 0
        %1515 = vmatmul.mubr.bf16.gmra.mrb[0].mxu0 %v516
        %v1516 = vpop.f32.mrb[0].mxu0
        %v1517 = vadd.f32 0.0, %v1516
        %v1518 = vpop.f32.mrb[0].mxu0
        %v1519 = vadd.f32 0.0, %v1518
        %v1520 = vpop.f32.mrb[0].mxu0
        %v1521 = vadd.f32 0.0, %v1520
        %v1522 = vpop.f32.mrb[0].mxu0
        %v1523 = vadd.f32 0.0, %v1522
        %1524 = vmatprep.mubr.bf16.mxu0 0
        %1525 = vmatmul.mubr.bf16.gmra.mrb[0].mxu0 %v517
        %v1526 = vpop.f32.mrb[0].mxu0
        %v1527 = vadd.f32 0.0, %v1526
        %v1528 = vpop.f32.mrb[0].mxu0
        %v1529 = vadd.f32 0.0, %v1528
        %v1530 = vpop.f32.mrb[0].mxu0
        %v1531 = vadd.f32 0.0, %v1530
        %v1532 = vpop.f32.mrb[0].mxu0
        %v1533 = vadd.f32 0.0, %v1532
        %1534 = vmatprep.mubr.bf16.mxu0 0
        %1535 = vmatmul.mubr.bf16.gmra.mrb[0].mxu0 %v518
        %v1536 = vpop.f32.mrb[0].mxu0
        %v1537 = vadd.f32 0.0, %v1536
        %v1538 = vpop.f32.mrb[0].mxu0
        %v1539 = vadd.f32 0.0, %v1538
        %v1540 = vpop.f32.mrb[0].mxu0
        %v1541 = vadd.f32 0.0, %v1540
        %v1542 = vpop.f32.mrb[0].mxu0
        %v1543 = vadd.f32 0.0, %v1542
        %1544 = vmatprep.mubr.bf16.mxu0 0
        %1545 = vmatmul.mubr.bf16.gmra.mrb[0].mxu0 %v519
        %v1546 = vpop.f32.mrb[0].mxu0
        %v1547 = vadd.f32 0.0, %v1546
        %v1548 = vpop.f32.mrb[0].mxu0
        %v1549 = vadd.f32 0.0, %v1548
        %v1550 = vpop.f32.mrb[0].mxu0
        %v1551 = vadd.f32 0.0, %v1550
        %v1552 = vpop.f32.mrb[0].mxu0
        %v1553 = vadd.f32 0.0, %v1552
        %1554 = vdwg.mxu0
        %v1555 = vadd.f32 %v1369, %v1517
        %v1556 = vadd.f32 %v1370, %v1519
        %v1557 = vadd.f32 %v1371, %v1521
        %v1558 = vadd.f32 %v1372, %v1523
        %v1559 = vadd.f32 %v1373, %v1527
        %v1560 = vadd.f32 %v1374, %v1529
        %v1561 = vadd.f32 %v1375, %v1531
        %v1562 = vadd.f32 %v1376, %v1533
        %v1563 = vadd.f32 %v1377, %v1537
        %v1564 = vadd.f32 %v1378, %v1539
        %v1565 = vadd.f32 %v1379, %v1541
        %v1566 = vadd.f32 %v1380, %v1543
        %v1567 = vadd.f32 %v1381, %v1547
        %v1568 = vadd.f32 %v1382, %v1549
        %v1569 = vadd.f32 %v1383, %v1551
        %v1570 = vadd.f32 %v1384, %v1553
        %v1571 = vpack.c.bf16 %v821, %v821
        %v1572 = vpack.c.bf16 %v823, %v823
        %v1573 = vpack.c.bf16 %v825, %v825
        %v1574 = vpack.c.bf16 %v827, %v827
        %v1575 = vpack.c.bf16 %v831, %v831
        %v1576 = vpack.c.bf16 %v833, %v833
        %v1577 = vpack.c.bf16 %v835, %v835
        %v1578 = vpack.c.bf16 %v837, %v837
        %v1579 = vpack.c.bf16 %v841, %v841
        %v1580 = vpack.c.bf16 %v843, %v843
        %v1581 = vpack.c.bf16 %v845, %v845
        %v1582 = vpack.c.bf16 %v847, %v847
        %v1583 = vpack.c.bf16 %v851, %v851
        %v1584 = vpack.c.bf16 %v853, %v853
        %v1585 = vpack.c.bf16 %v855, %v855
        %v1586 = vpack.c.bf16 %v857, %v857
        %v1603 = vunpack.c.l.b16 %v1571
        %v1604 = vunpack.c.l.b16 %v1572
        %v1605 = vunpack.c.l.b16 %v1573
        %v1606 = vunpack.c.l.b16 %v1574
        %v1607 = vunpack.c.l.b16 %v1575
        %v1608 = vunpack.c.l.b16 %v1576
        %v1609 = vunpack.c.l.b16 %v1577
        %v1610 = vunpack.c.l.b16 %v1578
        %v1611 = vunpack.c.l.b16 %v1579
        %v1612 = vunpack.c.l.b16 %v1580
        %v1613 = vunpack.c.l.b16 %v1581
        %v1614 = vunpack.c.l.b16 %v1582
        %v1615 = vunpack.c.l.b16 %v1583
        %v1616 = vunpack.c.l.b16 %v1584
        %v1617 = vunpack.c.l.b16 %v1585
        %v1618 = vunpack.c.l.b16 %v1586
        %v1619 = vpack.c.b16 %v1604, %v1603
        %v1620 = vpack.c.b16 %v1606, %v1605
        %v1621 = vpack.c.b16 %v1608, %v1607
        %v1622 = vpack.c.b16 %v1610, %v1609
        %v1623 = vpack.c.b16 %v1612, %v1611
        %v1624 = vpack.c.b16 %v1614, %v1613
        %v1625 = vpack.c.b16 %v1616, %v1615
        %v1626 = vpack.c.b16 %v1618, %v1617
        %1635 = vst [vmem:[%s377] sm:$0xff] %v1619
        %1636 = vst [vmem:[%s377 + $0x10] sm:$0xff] %v1620
        %1637 = vst [vmem:[%s377 + $0x20] sm:$0xff] %v1621
        %1638 = vst [vmem:[%s377 + $0x30] sm:$0xff] %v1622
        %1639 = vst [vmem:[%s377 + $0x40] sm:$0xff] %v1623
        %1640 = vst [vmem:[%s377 + $0x50] sm:$0xff] %v1624
        %1641 = vst [vmem:[%s377 + $0x60] sm:$0xff] %v1625
        %1642 = vst [vmem:[%s377 + $0x70] sm:$0xff] %v1626
        %v1643 = vpack.c.bf16 %v1555, %v1555
        %v1644 = vpack.c.bf16 %v1556, %v1556
        %v1645 = vpack.c.bf16 %v1557, %v1557
        %v1646 = vpack.c.bf16 %v1558, %v1558
        %v1647 = vpack.c.bf16 %v1559, %v1559
        %v1648 = vpack.c.bf16 %v1560, %v1560
        %v1649 = vpack.c.bf16 %v1561, %v1561
        %v1650 = vpack.c.bf16 %v1562, %v1562
        %v1651 = vpack.c.bf16 %v1563, %v1563
        %v1652 = vpack.c.bf16 %v1564, %v1564
        %v1653 = vpack.c.bf16 %v1565, %v1565
        %v1654 = vpack.c.bf16 %v1566, %v1566
        %v1655 = vpack.c.bf16 %v1567, %v1567
        %v1656 = vpack.c.bf16 %v1568, %v1568
        %v1657 = vpack.c.bf16 %v1569, %v1569
        %v1658 = vpack.c.bf16 %v1570, %v1570
        %v1675 = vunpack.c.l.b16 %v1643
        %v1676 = vunpack.c.l.b16 %v1644
        %v1677 = vunpack.c.l.b16 %v1645
        %v1678 = vunpack.c.l.b16 %v1646
        %v1679 = vunpack.c.l.b16 %v1647
        %v1680 = vunpack.c.l.b16 %v1648
        %v1681 = vunpack.c.l.b16 %v1649
        %v1682 = vunpack.c.l.b16 %v1650
        %v1683 = vunpack.c.l.b16 %v1651
        %v1684 = vunpack.c.l.b16 %v1652
        %v1685 = vunpack.c.l.b16 %v1653
        %v1686 = vunpack.c.l.b16 %v1654
        %v1687 = vunpack.c.l.b16 %v1655
        %v1688 = vunpack.c.l.b16 %v1656
        %v1689 = vunpack.c.l.b16 %v1657
        %v1690 = vunpack.c.l.b16 %v1658
        %v1691 = vpack.c.b16 %v1676, %v1675
        %v1692 = vpack.c.b16 %v1678, %v1677
        %v1693 = vpack.c.b16 %v1680, %v1679
        %v1694 = vpack.c.b16 %v1682, %v1681
        %v1695 = vpack.c.b16 %v1684, %v1683
        %v1696 = vpack.c.b16 %v1686, %v1685
        %v1697 = vpack.c.b16 %v1688, %v1687
        %v1698 = vpack.c.b16 %v1690, %v1689
        %s1707 = scalar_lea.vmem %s377, 8
        %1708 = vst [vmem:[%s1707] sm:$0xff] %v1691
        %1709 = vst [vmem:[%s1707 + $0x10] sm:$0xff] %v1692
        %1710 = vst [vmem:[%s1707 + $0x20] sm:$0xff] %v1693
        %1711 = vst [vmem:[%s1707 + $0x30] sm:$0xff] %v1694
        %1712 = vst [vmem:[%s1707 + $0x40] sm:$0xff] %v1695
        %1713 = vst [vmem:[%s1707 + $0x50] sm:$0xff] %v1696
        %1714 = vst [vmem:[%s1707 + $0x60] sm:$0xff] %v1697
        %1715 = vst [vmem:[%s1707 + $0x70] sm:$0xff] %v1698
        %v1716 = vadd.f32 %v821, %v1555
        %v1717 = vadd.f32 %v823, %v1556
        %v1718 = vadd.f32 %v825, %v1557
        %v1719 = vadd.f32 %v827, %v1558
        %v1720 = vadd.f32 %v831, %v1559
        %v1721 = vadd.f32 %v833, %v1560
        %v1722 = vadd.f32 %v835, %v1561
        %v1723 = vadd.f32 %v837, %v1562
        %v1724 = vadd.f32 %v841, %v1563
        %v1725 = vadd.f32 %v843, %v1564
        %v1726 = vadd.f32 %v845, %v1565
        %v1727 = vadd.f32 %v847, %v1566
        %v1728 = vadd.f32 %v851, %v1567
        %v1729 = vadd.f32 %v853, %v1568
        %v1730 = vadd.f32 %v855, %v1569
        %v1731 = vadd.f32 %v857, %v1570
        %v1732 = vadd.f32 %v1716, %v1718
        %v1733 = vadd.f32 %v1732, %v1720
        %v1734 = vadd.f32 %v1733, %v1722
        %v1735 = vadd.f32 %v1734, %v1724
        %v1736 = vadd.f32 %v1735, %v1726
        %v1737 = vadd.f32 %v1736, %v1728
        %v1738 = vadd.f32 %v1737, %v1730
        %v1739 = vrot.slane %v1738, 4
        %v1740 = vadd.f32 %v1738, %v1739
        %v1741 = vrot.slane %v1740, 2
        %v1742 = vadd.f32 %v1740, %v1741
        %v1743 = vrot.slane %v1742, 1
        %v1744 = vadd.f32 %v1742, %v1743
        %v1745 = vadd.f32 %v1717, %v1719
        %v1746 = vadd.f32 %v1745, %v1721
        %v1747 = vadd.f32 %v1746, %v1723
        %v1748 = vadd.f32 %v1747, %v1725
        %v1749 = vadd.f32 %v1748, %v1727
        %v1750 = vadd.f32 %v1749, %v1729
        %v1751 = vadd.f32 %v1750, %v1731
        %v1752 = vrot.slane %v1751, 4
        %v1753 = vadd.f32 %v1751, %v1752
        %v1754 = vrot.slane %v1753, 2
        %v1755 = vadd.f32 %v1753, %v1754
        %v1756 = vrot.slane %v1755, 1
        %v1757 = vadd.f32 %v1755, %v1756
        %v1758 = vmul.f32 %v821, %v821
        %v1759 = vmul.f32 %v823, %v823
        %v1760 = vmul.f32 %v825, %v825
        %v1761 = vmul.f32 %v827, %v827
        %v1762 = vmul.f32 %v831, %v831
        %v1763 = vmul.f32 %v833, %v833
        %v1764 = vmul.f32 %v835, %v835
        %v1765 = vmul.f32 %v837, %v837
        %v1766 = vmul.f32 %v841, %v841
        %v1767 = vmul.f32 %v843, %v843
        %v1768 = vmul.f32 %v845, %v845
        %v1769 = vmul.f32 %v847, %v847
        %v1770 = vmul.f32 %v851, %v851
        %v1771 = vmul.f32 %v853, %v853
        %v1772 = vmul.f32 %v855, %v855
        %v1773 = vmul.f32 %v857, %v857
        %v1774 = vmul.f32 %v1555, %v1555
        %v1775 = vmul.f32 %v1556, %v1556
        %v1776 = vmul.f32 %v1557, %v1557
        %v1777 = vmul.f32 %v1558, %v1558
        %v1778 = vmul.f32 %v1559, %v1559
        %v1779 = vmul.f32 %v1560, %v1560
        %v1780 = vmul.f32 %v1561, %v1561
        %v1781 = vmul.f32 %v1562, %v1562
        %v1782 = vmul.f32 %v1563, %v1563
        %v1783 = vmul.f32 %v1564, %v1564
        %v1784 = vmul.f32 %v1565, %v1565
        %v1785 = vmul.f32 %v1566, %v1566
        %v1786 = vmul.f32 %v1567, %v1567
        %v1787 = vmul.f32 %v1568, %v1568
        %v1788 = vmul.f32 %v1569, %v1569
        %v1789 = vmul.f32 %v1570, %v1570
        %v1790 = vadd.f32 %v1758, %v1774
        %v1791 = vadd.f32 %v1759, %v1775
        %v1792 = vadd.f32 %v1760, %v1776
        %v1793 = vadd.f32 %v1761, %v1777
        %v1794 = vadd.f32 %v1762, %v1778
        %v1795 = vadd.f32 %v1763, %v1779
        %v1796 = vadd.f32 %v1764, %v1780
        %v1797 = vadd.f32 %v1765, %v1781
        %v1798 = vadd.f32 %v1766, %v1782
        %v1799 = vadd.f32 %v1767, %v1783
        %v1800 = vadd.f32 %v1768, %v1784
        %v1801 = vadd.f32 %v1769, %v1785
        %v1802 = vadd.f32 %v1770, %v1786
        %v1803 = vadd.f32 %v1771, %v1787
        %v1804 = vadd.f32 %v1772, %v1788
        %v1805 = vadd.f32 %v1773, %v1789
        %v1806 = vadd.f32 %v1790, %v1792
        %v1807 = vadd.f32 %v1806, %v1794
        %v1808 = vadd.f32 %v1807, %v1796
        %v1809 = vadd.f32 %v1808, %v1798
        %v1810 = vadd.f32 %v1809, %v1800
        %v1811 = vadd.f32 %v1810, %v1802
        %v1812 = vadd.f32 %v1811, %v1804
        %v1813 = vrot.slane %v1812, 4
        %v1814 = vadd.f32 %v1812, %v1813
        %v1815 = vrot.slane %v1814, 2
        %v1816 = vadd.f32 %v1814, %v1815
        %v1817 = vrot.slane %v1816, 1
        %v1818 = vadd.f32 %v1816, %v1817
        %v1819 = vadd.f32 %v1791, %v1793
        %v1820 = vadd.f32 %v1819, %v1795
        %v1821 = vadd.f32 %v1820, %v1797
        %v1822 = vadd.f32 %v1821, %v1799
        %v1823 = vadd.f32 %v1822, %v1801
        %v1824 = vadd.f32 %v1823, %v1803
        %v1825 = vadd.f32 %v1824, %v1805
        %v1826 = vrot.slane %v1825, 4
        %v1827 = vadd.f32 %v1825, %v1826
        %v1828 = vrot.slane %v1827, 2
        %v1829 = vadd.f32 %v1827, %v1828
        %v1830 = vrot.slane %v1829, 1
        %v1831 = vadd.f32 %v1829, %v1830
        %v1832 = vadd.f32 %v1744, %v1757
        %v1833 = vadd.f32 %v1818, %v1831
        %vm1834 = vcmask 1040384
        %v1835 = vsel %vm1834, %v1832, %v1833
        %1836 = vst [vmem:[%s385] sm:$0x3] %v1835
        %s1837 = smul.u32 8, %s24
        %p1838 = scmp.lt.s32.totalorder %s23, 1
        %s1839 = scalar_select %p1838, %s23, 1
        %p1840 = scmp.lt.s32.totalorder %s1837, 7
        %s1841 = scalar_select %p1840, %s1837, 7
        %s1842 = smul.addr %s1841, 4
        %s1843 = smul.addr %s1839, 32
        %s1844 = sadd.s32 %s1842, %s1843
        %s1845 = smul.addr %s1844, 4
        %s1846 = scalar_lea.vmem %s5, %s1845
        %p1847 = scmp.lt.s32.totalorder %s23, 1
        %s1848 = scalar_select %p1847, %s23, 1
        %p1849 = scmp.lt.s32.totalorder %s24, 0
        %s1850 = scalar_select %p1849, %s24, 0
        %s1851 = sadd.s32 %s1850, %s1848
        %s1852 = smul.addr %s1851, 2
        %s1853 = scalar_lea.vmem %s6, %s1852
        // Predicated region
        $region45: #{decoder_forward.5} parent=39 // pred_check
          %p1854 = pneg %p178
        $region46: #{decoder_forward.5} parent=39 // pred_check_branch
          %1856 = sbr.rel (%p1854) target = $region48
        $region47: #{decoder_forward.5} parent=39 // pred_region
          %s1857 = smul.u32 8, %s24
        $region48: #{decoder_forward.5} parent=39 // pred_fallthru
          _
        // Predicated region
        $region49: #{decoder_forward.5} parent=39 // pred_check
          %p1858 = pneg %p206
        $region50: #{decoder_forward.5} parent=39 // pred_check_branch
          %1860 = sbr.rel (%p1858) target = $region52
        $region51: #{decoder_forward.5} parent=39 // pred_region
          _
        $region52: #{decoder_forward.5} parent=39 // pred_fallthru
          _
      $region40: #{decoder_forward.5} parent=5 // pred_fallthru
        _
      %p1861 = scmp.le.s32.totalorder 2, %s14
      // Predicated region
      $region53: #{decoder_forward.5} parent=5 // pred_check
        %p1862 = pneg %p1861
      $region54: #{decoder_forward.5} parent=5 // pred_check_branch
        %1864 = sbr.rel (%p1862) target = $region56
      $region55: #{decoder_forward.5} parent=5 // pred_region
        %s1865 = ssub.s32 %s14, 2
        // Predicated region
        $region57: #{decoder_forward.5} parent=55 // pred_check
          %p1866 = pneg %p184
        $region58: #{decoder_forward.5} parent=55 // pred_check_branch
          %1868 = sbr.rel (%p1866) target = $region60
        $region59: #{decoder_forward.5} parent=55 // pred_region
          %s1869 = smul.u32 8, %s26
          %p1870 = scmp.lt.s32.totalorder %s25, 1
          %s1871 = scalar_select %p1870, %s25, 1
          %p1872 = scmp.lt.s32.totalorder %s1869, 7
          %s1873 = scalar_select %p1872, %s1869, 7
          %s1874 = smul.addr %s1873, 4
          %s1875 = smul.addr %s1871, 32
          %s1876 = sadd.s32 %s1874, %s1875
          %s1877 = smul.addr %s1876, 4
          %s1878 = scalar_lea.vmem %s5, %s1877
        $region60: #{decoder_forward.5} parent=55 // pred_fallthru
          _
        // Predicated region
        $region61: #{decoder_forward.5} parent=55 // pred_check
          %p1879 = pneg %p212
        $region62: #{decoder_forward.5} parent=55 // pred_check_branch
          %1881 = sbr.rel (%p1879) target = $region64
        $region63: #{decoder_forward.5} parent=55 // pred_region
          %p1882 = scmp.lt.s32.totalorder %s25, 1
          %s1883 = scalar_select %p1882, %s25, 1
          %p1884 = scmp.lt.s32.totalorder %s26, 0
          %s1885 = scalar_select %p1884, %s26, 0
          %s1886 = sadd.s32 %s1885, %s1883
          %s1887 = smul.addr %s1886, 2
          %s1888 = scalar_lea.vmem %s6, %s1887
        $region64: #{decoder_forward.5} parent=55 // pred_fallthru
          _
      $region56: #{decoder_forward.5} parent=5 // pred_fallthru
        _
    $region6: #{decoder_forward.5} parent=1 // loop_footer
      %s18 = sadd.s32 1, %s14
    $region7: #{decoder_forward.5} parent=1 // loop_footer_branch
      %13 = sbr.rel target = $region3
    $region8: #{decoder_forward.5} parent=1 // loop_exit
      _
    %1889 = vsyncpa [#allocation4], 1
    %s1890 = scalar_lea.sflag [#allocation4], 1
    %1891 = vsyncpa %s1890, 1

</llo_original>
